<compile_context>
chip_gen: v7x
topology: tpu7x:2x2x1
jax: 0.10.0
libtpu: 0.0.40
codegen_flags: <defaults>
</compile_context>

<pallas_src>
import functools

import jax
import jax.numpy as jnp
from jax.experimental import pallas as pl
from jax.experimental.pallas import tpu as pltpu

# ---------------- small Mixtral-like config ----------------
T = 8                 # tokens
HIDDEN = 64           # hidden_size
NUM_HEADS = 4
NUM_KV_HEADS = 2      # GQA
HEAD_DIM = HIDDEN // NUM_HEADS   # 16
NUM_EXPERTS = 4       # num_local_experts
TOP_K = 2             # num_experts_per_tok
INTER = 128           # intermediate_size
EPS = 1e-6            # rms_norm_eps
ROPE_BASE = 10000.0

Q_SIZE = NUM_HEADS * HEAD_DIM
KV_SIZE = NUM_KV_HEADS * HEAD_DIM


# =====================================================================
# Kernel 1: fused (add)+RMSNorm -> QKV -> RoPE -> causal GQA attention
#           -> O-proj -> residual add -> post RMSNorm
# =====================================================================
def _attn_block_kernel(hs_ref, res_ref, in_ln_ref, post_ln_ref,
                       wq_ref, wk_ref, wv_ref, wo_ref,
                       cos_ref, sin_ref, rot_ref,
                       out_ref, resid_ref,
                       *, eps, num_heads, num_kv_heads, head_dim):
    x = hs_ref[...].astype(jnp.float32)           # (T, H)
    r = res_ref[...].astype(jnp.float32)          # (T, H)
    s1 = x + r                                    # residual after input add
    var1 = jnp.mean(s1 * s1, axis=-1, keepdims=True)
    h1 = s1 * jax.lax.rsqrt(var1 + eps) * in_ln_ref[...]
    h1b = h1.astype(jnp.bfloat16)                 # bf16 MXU input

    cos = cos_ref[...]                            # (T, D) f32
    sin = sin_ref[...]                            # (T, D) f32
    rot = rot_ref[...]                            # (D, D) +-1 permutation
    t = x.shape[0]
    hdim = x.shape[1]
    scale = 1.0 / (head_dim ** 0.5)
    group = num_heads // num_kv_heads

    row = jax.lax.broadcasted_iota(jnp.int32, (t, t), 0)
    col = jax.lax.broadcasted_iota(jnp.int32, (t, t), 1)
    causal = col <= row

    def rope(z):  # z: (T, D) f32; rotate-half via tiny matmul (MXU, no shuffles)
        return z * cos + jnp.dot(z, rot, preferred_element_type=jnp.float32) * sin

    # K / V per kv-head (weights pre-split per head: wk_ref (KVH, H, D))
    k_heads, v_heads = [], []
    for kv in range(num_kv_heads):
        kh = jnp.dot(h1b, wk_ref[kv], preferred_element_type=jnp.float32)
        vh = jnp.dot(h1b, wv_ref[kv], preferred_element_type=jnp.float32)
        k_heads.append(rope(kh))
        v_heads.append(vh)

    # attention over all heads, O-proj accumulated into a lane-dense (T, H) tile
    o = jnp.zeros((t, hdim), jnp.float32)
    for h in range(num_heads):
        qh = rope(jnp.dot(h1b, wq_ref[h], preferred_element_type=jnp.float32))
        kh = k_heads[h // group]
        vh = v_heads[h // group]
        s = jax.lax.dot_general(qh, kh, (((1,), (1,)), ((), ())),
                                preferred_element_type=jnp.float32) * scale
        s = jnp.where(causal, s, -1e30)
        s = s - jnp.max(s, axis=-1, keepdims=True)
        p = jnp.exp(s)
        p = p * pl.reciprocal(jnp.sum(p, axis=-1, keepdims=True), approx=True)
        ah = jnp.dot(p, vh, preferred_element_type=jnp.float32)       # (T, D)
        o = o + jnp.dot(ah.astype(jnp.bfloat16), wo_ref[h],
                        preferred_element_type=jnp.float32)           # (T, H)

    s2 = o + s1                                   # post-attention residual
    resid_ref[...] = s2.astype(resid_ref.dtype)
    var2 = jnp.mean(s2 * s2, axis=-1, keepdims=True)
    out_ref[...] = (s2 * jax.lax.rsqrt(var2 + eps)
                    * post_ln_ref[...]).astype(out_ref.dtype)


def attn_block(hs, residual, p):
    t, hdim = hs.shape
    return pl.pallas_call(
        functools.partial(_attn_block_kernel, eps=EPS, num_heads=NUM_HEADS,
                          num_kv_heads=NUM_KV_HEADS, head_dim=HEAD_DIM),
        out_shape=(jax.ShapeDtypeStruct((t, hdim), hs.dtype),
                   jax.ShapeDtypeStruct((t, hdim), hs.dtype)),
    )(hs, residual, p["input_ln"], p["post_ln"],
      p["wq"], p["wk"], p["wv"], p["wo"], p["cos"], p["sin"], p["rot"])


# =====================================================================
# Kernel 2: fused router + block-sparse MoE (grid over experts)
# =====================================================================
def _moe_kernel(hs_ref, wg_ref, w1_ref, w3_ref, w2_ref, o_ref, route_ref,
                *, top_k):
    e = pl.program_id(0)

    @pl.when(e == 0)
    def _():
        o_ref[...] = jnp.zeros_like(o_ref)
        # ---- router: softmax -> top-k -> renormalize (all in-kernel) ----
        xf = hs_ref[...].astype(jnp.float32)                       # (T, H)
        logits = jnp.dot(xf, wg_ref[...], preferred_element_type=jnp.float32)
        logits = logits - jnp.max(logits, axis=-1, keepdims=True)
        ex = jnp.exp(logits)
        probs = ex / jnp.sum(ex, axis=-1, keepdims=True)           # (T, E)
        num_e = probs.shape[-1]
        lane = jax.lax.broadcasted_iota(jnp.int32, probs.shape, 1)
        remaining = probs
        selected = jnp.zeros(probs.shape, jnp.float32)
        for _ in range(top_k):                                     # iterative top-k
            m = jnp.max(remaining, axis=-1, keepdims=True)
            cand = jnp.where(remaining >= m, lane, num_e)
            first = (lane == jnp.min(cand, axis=-1, keepdims=True)
                     ).astype(jnp.float32)
            selected = jnp.maximum(selected, first)
            remaining = jnp.where(first > 0, -1.0, remaining)
        topw = selected * probs
        route_ref[...] = topw / jnp.sum(topw, axis=-1, keepdims=True)

    # ---- expert SwiGLU MLP (bf16 MXU, f32 accumulate) ----
    xb = hs_ref[...].astype(jnp.bfloat16)                          # (T, H)
    g = jnp.dot(xb, w1_ref[0], preferred_element_type=jnp.float32)  # (T, I)
    u = jnp.dot(xb, w3_ref[0], preferred_element_type=jnp.float32)  # (T, I)
    a = (g * jax.nn.sigmoid(g)) * u
    y = jnp.dot(a.astype(jnp.bfloat16), w2_ref[0],
                preferred_element_type=jnp.float32)                 # (T, H)

    # routing weight for this expert
    rw = route_ref[...]
    eid = jax.lax.broadcasted_iota(jnp.int32, rw.shape, 1)
    w = jnp.sum(jnp.where(eid == e, rw, 0.0), axis=-1, keepdims=True)  # (T, 1)

    # accumulate directly into the resident output block
    o_ref[...] += w * y


def moe_block(hs, p):
    t, hdim = hs.shape
    num_e, _, inter = p["w1_t"].shape
    return pl.pallas_call(
        functools.partial(_moe_kernel, top_k=TOP_K),
        out_shape=jax.ShapeDtypeStruct((t, hdim), hs.dtype),
        grid_spec=pltpu.PrefetchScalarGridSpec(
            num_scalar_prefetch=0,
            grid=(num_e,),
            in_specs=[
                pl.BlockSpec((t, hdim), lambda ei: (0, 0)),
                pl.BlockSpec((hdim, num_e), lambda ei: (0, 0)),
                pl.BlockSpec((1, hdim, inter), lambda ei: (ei, 0, 0)),
                pl.BlockSpec((1, hdim, inter), lambda ei: (ei, 0, 0)),
                pl.BlockSpec((1, inter, hdim), lambda ei: (ei, 0, 0)),
            ],
            out_specs=pl.BlockSpec((t, hdim), lambda ei: (0, 0)),
            scratch_shapes=[pltpu.VMEM((t, num_e), jnp.float32)]),
        compiler_params=pltpu.CompilerParams(
            dimension_semantics=("arbitrary",)),
    )(hs, p["wg_t"], p["w1_t"], p["w3_t"], p["w2_t"])


# =====================================================================
# wrapper / parameter preparation
# =====================================================================
@jax.jit
def _decoder_layer_jit(hidden_states, residual, prepared):
    hs, residual = attn_block(hidden_states, residual, prepared)
    hs = moe_block(hs, prepared)
    return hs, residual


def mixtral_decoder_layer(hidden_states, residual, prepared):
    if residual is None:
        # hidden + 0 == hidden, so the zero residual reproduces the
        # "residual = hidden_states; hs = rmsnorm(hidden_states)" branch.
        residual = jnp.zeros_like(hidden_states)
    return _decoder_layer_jit(hidden_states, residual, prepared)


def prepare_params(params, t):
    """One-time weight re-layout: (K, N) MXU feed order, bf16, per-head split."""
    d = HEAD_DIM
    half = d // 2
    wqkv = params["wqkv"]                                              # (QS+2KV, H)
    wq = wqkv[:Q_SIZE].reshape(NUM_HEADS, d, HIDDEN).transpose(0, 2, 1)          # (NH, H, D)
    wk = wqkv[Q_SIZE:Q_SIZE + KV_SIZE].reshape(NUM_KV_HEADS, d, HIDDEN).transpose(0, 2, 1)
    wv = wqkv[Q_SIZE + KV_SIZE:].reshape(NUM_KV_HEADS, d, HIDDEN).transpose(0, 2, 1)
    wo = params["wo"].T.reshape(NUM_HEADS, d, HIDDEN)                  # (NH, D, H)

    # RoPE tables (neox rotate-half), full head width
    inv_freq = 1.0 / (ROPE_BASE ** (jnp.arange(0, d, 2, dtype=jnp.float32) / d))
    freqs = jnp.arange(t, dtype=jnp.float32)[:, None] * inv_freq[None, :]
    cos = jnp.concatenate([jnp.cos(freqs), jnp.cos(freqs)], axis=-1)   # (T, D)
    sin = jnp.concatenate([jnp.sin(freqs), jnp.sin(freqs)], axis=-1)   # (T, D)
    # rotate_half(x) == x @ rot, rot = [[0, I], [-I, 0]]
    rot = jnp.zeros((d, d), jnp.float32)
    rot = rot.at[jnp.arange(half), jnp.arange(half) + half].set(1.0)
    rot = rot.at[jnp.arange(half) + half, jnp.arange(half)].set(-1.0)

    return {
        "input_ln": params["input_ln"].reshape(1, -1).astype(jnp.float32),
        "post_ln": params["post_ln"].reshape(1, -1).astype(jnp.float32),
        "wq": wq.astype(jnp.bfloat16),
        "wk": wk.astype(jnp.bfloat16),
        "wv": wv.astype(jnp.bfloat16),
        "wo": wo.astype(jnp.bfloat16),
        "cos": cos, "sin": sin, "rot": rot,
        "wg_t": params["wg"].T.astype(jnp.float32),                    # (H, E)
        "w1_t": params["w1"].transpose(0, 2, 1).astype(jnp.bfloat16),  # (E, H, I)
        "w3_t": params["w3"].transpose(0, 2, 1).astype(jnp.bfloat16),  # (E, H, I)
        "w2_t": params["w2"].transpose(0, 2, 1).astype(jnp.bfloat16),  # (E, I, H)
    }


# =====================================================================
# pure-JAX reference (f32) for correctness check
# =====================================================================
def _ref_rmsnorm(x, w, eps=EPS):
    var = jnp.mean(x * x, axis=-1, keepdims=True)
    return x * jax.lax.rsqrt(var + eps) * w


def apply_rope(x, positions, base=ROPE_BASE):
    d = x.shape[-1]
    inv_freq = 1.0 / (base ** (jnp.arange(0, d, 2, dtype=jnp.float32) / d))
    freqs = positions.astype(jnp.float32)[:, None] * inv_freq[None, :]
    cos = jnp.cos(freqs)[:, None, :]
    sin = jnp.sin(freqs)[:, None, :]
    x1 = x[..., : d // 2]
    x2 = x[..., d // 2:]
    return jnp.concatenate([x1 * cos - x2 * sin, x2 * cos + x1 * sin], axis=-1)


def compute_routing(router_logits, top_k):
    probs = jax.nn.softmax(router_logits.astype(jnp.float32), axis=-1)
    topw, topi = jax.lax.top_k(probs, top_k)
    topw = topw / jnp.sum(topw, axis=-1, keepdims=True)
    return jnp.sum(
        jax.nn.one_hot(topi, router_logits.shape[-1], dtype=jnp.float32)
        * topw[..., None], axis=1)


def ref_decoder_layer(hidden_states, residual, params):
    if residual is None:
        residual = hidden_states
        hs = _ref_rmsnorm(hidden_states, params["input_ln"])
    else:
        s = hidden_states + residual
        residual = s
        hs = _ref_rmsnorm(s, params["input_ln"])
    t = hs.shape[0]
    qkv = hs @ params["wqkv"].T
    q = qkv[:, :Q_SIZE].reshape(t, NUM_HEADS, HEAD_DIM)
    k = qkv[:, Q_SIZE:Q_SIZE + KV_SIZE].reshape(t, NUM_KV_HEADS, HEAD_DIM)
    v = qkv[:, Q_SIZE + KV_SIZE:].reshape(t, NUM_KV_HEADS, HEAD_DIM)
    pos = jnp.arange(t)
    q = apply_rope(q, pos)
    k = apply_rope(k, pos)
    group = NUM_HEADS // NUM_KV_HEADS
    k_rep = jnp.repeat(k, group, axis=1)
    v_rep = jnp.repeat(v, group, axis=1)
    scale = 1.0 / (HEAD_DIM ** 0.5)
    scores = jnp.einsum("thd,shd->hts", q, k_rep) * scale
    mask = jnp.tril(jnp.ones((t, t), bool))
    scores = jnp.where(mask[None], scores, -1e30)
    p = jax.nn.softmax(scores, axis=-1)
    attn = jnp.einsum("hts,shd->thd", p, v_rep).reshape(t, Q_SIZE)
    hs = attn @ params["wo"].T
    s = hs + residual
    residual = s
    hs = _ref_rmsnorm(s, params["post_ln"])
    logits = hs @ params["wg"].T
    route = compute_routing(logits, TOP_K)
    g = jnp.einsum("th,eih->tei", hs, params["w1"])
    u = jnp.einsum("th,eih->tei", hs, params["w3"])
    act = (g * jax.nn.sigmoid(g)) * u
    y = jnp.einsum("tei,ehi->teh", act, params["w2"])
    out = jnp.sum(route[..., None] * y, axis=1)
    return out, residual


# ---------------- deterministic parameter init (PyTorch layout) ----------------
def init_params(key):
    ks = jax.random.split(key, 9)
    s = 0.02
    return {
        "input_ln": 1.0 + 0.01 * jax.random.normal(ks[0], (HIDDEN,), jnp.float32),
        "post_ln": 1.0 + 0.01 * jax.random.normal(ks[1], (HIDDEN,), jnp.float32),
        "wqkv": s * jax.random.normal(ks[2], (Q_SIZE + 2 * KV_SIZE, HIDDEN), jnp.float32),
        "wo": s * jax.random.normal(ks[3], (HIDDEN, Q_SIZE), jnp.float32),
        "wg": s * jax.random.normal(ks[4], (NUM_EXPERTS, HIDDEN), jnp.float32),
        "w1": s * jax.random.normal(ks[5], (NUM_EXPERTS, INTER, HIDDEN), jnp.float32),
        "w3": s * jax.random.normal(ks[6], (NUM_EXPERTS, INTER, HIDDEN), jnp.float32),
        "w2": s * jax.random.normal(ks[7], (NUM_EXPERTS, HIDDEN, INTER), jnp.float32),
    }


if __name__ == "__main__":
    key = jax.random.PRNGKey(0)
    pkey, xkey = jax.random.split(key)
    params = init_params(pkey)
    prepared = prepare_params(params, T)
    hidden_states = jax.random.normal(xkey, (T, HIDDEN), jnp.float32)

    # First layer call: residual is None.
    out1, res1 = mixtral_decoder_layer(hidden_states, None, prepared)
    # Second call: exercises fused add+RMSNorm path.
    out2, res2 = mixtral_decoder_layer(out1, res1, prepared)
    jax.block_until_ready((out1, res1, out2, res2))

    # Correctness check against pure-JAX f32 reference.
    r_out1, r_res1 = ref_decoder_layer(hidden_states, None, params)
    r_out2, r_res2 = ref_decoder_layer(r_out1, r_res1, params)
    for a, b in ((out1, r_out1), (res1, r_res1), (out2, r_out2), (res2, r_res2)):
        if not jnp.allclose(a, b, atol=1e-2, rtol=1e-2):
            raise AssertionError(
                f"mismatch: max abs diff {float(jnp.max(jnp.abs(a - b)))}")

    print("KERNEL_OK")
</pallas_src>

<mosaic_0001>
module attributes {stable_mosaic.version = 11 : i64} {
  func.func @_attn_block_kernel(%arg0: memref<8x64xf32, #tpu.memory_space<vmem>>, %arg1: memref<8x64xf32, #tpu.memory_space<vmem>>, %arg2: memref<1x64xf32, #tpu.memory_space<vmem>>, %arg3: memref<1x64xf32, #tpu.memory_space<vmem>>, %arg4: memref<4x64x16xbf16, #tpu.memory_space<vmem>>, %arg5: memref<2x64x16xbf16, #tpu.memory_space<vmem>>, %arg6: memref<2x64x16xbf16, #tpu.memory_space<vmem>>, %arg7: memref<4x16x64xbf16, #tpu.memory_space<vmem>>, %arg8: memref<8x16xf32, #tpu.memory_space<vmem>>, %arg9: memref<8x16xf32, #tpu.memory_space<vmem>>, %arg10: memref<16x16xf32, #tpu.memory_space<vmem>>, %arg11: memref<8x64xf32, #tpu.memory_space<vmem>>, %arg12: memref<8x64xf32, #tpu.memory_space<vmem>>) attributes {dimension_semantics = [], scalar_prefetch = 0 : i64, scratch_operands = 0 : i64, tpu.core_type = #tpu.core_type<tc>} {
    %c0 = arith.constant 0 : index
    %c0_0 = arith.constant 0 : index
    %0 = vector.load %arg0[%c0, %c0_0] : memref<8x64xf32, #tpu.memory_space<vmem>>, vector<8x64xf32>
    %c0_1 = arith.constant 0 : index
    %c0_2 = arith.constant 0 : index
    %1 = vector.load %arg1[%c0_1, %c0_2] : memref<8x64xf32, #tpu.memory_space<vmem>>, vector<8x64xf32>
    %2 = arith.addf %0, %1 : vector<8x64xf32>
    %3 = arith.mulf %2, %2 : vector<8x64xf32>
    %cst = arith.constant dense<0.000000e+00> : vector<8xf32>
    %4 = vector.multi_reduction <add>, %3, %cst [1] : vector<8x64xf32> to vector<8xf32>
    %5 = vector.shape_cast %4 : vector<8xf32> to vector<8x1xf32>
    %cst_3 = arith.constant 6.400000e+01 : f32
    %6 = vector.broadcast %cst_3 : f32 to vector<8x1xf32>
    %7 = arith.divf %5, %6 : vector<8x1xf32>
    %cst_4 = arith.constant 9.99999997E-7 : f32
    %8 = vector.broadcast %cst_4 : f32 to vector<8x1xf32>
    %9 = arith.addf %7, %8 : vector<8x1xf32>
    %10 = math.rsqrt %9 : vector<8x1xf32>
    %11 = vector.broadcast %10 : vector<8x1xf32> to vector<8x64xf32>
    %12 = arith.mulf %2, %11 : vector<8x64xf32>
    %c0_5 = arith.constant 0 : index
    %c0_6 = arith.constant 0 : index
    %13 = vector.load %arg2[%c0_5, %c0_6] : memref<1x64xf32, #tpu.memory_space<vmem>>, vector<1x64xf32>
    %14 = vector.broadcast %13 : vector<1x64xf32> to vector<8x64xf32>
    %15 = arith.mulf %12, %14 : vector<8x64xf32>
    %16 = arith.truncf %15 : vector<8x64xf32> to vector<8x64xbf16>
    %c0_7 = arith.constant 0 : index
    %c0_8 = arith.constant 0 : index
    %17 = vector.load %arg8[%c0_7, %c0_8] : memref<8x16xf32, #tpu.memory_space<vmem>>, vector<8x16xf32>
    %c0_9 = arith.constant 0 : index
    %c0_10 = arith.constant 0 : index
    %18 = vector.load %arg9[%c0_9, %c0_10] : memref<8x16xf32, #tpu.memory_space<vmem>>, vector<8x16xf32>
    %c0_11 = arith.constant 0 : index
    %c0_12 = arith.constant 0 : index
    %19 = vector.load %arg10[%c0_11, %c0_12] : memref<16x16xf32, #tpu.memory_space<vmem>>, vector<16x16xf32>
    %20 = tpu.iota {dimensions = array<i32: 0>} : vector<8x8xi32>
    %21 = tpu.iota {dimensions = array<i32: 1>} : vector<8x8xi32>
    %22 = arith.cmpi sle, %21, %20 : vector<8x8xi32>
    %c0_13 = arith.constant 0 : index
    %c0_14 = arith.constant 0 : index
    %c0_15 = arith.constant 0 : index
    %23 = vector.load %arg5[%c0_13, %c0_14, %c0_15] : memref<2x64x16xbf16, #tpu.memory_space<vmem>>, vector<1x64x16xbf16>
    %24 = vector.shape_cast %23 : vector<1x64x16xbf16> to vector<64x16xbf16>
    %cst_16 = arith.constant dense<0.000000e+00> : vector<8x16xf32>
    %25 = tpu.matmul %16, %24, %cst_16 {dimension_numbers = #tpu.dot_dimension_numbers<[1], [0], [0], [1], [0, 0, 1, 1], [], []>} : vector<8x64xbf16>, vector<64x16xbf16>, vector<8x16xf32> -> vector<8x16xf32>
    %c0_17 = arith.constant 0 : index
    %c0_18 = arith.constant 0 : index
    %c0_19 = arith.constant 0 : index
    %26 = vector.load %arg6[%c0_17, %c0_18, %c0_19] : memref<2x64x16xbf16, #tpu.memory_space<vmem>>, vector<1x64x16xbf16>
    %27 = vector.shape_cast %26 : vector<1x64x16xbf16> to vector<64x16xbf16>
    %cst_20 = arith.constant dense<0.000000e+00> : vector<8x16xf32>
    %28 = tpu.matmul %16, %27, %cst_20 {dimension_numbers = #tpu.dot_dimension_numbers<[1], [0], [0], [1], [0, 0, 1, 1], [], []>} : vector<8x64xbf16>, vector<64x16xbf16>, vector<8x16xf32> -> vector<8x16xf32>
    %29 = arith.mulf %25, %17 : vector<8x16xf32>
    %cst_21 = arith.constant dense<0.000000e+00> : vector<8x16xf32>
    %30 = tpu.matmul %25, %19, %cst_21 {dimension_numbers = #tpu.dot_dimension_numbers<[1], [0], [0], [1], [0, 0, 1, 1], [], []>} : vector<8x16xf32>, vector<16x16xf32>, vector<8x16xf32> -> vector<8x16xf32>
    %31 = arith.mulf %30, %18 : vector<8x16xf32>
    %32 = arith.addf %29, %31 : vector<8x16xf32>
    %c1 = arith.constant 1 : index
    %c0_22 = arith.constant 0 : index
    %c0_23 = arith.constant 0 : index
    %33 = vector.load %arg5[%c1, %c0_22, %c0_23] : memref<2x64x16xbf16, #tpu.memory_space<vmem>>, vector<1x64x16xbf16>
    %34 = vector.shape_cast %33 : vector<1x64x16xbf16> to vector<64x16xbf16>
    %cst_24 = arith.constant dense<0.000000e+00> : vector<8x16xf32>
    %35 = tpu.matmul %16, %34, %cst_24 {dimension_numbers = #tpu.dot_dimension_numbers<[1], [0], [0], [1], [0, 0, 1, 1], [], []>} : vector<8x64xbf16>, vector<64x16xbf16>, vector<8x16xf32> -> vector<8x16xf32>
    %c1_25 = arith.constant 1 : index
    %c0_26 = arith.constant 0 : index
    %c0_27 = arith.constant 0 : index
    %36 = vector.load %arg6[%c1_25, %c0_26, %c0_27] : memref<2x64x16xbf16, #tpu.memory_space<vmem>>, vector<1x64x16xbf16>
    %37 = vector.shape_cast %36 : vector<1x64x16xbf16> to vector<64x16xbf16>
    %cst_28 = arith.constant dense<0.000000e+00> : vector<8x16xf32>
    %38 = tpu.matmul %16, %37, %cst_28 {dimension_numbers = #tpu.dot_dimension_numbers<[1], [0], [0], [1], [0, 0, 1, 1], [], []>} : vector<8x64xbf16>, vector<64x16xbf16>, vector<8x16xf32> -> vector<8x16xf32>
    %39 = arith.mulf %35, %17 : vector<8x16xf32>
    %cst_29 = arith.constant dense<0.000000e+00> : vector<8x16xf32>
    %40 = tpu.matmul %35, %19, %cst_29 {dimension_numbers = #tpu.dot_dimension_numbers<[1], [0], [0], [1], [0, 0, 1, 1], [], []>} : vector<8x16xf32>, vector<16x16xf32>, vector<8x16xf32> -> vector<8x16xf32>
    %41 = arith.mulf %40, %18 : vector<8x16xf32>
    %42 = arith.addf %39, %41 : vector<8x16xf32>
    %cst_30 = arith.constant 0.000000e+00 : f32
    %43 = vector.broadcast %cst_30 : f32 to vector<8x64xf32>
    %c0_31 = arith.constant 0 : index
    %c0_32 = arith.constant 0 : index
    %c0_33 = arith.constant 0 : index
    %44 = vector.load %arg4[%c0_31, %c0_32, %c0_33] : memref<4x64x16xbf16, #tpu.memory_space<vmem>>, vector<1x64x16xbf16>
    %45 = vector.shape_cast %44 : vector<1x64x16xbf16> to vector<64x16xbf16>
    %cst_34 = arith.constant dense<0.000000e+00> : vector<8x16xf32>
    %46 = tpu.matmul %16, %45, %cst_34 {dimension_numbers = #tpu.dot_dimension_numbers<[1], [0], [0], [1], [0, 0, 1, 1], [], []>} : vector<8x64xbf16>, vector<64x16xbf16>, vector<8x16xf32> -> vector<8x16xf32>
    %47 = arith.mulf %46, %17 : vector<8x16xf32>
    %cst_35 = arith.constant dense<0.000000e+00> : vector<8x16xf32>
    %48 = tpu.matmul %46, %19, %cst_35 {dimension_numbers = #tpu.dot_dimension_numbers<[1], [0], [0], [1], [0, 0, 1, 1], [], []>} : vector<8x16xf32>, vector<16x16xf32>, vector<8x16xf32> -> vector<8x16xf32>
    %49 = arith.mulf %48, %18 : vector<8x16xf32>
    %50 = arith.addf %47, %49 : vector<8x16xf32>
    %cst_36 = arith.constant dense<0.000000e+00> : vector<8x8xf32>
    %51 = tpu.matmul %50, %32, %cst_36 {dimension_numbers = #tpu.dot_dimension_numbers<[1], [1], [0], [0], [0, 0, 1, 0], [], []>} : vector<8x16xf32>, vector<8x16xf32>, vector<8x8xf32> -> vector<8x8xf32>
    %cst_37 = arith.constant 2.500000e-01 : f32
    %52 = vector.broadcast %cst_37 : f32 to vector<8x8xf32>
    %53 = arith.mulf %51, %52 : vector<8x8xf32>
    %cst_38 = arith.constant -1.000000e+30 : f32
    %54 = vector.broadcast %cst_38 : f32 to vector<8x8xf32>
    %55 = arith.select %22, %53, %54 : vector<8x8xi1>, vector<8x8xf32>
    %cst_39 = arith.constant dense<0xFF800000> : vector<8xf32>
    %56 = vector.multi_reduction <maximumf>, %55, %cst_39 [1] : vector<8x8xf32> to vector<8xf32>
    %57 = vector.shape_cast %56 : vector<8xf32> to vector<8x1xf32>
    %58 = vector.broadcast %57 : vector<8x1xf32> to vector<8x8xf32>
    %59 = arith.subf %55, %58 : vector<8x8xf32>
    %60 = math.exp %59 : vector<8x8xf32>
    %cst_40 = arith.constant dense<0.000000e+00> : vector<8xf32>
    %61 = vector.multi_reduction <add>, %60, %cst_40 [1] : vector<8x8xf32> to vector<8xf32>
    %62 = vector.shape_cast %61 : vector<8xf32> to vector<8x1xf32>
    %63 = tpu.reciprocal %62 {approx = true} : vector<8x1xf32> -> vector<8x1xf32>
    %64 = vector.broadcast %63 : vector<8x1xf32> to vector<8x8xf32>
    %65 = arith.mulf %60, %64 : vector<8x8xf32>
    %cst_41 = arith.constant dense<0.000000e+00> : vector<8x16xf32>
    %66 = tpu.matmul %65, %28, %cst_41 {dimension_numbers = #tpu.dot_dimension_numbers<[1], [0], [0], [1], [0, 0, 1, 1], [], []>} : vector<8x8xf32>, vector<8x16xf32>, vector<8x16xf32> -> vector<8x16xf32>
    %67 = arith.truncf %66 : vector<8x16xf32> to vector<8x16xbf16>
    %c0_42 = arith.constant 0 : index
    %c0_43 = arith.constant 0 : index
    %c0_44 = arith.constant 0 : index
    %68 = vector.load %arg7[%c0_42, %c0_43, %c0_44] : memref<4x16x64xbf16, #tpu.memory_space<vmem>>, vector<1x16x64xbf16>
    %69 = vector.shape_cast %68 : vector<1x16x64xbf16> to vector<16x64xbf16>
    %cst_45 = arith.constant dense<0.000000e+00> : vector<8x64xf32>
    %70 = tpu.matmul %67, %69, %cst_45 {dimension_numbers = #tpu.dot_dimension_numbers<[1], [0], [0], [1], [0, 0, 1, 1], [], []>} : vector<8x16xbf16>, vector<16x64xbf16>, vector<8x64xf32> -> vector<8x64xf32>
    %71 = arith.addf %43, %70 : vector<8x64xf32>
    %c1_46 = arith.constant 1 : index
    %c0_47 = arith.constant 0 : index
    %c0_48 = arith.constant 0 : index
    %72 = vector.load %arg4[%c1_46, %c0_47, %c0_48] : memref<4x64x16xbf16, #tpu.memory_space<vmem>>, vector<1x64x16xbf16>
    %73 = vector.shape_cast %72 : vector<1x64x16xbf16> to vector<64x16xbf16>
    %cst_49 = arith.constant dense<0.000000e+00> : vector<8x16xf32>
    %74 = tpu.matmul %16, %73, %cst_49 {dimension_numbers = #tpu.dot_dimension_numbers<[1], [0], [0], [1], [0, 0, 1, 1], [], []>} : vector<8x64xbf16>, vector<64x16xbf16>, vector<8x16xf32> -> vector<8x16xf32>
    %75 = arith.mulf %74, %17 : vector<8x16xf32>
    %cst_50 = arith.constant dense<0.000000e+00> : vector<8x16xf32>
    %76 = tpu.matmul %74, %19, %cst_50 {dimension_numbers = #tpu.dot_dimension_numbers<[1], [0], [0], [1], [0, 0, 1, 1], [], []>} : vector<8x16xf32>, vector<16x16xf32>, vector<8x16xf32> -> vector<8x16xf32>
    %77 = arith.mulf %76, %18 : vector<8x16xf32>
    %78 = arith.addf %75, %77 : vector<8x16xf32>
    %cst_51 = arith.constant dense<0.000000e+00> : vector<8x8xf32>
    %79 = tpu.matmul %78, %32, %cst_51 {dimension_numbers = #tpu.dot_dimension_numbers<[1], [1], [0], [0], [0, 0, 1, 0], [], []>} : vector<8x16xf32>, vector<8x16xf32>, vector<8x8xf32> -> vector<8x8xf32>
    %cst_52 = arith.constant 2.500000e-01 : f32
    %80 = vector.broadcast %cst_52 : f32 to vector<8x8xf32>
    %81 = arith.mulf %79, %80 : vector<8x8xf32>
    %cst_53 = arith.constant -1.000000e+30 : f32
    %82 = vector.broadcast %cst_53 : f32 to vector<8x8xf32>
    %83 = arith.select %22, %81, %82 : vector<8x8xi1>, vector<8x8xf32>
    %cst_54 = arith.constant dense<0xFF800000> : vector<8xf32>
    %84 = vector.multi_reduction <maximumf>, %83, %cst_54 [1] : vector<8x8xf32> to vector<8xf32>
    %85 = vector.shape_cast %84 : vector<8xf32> to vector<8x1xf32>
    %86 = vector.broadcast %85 : vector<8x1xf32> to vector<8x8xf32>
    %87 = arith.subf %83, %86 : vector<8x8xf32>
    %88 = math.exp %87 : vector<8x8xf32>
    %cst_55 = arith.constant dense<0.000000e+00> : vector<8xf32>
    %89 = vector.multi_reduction <add>, %88, %cst_55 [1] : vector<8x8xf32> to vector<8xf32>
    %90 = vector.shape_cast %89 : vector<8xf32> to vector<8x1xf32>
    %91 = tpu.reciprocal %90 {approx = true} : vector<8x1xf32> -> vector<8x1xf32>
    %92 = vector.broadcast %91 : vector<8x1xf32> to vector<8x8xf32>
    %93 = arith.mulf %88, %92 : vector<8x8xf32>
    %cst_56 = arith.constant dense<0.000000e+00> : vector<8x16xf32>
    %94 = tpu.matmul %93, %28, %cst_56 {dimension_numbers = #tpu.dot_dimension_numbers<[1], [0], [0], [1], [0, 0, 1, 1], [], []>} : vector<8x8xf32>, vector<8x16xf32>, vector<8x16xf32> -> vector<8x16xf32>
    %95 = arith.truncf %94 : vector<8x16xf32> to vector<8x16xbf16>
    %c1_57 = arith.constant 1 : index
    %c0_58 = arith.constant 0 : index
    %c0_59 = arith.constant 0 : index
    %96 = vector.load %arg7[%c1_57, %c0_58, %c0_59] : memref<4x16x64xbf16, #tpu.memory_space<vmem>>, vector<1x16x64xbf16>
    %97 = vector.shape_cast %96 : vector<1x16x64xbf16> to vector<16x64xbf16>
    %cst_60 = arith.constant dense<0.000000e+00> : vector<8x64xf32>
    %98 = tpu.matmul %95, %97, %cst_60 {dimension_numbers = #tpu.dot_dimension_numbers<[1], [0], [0], [1], [0, 0, 1, 1], [], []>} : vector<8x16xbf16>, vector<16x64xbf16>, vector<8x64xf32> -> vector<8x64xf32>
    %99 = arith.addf %71, %98 : vector<8x64xf32>
    %c2 = arith.constant 2 : index
    %c0_61 = arith.constant 0 : index
    %c0_62 = arith.constant 0 : index
    %100 = vector.load %arg4[%c2, %c0_61, %c0_62] : memref<4x64x16xbf16, #tpu.memory_space<vmem>>, vector<1x64x16xbf16>
    %101 = vector.shape_cast %100 : vector<1x64x16xbf16> to vector<64x16xbf16>
    %cst_63 = arith.constant dense<0.000000e+00> : vector<8x16xf32>
    %102 = tpu.matmul %16, %101, %cst_63 {dimension_numbers = #tpu.dot_dimension_numbers<[1], [0], [0], [1], [0, 0, 1, 1], [], []>} : vector<8x64xbf16>, vector<64x16xbf16>, vector<8x16xf32> -> vector<8x16xf32>
    %103 = arith.mulf %102, %17 : vector<8x16xf32>
    %cst_64 = arith.constant dense<0.000000e+00> : vector<8x16xf32>
    %104 = tpu.matmul %102, %19, %cst_64 {dimension_numbers = #tpu.dot_dimension_numbers<[1], [0], [0], [1], [0, 0, 1, 1], [], []>} : vector<8x16xf32>, vector<16x16xf32>, vector<8x16xf32> -> vector<8x16xf32>
    %105 = arith.mulf %104, %18 : vector<8x16xf32>
    %106 = arith.addf %103, %105 : vector<8x16xf32>
    %cst_65 = arith.constant dense<0.000000e+00> : vector<8x8xf32>
    %107 = tpu.matmul %106, %42, %cst_65 {dimension_numbers = #tpu.dot_dimension_numbers<[1], [1], [0], [0], [0, 0, 1, 0], [], []>} : vector<8x16xf32>, vector<8x16xf32>, vector<8x8xf32> -> vector<8x8xf32>
    %cst_66 = arith.constant 2.500000e-01 : f32
    %108 = vector.broadcast %cst_66 : f32 to vector<8x8xf32>
    %109 = arith.mulf %107, %108 : vector<8x8xf32>
    %cst_67 = arith.constant -1.000000e+30 : f32
    %110 = vector.broadcast %cst_67 : f32 to vector<8x8xf32>
    %111 = arith.select %22, %109, %110 : vector<8x8xi1>, vector<8x8xf32>
    %cst_68 = arith.constant dense<0xFF800000> : vector<8xf32>
    %112 = vector.multi_reduction <maximumf>, %111, %cst_68 [1] : vector<8x8xf32> to vector<8xf32>
    %113 = vector.shape_cast %112 : vector<8xf32> to vector<8x1xf32>
    %114 = vector.broadcast %113 : vector<8x1xf32> to vector<8x8xf32>
    %115 = arith.subf %111, %114 : vector<8x8xf32>
    %116 = math.exp %115 : vector<8x8xf32>
    %cst_69 = arith.constant dense<0.000000e+00> : vector<8xf32>
    %117 = vector.multi_reduction <add>, %116, %cst_69 [1] : vector<8x8xf32> to vector<8xf32>
    %118 = vector.shape_cast %117 : vector<8xf32> to vector<8x1xf32>
    %119 = tpu.reciprocal %118 {approx = true} : vector<8x1xf32> -> vector<8x1xf32>
    %120 = vector.broadcast %119 : vector<8x1xf32> to vector<8x8xf32>
    %121 = arith.mulf %116, %120 : vector<8x8xf32>
    %cst_70 = arith.constant dense<0.000000e+00> : vector<8x16xf32>
    %122 = tpu.matmul %121, %38, %cst_70 {dimension_numbers = #tpu.dot_dimension_numbers<[1], [0], [0], [1], [0, 0, 1, 1], [], []>} : vector<8x8xf32>, vector<8x16xf32>, vector<8x16xf32> -> vector<8x16xf32>
    %123 = arith.truncf %122 : vector<8x16xf32> to vector<8x16xbf16>
    %c2_71 = arith.constant 2 : index
    %c0_72 = arith.constant 0 : index
    %c0_73 = arith.constant 0 : index
    %124 = vector.load %arg7[%c2_71, %c0_72, %c0_73] : memref<4x16x64xbf16, #tpu.memory_space<vmem>>, vector<1x16x64xbf16>
    %125 = vector.shape_cast %124 : vector<1x16x64xbf16> to vector<16x64xbf16>
    %cst_74 = arith.constant dense<0.000000e+00> : vector<8x64xf32>
    %126 = tpu.matmul %123, %125, %cst_74 {dimension_numbers = #tpu.dot_dimension_numbers<[1], [0], [0], [1], [0, 0, 1, 1], [], []>} : vector<8x16xbf16>, vector<16x64xbf16>, vector<8x64xf32> -> vector<8x64xf32>
    %127 = arith.addf %99, %126 : vector<8x64xf32>
    %c3 = arith.constant 3 : index
    %c0_75 = arith.constant 0 : index
    %c0_76 = arith.constant 0 : index
    %128 = vector.load %arg4[%c3, %c0_75, %c0_76] : memref<4x64x16xbf16, #tpu.memory_space<vmem>>, vector<1x64x16xbf16>
    %129 = vector.shape_cast %128 : vector<1x64x16xbf16> to vector<64x16xbf16>
    %cst_77 = arith.constant dense<0.000000e+00> : vector<8x16xf32>
    %130 = tpu.matmul %16, %129, %cst_77 {dimension_numbers = #tpu.dot_dimension_numbers<[1], [0], [0], [1], [0, 0, 1, 1], [], []>} : vector<8x64xbf16>, vector<64x16xbf16>, vector<8x16xf32> -> vector<8x16xf32>
    %131 = arith.mulf %130, %17 : vector<8x16xf32>
    %cst_78 = arith.constant dense<0.000000e+00> : vector<8x16xf32>
    %132 = tpu.matmul %130, %19, %cst_78 {dimension_numbers = #tpu.dot_dimension_numbers<[1], [0], [0], [1], [0, 0, 1, 1], [], []>} : vector<8x16xf32>, vector<16x16xf32>, vector<8x16xf32> -> vector<8x16xf32>
    %133 = arith.mulf %132, %18 : vector<8x16xf32>
    %134 = arith.addf %131, %133 : vector<8x16xf32>
    %cst_79 = arith.constant dense<0.000000e+00> : vector<8x8xf32>
    %135 = tpu.matmul %134, %42, %cst_79 {dimension_numbers = #tpu.dot_dimension_numbers<[1], [1], [0], [0], [0, 0, 1, 0], [], []>} : vector<8x16xf32>, vector<8x16xf32>, vector<8x8xf32> -> vector<8x8xf32>
    %cst_80 = arith.constant 2.500000e-01 : f32
    %136 = vector.broadcast %cst_80 : f32 to vector<8x8xf32>
    %137 = arith.mulf %135, %136 : vector<8x8xf32>
    %cst_81 = arith.constant -1.000000e+30 : f32
    %138 = vector.broadcast %cst_81 : f32 to vector<8x8xf32>
    %139 = arith.select %22, %137, %138 : vector<8x8xi1>, vector<8x8xf32>
    %cst_82 = arith.constant dense<0xFF800000> : vector<8xf32>
    %140 = vector.multi_reduction <maximumf>, %139, %cst_82 [1] : vector<8x8xf32> to vector<8xf32>
    %141 = vector.shape_cast %140 : vector<8xf32> to vector<8x1xf32>
    %142 = vector.broadcast %141 : vector<8x1xf32> to vector<8x8xf32>
    %143 = arith.subf %139, %142 : vector<8x8xf32>
    %144 = math.exp %143 : vector<8x8xf32>
    %cst_83 = arith.constant dense<0.000000e+00> : vector<8xf32>
    %145 = vector.multi_reduction <add>, %144, %cst_83 [1] : vector<8x8xf32> to vector<8xf32>
    %146 = vector.shape_cast %145 : vector<8xf32> to vector<8x1xf32>
    %147 = tpu.reciprocal %146 {approx = true} : vector<8x1xf32> -> vector<8x1xf32>
    %148 = vector.broadcast %147 : vector<8x1xf32> to vector<8x8xf32>
    %149 = arith.mulf %144, %148 : vector<8x8xf32>
    %cst_84 = arith.constant dense<0.000000e+00> : vector<8x16xf32>
    %150 = tpu.matmul %149, %38, %cst_84 {dimension_numbers = #tpu.dot_dimension_numbers<[1], [0], [0], [1], [0, 0, 1, 1], [], []>} : vector<8x8xf32>, vector<8x16xf32>, vector<8x16xf32> -> vector<8x16xf32>
    %151 = arith.truncf %150 : vector<8x16xf32> to vector<8x16xbf16>
    %c3_85 = arith.constant 3 : index
    %c0_86 = arith.constant 0 : index
    %c0_87 = arith.constant 0 : index
    %152 = vector.load %arg7[%c3_85, %c0_86, %c0_87] : memref<4x16x64xbf16, #tpu.memory_space<vmem>>, vector<1x16x64xbf16>
    %153 = vector.shape_cast %152 : vector<1x16x64xbf16> to vector<16x64xbf16>
    %cst_88 = arith.constant dense<0.000000e+00> : vector<8x64xf32>
    %154 = tpu.matmul %151, %153, %cst_88 {dimension_numbers = #tpu.dot_dimension_numbers<[1], [0], [0], [1], [0, 0, 1, 1], [], []>} : vector<8x16xbf16>, vector<16x64xbf16>, vector<8x64xf32> -> vector<8x64xf32>
    %155 = arith.addf %127, %154 : vector<8x64xf32>
    %156 = arith.addf %155, %2 : vector<8x64xf32>
    %c0_89 = arith.constant 0 : index
    %c0_90 = arith.constant 0 : index
    %157 = vector.load %arg12[%c0_89, %c0_90] : memref<8x64xf32, #tpu.memory_space<vmem>>, vector<8x64xf32>
    tpu.vector_store %arg12[%c0_89, %c0_90], %156 {strides = array<i32>} : memref<8x64xf32, #tpu.memory_space<vmem>>, vector<8x64xf32>,
    %158 = arith.mulf %156, %156 : vector<8x64xf32>
    %cst_91 = arith.constant dense<0.000000e+00> : vector<8xf32>
    %159 = vector.multi_reduction <add>, %158, %cst_91 [1] : vector<8x64xf32> to vector<8xf32>
    %160 = vector.shape_cast %159 : vector<8xf32> to vector<8x1xf32>
    %cst_92 = arith.constant 6.400000e+01 : f32
    %161 = vector.broadcast %cst_92 : f32 to vector<8x1xf32>
    %162 = arith.divf %160, %161 : vector<8x1xf32>
    %cst_93 = arith.constant 9.99999997E-7 : f32
    %163 = vector.broadcast %cst_93 : f32 to vector<8x1xf32>
    %164 = arith.addf %162, %163 : vector<8x1xf32>
    %165 = math.rsqrt %164 : vector<8x1xf32>
    %166 = vector.broadcast %165 : vector<8x1xf32> to vector<8x64xf32>
    %167 = arith.mulf %156, %166 : vector<8x64xf32>
    %c0_94 = arith.constant 0 : index
    %c0_95 = arith.constant 0 : index
    %168 = vector.load %arg3[%c0_94, %c0_95] : memref<1x64xf32, #tpu.memory_space<vmem>>, vector<1x64xf32>
    %169 = vector.broadcast %168 : vector<1x64xf32> to vector<8x64xf32>
    %170 = arith.mulf %167, %169 : vector<8x64xf32>
    %c0_96 = arith.constant 0 : index
    %c0_97 = arith.constant 0 : index
    %171 = vector.load %arg11[%c0_96, %c0_97] : memref<8x64xf32, #tpu.memory_space<vmem>>, vector<8x64xf32>
    tpu.vector_store %arg11[%c0_96, %c0_97], %170 {strides = array<i32>} : memref<8x64xf32, #tpu.memory_space<vmem>>, vector<8x64xf32>,
    return
  }
}

module attributes {stable_mosaic.version = 11 : i64} {
  func.func @_moe_kernel(%arg0: i32, %arg1: memref<8x64xf32, #tpu.memory_space<vmem>>, %arg2: memref<64x4xf32, #tpu.memory_space<vmem>>, %arg3: memref<1x64x128xbf16, #tpu.memory_space<vmem>>, %arg4: memref<1x64x128xbf16, #tpu.memory_space<vmem>>, %arg5: memref<1x128x64xbf16, #tpu.memory_space<vmem>>, %arg6: memref<8x64xf32, #tpu.memory_space<vmem>>, %arg7: memref<8x4xf32, #tpu.memory_space<vmem>>) attributes {dimension_semantics = [#tpu.dimension_semantics<arbitrary>], iteration_bounds = array<i64: 4>, scalar_prefetch = 0 : i64, scratch_operands = 1 : i64, tpu.core_type = #tpu.core_type<tc>, window_params = [{pipeline_mode = #tpu.pipeline_mode<synchronous>, transform_indices = @transform_0, window_bounds = array<i64: 8, 64>}, {pipeline_mode = #tpu.pipeline_mode<synchronous>, transform_indices = @transform_1, window_bounds = array<i64: 64, 4>}, {transform_indices = @transform_2, window_bounds = array<i64: 1, 64, 128>}, {transform_indices = @transform_3, window_bounds = array<i64: 1, 64, 128>}, {transform_indices = @transform_4, window_bounds = array<i64: 1, 128, 64>}, {pipeline_mode = #tpu.pipeline_mode<synchronous>, transform_indices = @transform_5, window_bounds = array<i64: 8, 64>}]} {
    %c0_i32 = arith.constant 0 : i32
    %0 = arith.cmpi eq, %arg0, %c0_i32 : i32
    %1 = arith.extui %0 : i1 to i32
    %c0_i32_0 = arith.constant 0 : i32
    %2 = arith.cmpi ne, %1, %c0_i32_0 : i32
    scf.if %2 {
      %cst_22 = arith.constant 0.000000e+00 : f32
      %35 = vector.broadcast %cst_22 : f32 to vector<8x64xf32>
      %c0_23 = arith.constant 0 : index
      %c0_24 = arith.constant 0 : index
      %36 = vector.load %arg6[%c0_23, %c0_24] : memref<8x64xf32, #tpu.memory_space<vmem>>, vector<8x64xf32>
      tpu.vector_store %arg6[%c0_23, %c0_24], %35 {strides = array<i32>} : memref<8x64xf32, #tpu.memory_space<vmem>>, vector<8x64xf32>,
      %c0_25 = arith.constant 0 : index
      %c0_26 = arith.constant 0 : index
      %37 = vector.load %arg1[%c0_25, %c0_26] : memref<8x64xf32, #tpu.memory_space<vmem>>, vector<8x64xf32>
      %c0_27 = arith.constant 0 : index
      %c0_28 = arith.constant 0 : index
      %38 = vector.load %arg2[%c0_27, %c0_28] : memref<64x4xf32, #tpu.memory_space<vmem>>, vector<64x4xf32>
      %cst_29 = arith.constant dense<0.000000e+00> : vector<8x4xf32>
      %39 = tpu.matmul %37, %38, %cst_29 {dimension_numbers = #tpu.dot_dimension_numbers<[1], [0], [0], [1], [0, 0, 1, 1], [], []>} : vector<8x64xf32>, vector<64x4xf32>, vector<8x4xf32> -> vector<8x4xf32>
      %cst_30 = arith.constant dense<0xFF800000> : vector<8xf32>
      %40 = vector.multi_reduction <maximumf>, %39, %cst_30 [1] : vector<8x4xf32> to vector<8xf32>
      %41 = vector.shape_cast %40 : vector<8xf32> to vector<8x1xf32>
      %42 = vector.broadcast %41 : vector<8x1xf32> to vector<8x4xf32>
      %43 = arith.subf %39, %42 : vector<8x4xf32>
      %44 = math.exp %43 : vector<8x4xf32>
      %cst_31 = arith.constant dense<0.000000e+00> : vector<8xf32>
      %45 = vector.multi_reduction <add>, %44, %cst_31 [1] : vector<8x4xf32> to vector<8xf32>
      %46 = vector.shape_cast %45 : vector<8xf32> to vector<8x1xf32>
      %47 = vector.broadcast %46 : vector<8x1xf32> to vector<8x4xf32>
      %48 = arith.divf %44, %47 : vector<8x4xf32>
      %49 = tpu.iota {dimensions = array<i32: 1>} : vector<8x4xi32>
      %cst_32 = arith.constant 0.000000e+00 : f32
      %50 = vector.broadcast %cst_32 : f32 to vector<8x4xf32>
      %cst_33 = arith.constant dense<0xFF800000> : vector<8xf32>
      %51 = vector.multi_reduction <maximumf>, %48, %cst_33 [1] : vector<8x4xf32> to vector<8xf32>
      %52 = vector.shape_cast %51 : vector<8xf32> to vector<8x1xf32>
      %53 = vector.broadcast %52 : vector<8x1xf32> to vector<8x4xf32>
      %54 = arith.cmpf oge, %48, %53 : vector<8x4xf32>
      %c4_i32 = arith.constant 4 : i32
      %55 = vector.broadcast %c4_i32 : i32 to vector<8x4xi32>
      %56 = arith.select %54, %49, %55 : vector<8x4xi1>, vector<8x4xi32>
      %cst_34 = arith.constant dense<2147483647> : vector<8xi32>
      %57 = vector.multi_reduction <minsi>, %56, %cst_34 [1] : vector<8x4xi32> to vector<8xi32>
      %58 = vector.shape_cast %57 : vector<8xi32> to vector<8x1xi32>
      %59 = vector.broadcast %58 : vector<8x1xi32> to vector<8x4xi32>
      %60 = arith.cmpi eq, %49, %59 : vector<8x4xi32>
      %61 = arith.extui %60 : vector<8x4xi1> to vector<8x4xi32>
      %62 = arith.sitofp %61 : vector<8x4xi32> to vector<8x4xf32>
      %63 = arith.maximumf %50, %62 : vector<8x4xf32>
      %cst_35 = arith.constant 0.000000e+00 : f32
      %64 = vector.broadcast %cst_35 : f32 to vector<8x4xf32>
      %65 = arith.cmpf ogt, %62, %64 : vector<8x4xf32>
      %cst_36 = arith.constant -1.000000e+00 : f32
      %66 = vector.broadcast %cst_36 : f32 to vector<8x4xf32>
      %67 = arith.select %65, %66, %48 : vector<8x4xi1>, vector<8x4xf32>
      %cst_37 = arith.constant dense<0xFF800000> : vector<8xf32>
      %68 = vector.multi_reduction <maximumf>, %67, %cst_37 [1] : vector<8x4xf32> to vector<8xf32>
      %69 = vector.shape_cast %68 : vector<8xf32> to vector<8x1xf32>
      %70 = vector.broadcast %69 : vector<8x1xf32> to vector<8x4xf32>
      %71 = arith.cmpf oge, %67, %70 : vector<8x4xf32>
      %c4_i32_38 = arith.constant 4 : i32
      %72 = vector.broadcast %c4_i32_38 : i32 to vector<8x4xi32>
      %73 = arith.select %71, %49, %72 : vector<8x4xi1>, vector<8x4xi32>
      %cst_39 = arith.constant dense<2147483647> : vector<8xi32>
      %74 = vector.multi_reduction <minsi>, %73, %cst_39 [1] : vector<8x4xi32> to vector<8xi32>
      %75 = vector.shape_cast %74 : vector<8xi32> to vector<8x1xi32>
      %76 = vector.broadcast %75 : vector<8x1xi32> to vector<8x4xi32>
      %77 = arith.cmpi eq, %49, %76 : vector<8x4xi32>
      %78 = arith.extui %77 : vector<8x4xi1> to vector<8x4xi32>
      %79 = arith.sitofp %78 : vector<8x4xi32> to vector<8x4xf32>
      %80 = arith.maximumf %63, %79 : vector<8x4xf32>
      %81 = arith.mulf %80, %48 : vector<8x4xf32>
      %cst_40 = arith.constant dense<0.000000e+00> : vector<8xf32>
      %82 = vector.multi_reduction <add>, %81, %cst_40 [1] : vector<8x4xf32> to vector<8xf32>
      %83 = vector.shape_cast %82 : vector<8xf32> to vector<8x1xf32>
      %84 = vector.broadcast %83 : vector<8x1xf32> to vector<8x4xf32>
      %85 = arith.divf %81, %84 : vector<8x4xf32>
      %c0_41 = arith.constant 0 : index
      %c0_42 = arith.constant 0 : index
      %86 = vector.load %arg7[%c0_41, %c0_42] : memref<8x4xf32, #tpu.memory_space<vmem>>, vector<8x4xf32>
      tpu.vector_store %arg7[%c0_41, %c0_42], %85 {strides = array<i32>} : memref<8x4xf32, #tpu.memory_space<vmem>>, vector<8x4xf32>,
    } else {
    }
    %c0 = arith.constant 0 : index
    %c0_1 = arith.constant 0 : index
    %3 = vector.load %arg1[%c0, %c0_1] : memref<8x64xf32, #tpu.memory_space<vmem>>, vector<8x64xf32>
    %4 = arith.truncf %3 : vector<8x64xf32> to vector<8x64xbf16>
    %c0_2 = arith.constant 0 : index
    %c0_3 = arith.constant 0 : index
    %c0_4 = arith.constant 0 : index
    %5 = vector.load %arg3[%c0_2, %c0_3, %c0_4] : memref<1x64x128xbf16, #tpu.memory_space<vmem>>, vector<1x64x128xbf16>
    %6 = vector.shape_cast %5 : vector<1x64x128xbf16> to vector<64x128xbf16>
    %cst = arith.constant dense<0.000000e+00> : vector<8x128xf32>
    %7 = tpu.matmul %4, %6, %cst {dimension_numbers = #tpu.dot_dimension_numbers<[1], [0], [0], [1], [0, 0, 1, 1], [], []>} : vector<8x64xbf16>, vector<64x128xbf16>, vector<8x128xf32> -> vector<8x128xf32>
    %c0_5 = arith.constant 0 : index
    %c0_6 = arith.constant 0 : index
    %c0_7 = arith.constant 0 : index
    %8 = vector.load %arg4[%c0_5, %c0_6, %c0_7] : memref<1x64x128xbf16, #tpu.memory_space<vmem>>, vector<1x64x128xbf16>
    %9 = vector.shape_cast %8 : vector<1x64x128xbf16> to vector<64x128xbf16>
    %cst_8 = arith.constant dense<0.000000e+00> : vector<8x128xf32>
    %10 = tpu.matmul %4, %9, %cst_8 {dimension_numbers = #tpu.dot_dimension_numbers<[1], [0], [0], [1], [0, 0, 1, 1], [], []>} : vector<8x64xbf16>, vector<64x128xbf16>, vector<8x128xf32> -> vector<8x128xf32>
    %11 = arith.negf %7 : vector<8x128xf32>
    %12 = math.exp %11 : vector<8x128xf32>
    %cst_9 = arith.constant 1.000000e+00 : f32
    %13 = vector.broadcast %cst_9 : f32 to vector<8x128xf32>
    %14 = arith.addf %13, %12 : vector<8x128xf32>
    %15 = arith.divf %13, %14 : vector<8x128xf32>
    %16 = arith.mulf %7, %15 : vector<8x128xf32>
    %17 = arith.mulf %16, %10 : vector<8x128xf32>
    %18 = arith.truncf %17 : vector<8x128xf32> to vector<8x128xbf16>
    %c0_10 = arith.constant 0 : index
    %c0_11 = arith.constant 0 : index
    %c0_12 = arith.constant 0 : index
    %19 = vector.load %arg5[%c0_10, %c0_11, %c0_12] : memref<1x128x64xbf16, #tpu.memory_space<vmem>>, vector<1x128x64xbf16>
    %20 = vector.shape_cast %19 : vector<1x128x64xbf16> to vector<128x64xbf16>
    %cst_13 = arith.constant dense<0.000000e+00> : vector<8x64xf32>
    %21 = tpu.matmul %18, %20, %cst_13 {dimension_numbers = #tpu.dot_dimension_numbers<[1], [0], [0], [1], [0, 0, 1, 1], [], []>} : vector<8x128xbf16>, vector<128x64xbf16>, vector<8x64xf32> -> vector<8x64xf32>
    %c0_14 = arith.constant 0 : index
    %c0_15 = arith.constant 0 : index
    %22 = vector.load %arg7[%c0_14, %c0_15] : memref<8x4xf32, #tpu.memory_space<vmem>>, vector<8x4xf32>
    %23 = tpu.iota {dimensions = array<i32: 1>} : vector<8x4xi32>
    %24 = vector.broadcast %arg0 : i32 to vector<8x4xi32>
    %25 = arith.cmpi eq, %23, %24 : vector<8x4xi32>
    %cst_16 = arith.constant 0.000000e+00 : f32
    %26 = vector.broadcast %cst_16 : f32 to vector<8x4xf32>
    %27 = arith.select %25, %22, %26 : vector<8x4xi1>, vector<8x4xf32>
    %cst_17 = arith.constant dense<0.000000e+00> : vector<8xf32>
    %28 = vector.multi_reduction <add>, %27, %cst_17 [1] : vector<8x4xf32> to vector<8xf32>
    %29 = vector.shape_cast %28 : vector<8xf32> to vector<8x1xf32>
    %c0_18 = arith.constant 0 : index
    %c0_19 = arith.constant 0 : index
    %30 = vector.load %arg6[%c0_18, %c0_19] : memref<8x64xf32, #tpu.memory_space<vmem>>, vector<8x64xf32>
    %31 = vector.broadcast %29 : vector<8x1xf32> to vector<8x64xf32>
    %32 = arith.mulf %31, %21 : vector<8x64xf32>
    %33 = arith.addf %30, %32 : vector<8x64xf32>
    %c0_20 = arith.constant 0 : index
    %c0_21 = arith.constant 0 : index
    %34 = vector.load %arg6[%c0_20, %c0_21] : memref<8x64xf32, #tpu.memory_space<vmem>>, vector<8x64xf32>
    tpu.vector_store %arg6[%c0_20, %c0_21], %33 {strides = array<i32>} : memref<8x64xf32, #tpu.memory_space<vmem>>, vector<8x64xf32>,
    return
  }
  func.func @transform_0(%arg0: i32) -> (i32, i32) {
    %c0_i32 = arith.constant 0 : i32
    %c0_i32_0 = arith.constant 0 : i32
    %c0_i32_1 = arith.constant 0 : i32
    return %c0_i32, %c0_i32_0 : i32, i32
  }
  func.func @transform_1(%arg0: i32) -> (i32, i32) {
    %c0_i32 = arith.constant 0 : i32
    %c0_i32_0 = arith.constant 0 : i32
    %c0_i32_1 = arith.constant 0 : i32
    return %c0_i32, %c0_i32_0 : i32, i32
  }
  func.func @transform_2(%arg0: i32) -> (i32, i32, i32) {
    %c0_i32 = arith.constant 0 : i32
    %c0_i32_0 = arith.constant 0 : i32
    %c0_i32_1 = arith.constant 0 : i32
    return %arg0, %c0_i32, %c0_i32_0 : i32, i32, i32
  }
  func.func @transform_3(%arg0: i32) -> (i32, i32, i32) {
    %c0_i32 = arith.constant 0 : i32
    %c0_i32_0 = arith.constant 0 : i32
    %c0_i32_1 = arith.constant 0 : i32
    return %arg0, %c0_i32, %c0_i32_0 : i32, i32, i32
  }
  func.func @transform_4(%arg0: i32) -> (i32, i32, i32) {
    %c0_i32 = arith.constant 0 : i32
    %c0_i32_0 = arith.constant 0 : i32
    %c0_i32_1 = arith.constant 0 : i32
    return %arg0, %c0_i32, %c0_i32_0 : i32, i32, i32
  }
  func.func @transform_5(%arg0: i32) -> (i32, i32) {
    %c0_i32 = arith.constant 0 : i32
    %c0_i32_0 = arith.constant 0 : i32
    %c0_i32_1 = arith.constant 0 : i32
    return %c0_i32, %c0_i32_0 : i32, i32
  }
}

</mosaic_0001>

<llo_original>
// kernel: _decoder_layer_jit.3
$region0: #{_decoder_layer_jit.3}
  #allocation0 [shape = 'u32[]', space=smem, size = 0x4, offset = 0x4, fixed_abs, tag = 'smem constant byte address 0x4 - core index']
  #allocation1 [shape = 'u32[144,128]{1,0:T(1,128)}', space=vmem, size = 0x12000, scoped, tag = 'internal scratch']
  #allocation2 [shape = 'f32[8,4]{1,0:T(8,128)}', space=vmem, size = 0x1000, scoped, tag = 'scratch operand']
  %s0 = inlined_call_operand.vmem [shape: f32[8,64], index: 0, kind: input, shape index: {}]
  %s1 = inlined_call_operand.vmem [shape: f32[64,4], index: 1, kind: input, shape index: {}]
  %s2 = inlined_call_operand.vmem [shape: bf16[4,64,128], index: 2, kind: input, shape index: {}]
  %s3 = inlined_call_operand.vmem [shape: bf16[4,64,128], index: 3, kind: input, shape index: {}]
  %s4 = inlined_call_operand.vmem [shape: bf16[4,128,64], index: 4, kind: input, shape index: {}]
  %s5 = inlined_call_operand.hbm [shape: f32[8,64], index: 5, kind: output, shape index: {}]
  %s6 = sld [smem:[#allocation0]]
  $region57: #{_decoder_layer_jit.3} parent=0
    _
  %s8 = ssub.s32 1, %s6
  %s9 = scalar_select 0, %s8, %s6
  $region1: #{_decoder_layer_jit.3} parent=0
    #allocation3 [shape = 'u8[4096]{0}', space=vmem, size = 0x1000, scoped, tag = 'output window, operand 0, single buffered']
    #allocation4 [shape = 's32[2]{0}', space=sflag, size = 0x8, scoped, tag = 'scoped memory for _decoder_layer_jit.3']
    %10 = vsyncpa [#allocation4], 0
    loop: start=0, step=1, limit=6
    $region2: #{_decoder_layer_jit.3} parent=1 // loop_pre_header
      _
    $region3: #{_decoder_layer_jit.3} parent=1 // loop_header
      %s12 = sphi 0, %s16
      %p13 = scmp.ge.s32.totalorder %s12, 6
      %s20 = sphi 0, %s20
      %s22 = sphi 0, %s20
      %s23 = sphi 0, %s22
      %s37 = sphi 0, %s23
      %s41 = sphi 0, %s41
      %s43 = sphi 0, %s41
      %s44 = sphi 0, %s43
      %s58 = sphi 0, %s44
      %s64 = sphi 0, %s66
      %s67 = sphi 0, %s64
      %s68 = sphi 0, %s67
      %s84 = sphi 0, %s68
      %s90 = sphi 0, %s92
      %s93 = sphi 0, %s90
      %s94 = sphi 0, %s93
      %s110 = sphi 0, %s94
      %s116 = sphi 0, %s118
      %s119 = sphi 0, %s116
      %s120 = sphi 0, %s119
      %s136 = sphi 0, %s120
      %s140 = sphi 0, %s140
      %s142 = sphi 0, %s140
      %s143 = sphi 0, %s142
      %s157 = sphi 0, %s143
    $region4: #{_decoder_layer_jit.3} parent=1 // loop_header_branch
      %15 = sbr.rel (%p13) target = $region8
    $region5: #{_decoder_layer_jit.3} parent=1 // loop_body
      %s17 = ssub.s32 %s12, 1
      %s18 = ssub.s32 %s12, 2
      %s19 = sadd.s32 %s12, 1
      %s21 = sadd.s32 %s20, 1
      %p24 = scmp.eq.s32.totalorder %s12, 3
      %p25 = scmp.ne.s32.totalorder %s20, %s22
      %p26 = scmp.eq.s32.totalorder %s12, 0
      %p27 = por %p25, %p26
      %p28 = scmp.ne.s32.totalorder %s20, %s22
      %p29 = scmp.eq.s32.totalorder %s17, 3
      %p30 = por %p28, %p29
      %p31 = scmp.ne.s32.totalorder %s22, %s23
      %p32 = scmp.eq.s32.totalorder %s17, 0
      %p33 = por %p31, %p32
      %p34 = scmp.ne.s32.totalorder %s22, %s23
      %p35 = scmp.eq.s32.totalorder %s18, 3
      %p36 = por %p34, %p35
      %p38 = scmp.ne.s32.totalorder %s23, %s37
      %p39 = scmp.eq.s32.totalorder %s18, 0
      %p40 = por %p38, %p39
      %s42 = sadd.s32 %s41, 1
      %p45 = scmp.eq.s32.totalorder %s12, 3
      %p46 = scmp.ne.s32.totalorder %s41, %s43
      %p47 = scmp.eq.s32.totalorder %s12, 0
      %p48 = por %p46, %p47
      %p49 = scmp.ne.s32.totalorder %s41, %s43
      %p50 = scmp.eq.s32.totalorder %s17, 3
      %p51 = por %p49, %p50
      %p52 = scmp.ne.s32.totalorder %s43, %s44
      %p53 = scmp.eq.s32.totalorder %s17, 0
      %p54 = por %p52, %p53
      %p55 = scmp.ne.s32.totalorder %s43, %s44
      %p56 = scmp.eq.s32.totalorder %s18, 3
      %p57 = por %p55, %p56
      %p59 = scmp.ne.s32.totalorder %s44, %s58
      %p60 = scmp.eq.s32.totalorder %s18, 0
      %p61 = por %p59, %p60
      %s62 = ssub.s32 %s12, %s19
      %p63 = scmp.eq.s32.totalorder %s62, 0
      %s65 = sadd.s32 %s64, 1
      %s66 = scalar_select %p63, %s64, %s65
      %p69 = pneg %p63
      %p70 = scmp.eq.s32.totalorder %s12, 3
      %p71 = por %p69, %p70
      %p72 = scmp.ne.s32.totalorder %s64, %s67
      %p73 = scmp.eq.s32.totalorder %s12, 0
      %p74 = por %p72, %p73
      %p75 = scmp.ne.s32.totalorder %s64, %s67
      %p76 = scmp.eq.s32.totalorder %s17, 3
      %p77 = por %p75, %p76
      %p78 = scmp.ne.s32.totalorder %s67, %s68
      %p79 = scmp.eq.s32.totalorder %s17, 0
      %p80 = por %p78, %p79
      %p81 = scmp.ne.s32.totalorder %s67, %s68
      %p82 = scmp.eq.s32.totalorder %s18, 3
      %p83 = por %p81, %p82
      %p85 = scmp.ne.s32.totalorder %s68, %s84
      %p86 = scmp.eq.s32.totalorder %s18, 0
      %p87 = por %p85, %p86
      %s88 = ssub.s32 %s12, %s19
      %p89 = scmp.eq.s32.totalorder %s88, 0
      %s91 = sadd.s32 %s90, 1
      %s92 = scalar_select %p89, %s90, %s91
      %p95 = pneg %p89
      %p96 = scmp.eq.s32.totalorder %s12, 3
      %p97 = por %p95, %p96
      %p98 = scmp.ne.s32.totalorder %s90, %s93
      %p99 = scmp.eq.s32.totalorder %s12, 0
      %p100 = por %p98, %p99
      %p101 = scmp.ne.s32.totalorder %s90, %s93
      %p102 = scmp.eq.s32.totalorder %s17, 3
      %p103 = por %p101, %p102
      %p104 = scmp.ne.s32.totalorder %s93, %s94
      %p105 = scmp.eq.s32.totalorder %s17, 0
      %p106 = por %p104, %p105
      %p107 = scmp.ne.s32.totalorder %s93, %s94
      %p108 = scmp.eq.s32.totalorder %s18, 3
      %p109 = por %p107, %p108
      %p111 = scmp.ne.s32.totalorder %s94, %s110
      %p112 = scmp.eq.s32.totalorder %s18, 0
      %p113 = por %p111, %p112
      %s114 = ssub.s32 %s12, %s19
      %p115 = scmp.eq.s32.totalorder %s114, 0
      %s117 = sadd.s32 %s116, 1
      %s118 = scalar_select %p115, %s116, %s117
      %p121 = pneg %p115
      %p122 = scmp.eq.s32.totalorder %s12, 3
      %p123 = por %p121, %p122
      %p124 = scmp.ne.s32.totalorder %s116, %s119
      %p125 = scmp.eq.s32.totalorder %s12, 0
      %p126 = por %p124, %p125
      %p127 = scmp.ne.s32.totalorder %s116, %s119
      %p128 = scmp.eq.s32.totalorder %s17, 3
      %p129 = por %p127, %p128
      %p130 = scmp.ne.s32.totalorder %s119, %s120
      %p131 = scmp.eq.s32.totalorder %s17, 0
      %p132 = por %p130, %p131
      %p133 = scmp.ne.s32.totalorder %s119, %s120
      %p134 = scmp.eq.s32.totalorder %s18, 3
      %p135 = por %p133, %p134
      %p137 = scmp.ne.s32.totalorder %s120, %s136
      %p138 = scmp.eq.s32.totalorder %s18, 0
      %p139 = por %p137, %p138
      %s141 = sadd.s32 %s140, 1
      %p144 = scmp.eq.s32.totalorder %s12, 3
      %p145 = scmp.ne.s32.totalorder %s140, %s142
      %p146 = scmp.eq.s32.totalorder %s12, 0
      %p147 = por %p145, %p146
      %p148 = scmp.ne.s32.totalorder %s140, %s142
      %p149 = scmp.eq.s32.totalorder %s17, 3
      %p150 = por %p148, %p149
      %p151 = scmp.ne.s32.totalorder %s142, %s143
      %p152 = scmp.eq.s32.totalorder %s17, 0
      %p153 = por %p151, %p152
      %p154 = scmp.ne.s32.totalorder %s142, %s143
      %p155 = scmp.eq.s32.totalorder %s18, 3
      %p156 = por %p154, %p155
      %p158 = scmp.ne.s32.totalorder %s143, %s157
      %p159 = scmp.eq.s32.totalorder %s18, 0
      %p160 = por %p158, %p159
      %p161 = scmp.le.s32.totalorder 1, %s12
      %p162 = scmp.lt.s32.totalorder %s12, 5
      %p163 = pnand %p161, %p162
      %p164 = pneg %p163
      // Predicated region
      $region9: #{_decoder_layer_jit.3} parent=5 // pred_check
        _
      $region10: #{_decoder_layer_jit.3} parent=5 // pred_check_branch
        %166 = sbr.rel (%p163) target = $region12
      $region11: #{_decoder_layer_jit.3} parent=5 // pred_region
        %s167 = ssub.s32 %s12, 1
        // Predicated region
        $region13: #{_decoder_layer_jit.3} parent=11 // pred_check
          %p168 = pneg %p33
        $region14: #{_decoder_layer_jit.3} parent=11 // pred_check_branch
          %170 = sbr.rel (%p168) target = $region16
        $region15: #{_decoder_layer_jit.3} parent=11 // pred_region
          _
        $region16: #{_decoder_layer_jit.3} parent=11 // pred_fallthru
          _
        // Predicated region
        $region17: #{_decoder_layer_jit.3} parent=11 // pred_check
          %p171 = pneg %p54
        $region18: #{_decoder_layer_jit.3} parent=11 // pred_check_branch
          %173 = sbr.rel (%p171) target = $region20
        $region19: #{_decoder_layer_jit.3} parent=11 // pred_region
          _
        $region20: #{_decoder_layer_jit.3} parent=11 // pred_fallthru
          _
      $region12: #{_decoder_layer_jit.3} parent=5 // pred_fallthru
        _
      %p174 = scmp.lt.s32.totalorder %s12, 4
      // Predicated region
      $region21: #{_decoder_layer_jit.3} parent=5 // pred_check
        %p175 = pneg %p174
      $region22: #{_decoder_layer_jit.3} parent=5 // pred_check_branch
        %177 = sbr.rel (%p175) target = $region24
      $region23: #{_decoder_layer_jit.3} parent=5 // pred_region
        // Predicated region
        $region25: #{_decoder_layer_jit.3} parent=23 // pred_check
          %p178 = pneg %p74
        $region26: #{_decoder_layer_jit.3} parent=23 // pred_check_branch
          %180 = sbr.rel (%p178) target = $region28
        $region27: #{_decoder_layer_jit.3} parent=23 // pred_region
          %p181 = scmp.lt.s32.totalorder %s12, 3
          %s182 = scalar_select %p181, %s12, 3
          %s183 = smul.addr %s182, 8
          %s184 = smul.addr %s183, 4
          %s185 = scalar_lea.vmem %s2, %s184
        $region28: #{_decoder_layer_jit.3} parent=23 // pred_fallthru
          _
        // Predicated region
        $region29: #{_decoder_layer_jit.3} parent=23 // pred_check
          %p186 = pneg %p100
        $region30: #{_decoder_layer_jit.3} parent=23 // pred_check_branch
          %188 = sbr.rel (%p186) target = $region32
        $region31: #{_decoder_layer_jit.3} parent=23 // pred_region
          %p189 = scmp.lt.s32.totalorder %s12, 3
          %s190 = scalar_select %p189, %s12, 3
          %s191 = smul.addr %s190, 8
          %s192 = smul.addr %s191, 4
          %s193 = scalar_lea.vmem %s3, %s192
        $region32: #{_decoder_layer_jit.3} parent=23 // pred_fallthru
          _
        // Predicated region
        $region33: #{_decoder_layer_jit.3} parent=23 // pred_check
          %p194 = pneg %p126
        $region34: #{_decoder_layer_jit.3} parent=23 // pred_check_branch
          %196 = sbr.rel (%p194) target = $region36
        $region35: #{_decoder_layer_jit.3} parent=23 // pred_region
          %p197 = scmp.lt.s32.totalorder %s12, 3
          %s198 = scalar_select %p197, %s12, 3
          %s199 = smul.addr %s198, 16
          %s200 = smul.addr %s199, 4
          %s201 = scalar_lea.vmem %s4, %s200
        $region36: #{_decoder_layer_jit.3} parent=23 // pred_fallthru
          _
      $region24: #{_decoder_layer_jit.3} parent=5 // pred_fallthru
        _
      %p202 = scmp.le.s32.totalorder 1, %s12
      %p203 = scmp.lt.s32.totalorder %s12, 5
      %p204 = pnand %p202, %p203
      %p205 = pneg %p204
      // Predicated region
      $region37: #{_decoder_layer_jit.3} parent=5 // pred_check
        _
      $region38: #{_decoder_layer_jit.3} parent=5 // pred_check_branch
        %207 = sbr.rel (%p204) target = $region40
      $region39: #{_decoder_layer_jit.3} parent=5 // pred_region
        %s208 = ssub.s32 %s12, 1
        %p209 = pneg %p33
        %p210 = pneg %p30
        %p211 = pneg %p54
        %p212 = pneg %p51
        %p213 = scmp.lt.s32.totalorder %s17, 3
        %s214 = scalar_select %p213, %s17, 3
        %s215 = smul.addr %s214, 8
        %s216 = smul.addr %s215, 4
        %s217 = scalar_lea.vmem %s2, %s216
        %p218 = pneg %p80
        %p219 = pneg %p77
        %p220 = scmp.lt.s32.totalorder %s17, 3
        %s221 = scalar_select %p220, %s17, 3
        %s222 = smul.addr %s221, 8
        %s223 = smul.addr %s222, 4
        %s224 = scalar_lea.vmem %s3, %s223
        %p225 = pneg %p106
        %p226 = pneg %p103
        %p227 = scmp.lt.s32.totalorder %s17, 3
        %s228 = scalar_select %p227, %s17, 3
        %s229 = smul.addr %s228, 16
        %s230 = smul.addr %s229, 4
        %s231 = scalar_lea.vmem %s4, %s230
        %p232 = pneg %p132
        %p233 = pneg %p129
        %p234 = pneg %p153
        %p235 = pneg %p150
        %p236 = scmp.lt.s32.totalorder %s17, 3
        %s237 = scalar_select %p236, %s17, 3
        %s238 = smul.addr %s237, 8
        %s239 = smul.addr %s238, 4
        %s240 = scalar_lea.vmem %s2, %s239
        %p241 = scmp.lt.s32.totalorder %s17, 3
        %s242 = scalar_select %p241, %s17, 3
        %s243 = smul.addr %s242, 8
        %s244 = smul.addr %s243, 4
        %s245 = scalar_lea.vmem %s3, %s244
        %p246 = scmp.lt.s32.totalorder %s17, 3
        %s247 = scalar_select %p246, %s17, 3
        %s248 = smul.addr %s247, 16
        %s249 = smul.addr %s248, 4
        %s250 = scalar_lea.vmem %s4, %s249
        %p252 = scmp.eq.s32.totalorder %s17, 0
        // Predicated region
        $region41: #{_decoder_layer_jit.3} parent=39 // pred_check
          %p253 = pneg %p252
        $region42: #{_decoder_layer_jit.3} parent=39 // pred_check_branch
          %255 = sbr.rel (%p253) target = $region44
        $region43: #{_decoder_layer_jit.3} parent=39 // pred_region
          %vm256 = vcmask 523264
          %257 = vst.msk [vmem:[#allocation3] sm:$0xff] %vm256, 0.0
          %v258 = vld [vmem:[%s0] sm:$0xff]
          %v259 = vld [vmem:[%s1] sm:$0xff]
          %v260 = vld [vmem:[%s1 + $0x8] sm:$0xff]
          %v261 = vld [vmem:[%s1 + $0x10] sm:$0xff]
          %v262 = vld [vmem:[%s1 + $0x18] sm:$0xff]
          %v263 = vld [vmem:[%s1 + $0x20] sm:$0xff]
          %v264 = vld [vmem:[%s1 + $0x28] sm:$0xff]
          %v265 = vld [vmem:[%s1 + $0x30] sm:$0xff]
          %v266 = vld [vmem:[%s1 + $0x38] sm:$0xff]
          %v268 = vsel %vm256, %v258, 0
          %270 = vmatprep.subr.mxu0 0.0
          %271 = vmatpush1.msra.mxu0 %v259
          %272 = vmatprep.subr.mxu0 0.0
          %273 = vmatpush1.msra.mxu0 %v260
          %274 = vmatprep.subr.mxu0 0.0
          %275 = vmatpush1.msra.mxu0 %v261
          %276 = vmatprep.subr.mxu0 0.0
          %277 = vmatpush1.msra.mxu0 %v262
          %278 = vmatprep.subr.mxu0 0.0
          %279 = vmatpush1.msra.mxu0 %v263
          %280 = vmatprep.subr.mxu0 0.0
          %281 = vmatpush1.msra.mxu0 %v264
          %282 = vmatprep.subr.mxu0 0.0
          %283 = vmatpush1.msra.mxu0 %v265
          %284 = vmatprep.subr.mxu0 0.0
          %285 = vmatpush1.msra.mxu0 %v266
          %286 = vmatprep.subr.mxu0 0.0
          %287 = vmatpush1.msra.mxu0 0.0
          %288 = vmatprep.subr.mxu0 0.0
          %289 = vmatpush1.msra.mxu0 0.0
          %290 = vmatprep.subr.mxu0 0.0
          %291 = vmatpush1.msra.mxu0 0.0
          %292 = vmatprep.subr.mxu0 0.0
          %293 = vmatpush1.msra.mxu0 0.0
          %294 = vmatprep.subr.mxu0 0.0
          %295 = vmatpush1.msra.mxu0 0.0
          %296 = vmatprep.subr.mxu0 0.0
          %297 = vmatpush1.msra.mxu0 0.0
          %298 = vmatprep.subr.mxu0 0.0
          %299 = vmatpush1.msra.mxu0 0.0
          %300 = vmatprep.subr.mxu0 0.0
          %301 = vmatpush1.msra.mxu0 0.0
          %302 = vmatprep.subr.mxu0 0.0
          %303 = vmatpush1.msra.mxu0 0.0
          %304 = vmatprep.subr.mxu0 0.0
          %305 = vmatpush1.msra.mxu0 0.0
          %306 = vmatprep.subr.mxu0 0.0
          %307 = vmatpush1.msra.mxu0 0.0
          %308 = vmatprep.subr.mxu0 0.0
          %309 = vmatpush1.msra.mxu0 0.0
          %310 = vmatprep.subr.mxu0 0.0
          %311 = vmatpush1.msra.mxu0 0.0
          %312 = vmatprep.subr.mxu0 0.0
          %313 = vmatpush1.msra.mxu0 0.0
          %314 = vmatprep.subr.mxu0 0.0
          %315 = vmatpush1.msra.mxu0 0.0
          %316 = vmatprep.subr.mxu0 0.0
          %317 = vmatpush1.msra.mxu0 0.0
          %318 = vmatprep.subr.mxu0 0.0
          %319 = vmatpush1.msra.mxu0 0.0
          %320 = vmatprep.subr.mxu0 0.0
          %321 = vmatpush1.msra.mxu0 0.0
          %322 = vmatprep.subr.mxu0 0.0
          %323 = vmatpush1.msra.mxu0 0.0
          %324 = vmatprep.subr.mxu0 0.0
          %325 = vmatpush1.msra.mxu0 0.0
          %326 = vmatprep.subr.mxu0 0.0
          %327 = vmatpush1.msra.mxu0 0.0
          %328 = vmatprep.subr.mxu0 0.0
          %329 = vmatpush1.msra.mxu0 0.0
          %330 = vmatprep.subr.mxu0 0.0
          %331 = vmatpush1.msra.mxu0 0.0
          %332 = vmatprep.subr.mxu0 0.0
          %333 = vmatpush1.msra.mxu0 0.0
          %334 = vmatprep.mubr.f32.mxu0 0.0
          %335 = vmatmul.mubr.f32.gmra.mrb[0].mxu0 %v268
          %v336 = vpop.f32.mrb[0].mxu0
          %v337 = vadd.f32 0.0, %v336
          %v338 = vpop.f32.mrb[0].mxu0
          %339 = vdwg.mxu0
          %vm340 = vcmask 31744
          %v341 = vsel %vm340, %v337, -inf
          %342 = vmax.xlane.f32.xlu0 %v341
          %v343 = vpop.xlane.xlu0 %342
          %v344 = vsub.f32 %v337, %v343
          %v345 = vmul.f32 %v344, 1.442695
          %v346 = vpow.pop %v345
          %v347 = vsel %vm340, %v346, 0.0
          %348 = vadd.xlane.f32.xlu0 %v347
          %v349 = vpop.xlane.xlu0 %348
          %v350 = vrcp.pop %v349
          %v351 = vmul.f32 %v346, %v350
          %v352 = vlaneseq
          %v353 = vand.u32 %v352, 127
          %v354 = vsel %vm340, %v351, -inf
          %355 = vmax.xlane.f32.xlu0 %v354
          %v356 = vpop.xlane.xlu0 %355
          %vm357 = vcmp.ge.f32.partialorder %v351, %v356
          %v358 = vsel %vm357, %v353, 4
          %v359 = vsel %vm340, %v358, 2147483647
          %v360 = vand.u32 %v359, 65535
          %v361 = vshra.s32 %v359, 16
          %v362 = vcvt.s32.f32 %v360
          %v363 = vcvt.s32.f32 %v361
          %364 = vmin.xlane.f32.xlu0 %v363
          %v365 = vpop.xlane.xlu0 %364
          %vm366 = vcmp.eq.f32.partialorder %v363, %v365
          %v367 = vsel %vm366, %v362, inf
          %368 = vmin.xlane.f32.xlu0 %v367
          %v369 = vpop.xlane.xlu0 %368
          %v370 = vcvt.f32.s32 %v369
          %v371 = vcvt.f32.s32 %v365
          %v372 = vshll.u32 %v371, 16
          %v373 = vadd.s32 %v372, %v370
          %vm374 = vcmp.eq.s32.totalorder %v353, %v373
          %v375 = vsel %vm374, 1, 0
          %v376 = vcvt.s32.f32 %v375
          %v377 = vmax.f32 %v376, 0.0
          %vm378 = vcmp.gt.f32.partialorder %v376, 0.0
          %v379 = vsel %vm378, -1.0, %v351
          %v380 = vsel %vm340, %v379, -inf
          %381 = vmax.xlane.f32.xlu0 %v380
          %v382 = vpop.xlane.xlu0 %381
          %vm383 = vcmp.ge.f32.partialorder %v379, %v382
          %v384 = vsel %vm383, %v353, 4
          %v385 = vsel %vm340, %v384, 2147483647
          %v386 = vand.u32 %v385, 65535
          %v387 = vshra.s32 %v385, 16
          %v388 = vcvt.s32.f32 %v386
          %v389 = vcvt.s32.f32 %v387
          %390 = vmin.xlane.f32.xlu0 %v389
          %v391 = vpop.xlane.xlu0 %390
          %vm392 = vcmp.eq.f32.partialorder %v389, %v391
          %v393 = vsel %vm392, %v388, inf
          %394 = vmin.xlane.f32.xlu0 %v393
          %v395 = vpop.xlane.xlu0 %394
          %v396 = vcvt.f32.s32 %v395
          %v397 = vcvt.f32.s32 %v391
          %v398 = vshll.u32 %v397, 16
          %v399 = vadd.s32 %v398, %v396
          %vm400 = vcmp.eq.s32.totalorder %v353, %v399
          %v401 = vsel %vm400, 1, 0
          %v402 = vcvt.s32.f32 %v401
          %v403 = vmax.f32 %v377, %v402
          %v404 = vmul.f32 %v403, %v351
          %v405 = vsel %vm340, %v404, 0.0
          %406 = vadd.xlane.f32.xlu0 %v405
          %v407 = vpop.xlane.xlu0 %406
          %v408 = vrcp.pop %v407
          %v409 = vmul.f32 %v404, %v408
          %410 = vst.msk [vmem:[#allocation2] sm:$0xff] %vm340, %v409
        $region44: #{_decoder_layer_jit.3} parent=39 // pred_fallthru
          _
        %v411 = vld [vmem:[%s0] sm:$0xff]
        %v412 = vpack.c.bf16 %v411, %v411
        %v413 = vld [vmem:[%s240] sm:$0xf]
        %v414 = vld [vmem:[%s240 + $0x4] sm:$0xf]
        %v415 = vld [vmem:[%s240 + $0x8] sm:$0xf]
        %v416 = vld [vmem:[%s240 + $0xc] sm:$0xf]
        %v417 = vld [vmem:[%s240 + $0x10] sm:$0xf]
        %v418 = vld [vmem:[%s240 + $0x14] sm:$0xf]
        %v419 = vld [vmem:[%s240 + $0x18] sm:$0xf]
        %v420 = vld [vmem:[%s240 + $0x1c] sm:$0xf]
        %v429 = vunpack.c.l.b16 %v413
        %v430 = vunpack.c.l.b16 %v414
        %v431 = vunpack.c.l.b16 %v415
        %v432 = vunpack.c.l.b16 %v416
        %v433 = vunpack.c.l.b16 %v417
        %v434 = vunpack.c.l.b16 %v418
        %v435 = vunpack.c.l.b16 %v419
        %v436 = vunpack.c.l.b16 %v420
        %v437 = vpack.c.b16 %v430, %v429
        %v438 = vpack.c.b16 %v432, %v431
        %v439 = vpack.c.b16 %v434, %v433
        %v440 = vpack.c.b16 %v436, %v435
        %vm445 = vcmask 523264
        %v447 = vsel %vm445, %v412, 0
        %449 = vmatprep.subr.bf16.mxu0 0
        %450 = vmatpush1.bf16.msra.mxu0 %v437
        %451 = vmatprep.subr.bf16.mxu0 0
        %452 = vmatpush1.bf16.msra.mxu0 %v438
        %453 = vmatprep.subr.bf16.mxu0 0
        %454 = vmatpush1.bf16.msra.mxu0 %v439
        %455 = vmatprep.subr.bf16.mxu0 0
        %456 = vmatpush1.bf16.msra.mxu0 %v440
        %457 = vmatprep.subr.bf16.mxu0 0
        %458 = vmatpush1.bf16.msra.mxu0 0
        %459 = vmatprep.subr.bf16.mxu0 0
        %460 = vmatpush1.bf16.msra.mxu0 0
        %461 = vmatprep.subr.bf16.mxu0 0
        %462 = vmatpush1.bf16.msra.mxu0 0
        %463 = vmatprep.subr.bf16.mxu0 0
        %464 = vmatpush1.bf16.msra.mxu0 0
        %465 = vmatprep.subr.bf16.mxu0 0
        %466 = vmatpush1.bf16.msra.mxu0 0
        %467 = vmatprep.subr.bf16.mxu0 0
        %468 = vmatpush1.bf16.msra.mxu0 0
        %469 = vmatprep.subr.bf16.mxu0 0
        %470 = vmatpush1.bf16.msra.mxu0 0
        %471 = vmatprep.subr.bf16.mxu0 0
        %472 = vmatpush1.bf16.msra.mxu0 0
        %473 = vmatprep.subr.bf16.mxu0 0
        %474 = vmatpush1.bf16.msra.mxu0 0
        %475 = vmatprep.subr.bf16.mxu0 0
        %476 = vmatpush1.bf16.msra.mxu0 0
        %477 = vmatprep.subr.bf16.mxu0 0
        %478 = vmatpush1.bf16.msra.mxu0 0
        %479 = vmatprep.subr.bf16.mxu0 0
        %480 = vmatpush1.bf16.msra.mxu0 0
        %481 = vmatprep.mubr.bf16.mxu0 0
        %482 = vmatmul.mubr.bf16.gmra.mrb[0].mxu0 %v447
        %v483 = vpop.f32.mrb[0].mxu0
        %v484 = vadd.f32 0.0, %v483
        %v485 = vpop.f32.mrb[0].mxu0
        %v486 = vpop.f32.mrb[0].mxu0
        %v487 = vpop.f32.mrb[0].mxu0
        %488 = vdwg.mxu0
        %v489 = vld [vmem:[%s245] sm:$0xf]
        %v490 = vld [vmem:[%s245 + $0x4] sm:$0xf]
        %v491 = vld [vmem:[%s245 + $0x8] sm:$0xf]
        %v492 = vld [vmem:[%s245 + $0xc] sm:$0xf]
        %v493 = vld [vmem:[%s245 + $0x10] sm:$0xf]
        %v494 = vld [vmem:[%s245 + $0x14] sm:$0xf]
        %v495 = vld [vmem:[%s245 + $0x18] sm:$0xf]
        %v496 = vld [vmem:[%s245 + $0x1c] sm:$0xf]
        %v505 = vunpack.c.l.b16 %v489
        %v506 = vunpack.c.l.b16 %v490
        %v507 = vunpack.c.l.b16 %v491
        %v508 = vunpack.c.l.b16 %v492
        %v509 = vunpack.c.l.b16 %v493
        %v510 = vunpack.c.l.b16 %v494
        %v511 = vunpack.c.l.b16 %v495
        %v512 = vunpack.c.l.b16 %v496
        %v513 = vpack.c.b16 %v506, %v505
        %v514 = vpack.c.b16 %v508, %v507
        %v515 = vpack.c.b16 %v510, %v509
        %v516 = vpack.c.b16 %v512, %v511
        %521 = vmatprep.subr.bf16.mxu0 0
        %522 = vmatpush1.bf16.msra.mxu0 %v513
        %523 = vmatprep.subr.bf16.mxu0 0
        %524 = vmatpush1.bf16.msra.mxu0 %v514
        %525 = vmatprep.subr.bf16.mxu0 0
        %526 = vmatpush1.bf16.msra.mxu0 %v515
        %527 = vmatprep.subr.bf16.mxu0 0
        %528 = vmatpush1.bf16.msra.mxu0 %v516
        %529 = vmatprep.subr.bf16.mxu0 0
        %530 = vmatpush1.bf16.msra.mxu0 0
        %531 = vmatprep.subr.bf16.mxu0 0
        %532 = vmatpush1.bf16.msra.mxu0 0
        %533 = vmatprep.subr.bf16.mxu0 0
        %534 = vmatpush1.bf16.msra.mxu0 0
        %535 = vmatprep.subr.bf16.mxu0 0
        %536 = vmatpush1.bf16.msra.mxu0 0
        %537 = vmatprep.subr.bf16.mxu0 0
        %538 = vmatpush1.bf16.msra.mxu0 0
        %539 = vmatprep.subr.bf16.mxu0 0
        %540 = vmatpush1.bf16.msra.mxu0 0
        %541 = vmatprep.subr.bf16.mxu0 0
        %542 = vmatpush1.bf16.msra.mxu0 0
        %543 = vmatprep.subr.bf16.mxu0 0
        %544 = vmatpush1.bf16.msra.mxu0 0
        %545 = vmatprep.subr.bf16.mxu0 0
        %546 = vmatpush1.bf16.msra.mxu0 0
        %547 = vmatprep.subr.bf16.mxu0 0
        %548 = vmatpush1.bf16.msra.mxu0 0
        %549 = vmatprep.subr.bf16.mxu0 0
        %550 = vmatpush1.bf16.msra.mxu0 0
        %551 = vmatprep.subr.bf16.mxu0 0
        %552 = vmatpush1.bf16.msra.mxu0 0
        %553 = vmatprep.mubr.bf16.mxu0 0
        %554 = vmatmul.mubr.bf16.gmra.mrb[0].mxu0 %v447
        %v555 = vpop.f32.mrb[0].mxu0
        %v556 = vadd.f32 0.0, %v555
        %v557 = vpop.f32.mrb[0].mxu0
        %v558 = vpop.f32.mrb[0].mxu0
        %v559 = vpop.f32.mrb[0].mxu0
        %560 = vdwg.mxu0
        %v561 = vxor.u32 %v484, 2147483648
        %v562 = vmul.f32 %v561, 1.442695
        %v563 = vpow.pop %v562
        %v564 = vadd.f32 %v563, 1.0
        %v565 = vrcp.pop %v564
        %v566 = vmul.f32 1.0, %v565
        %v567 = vmul.f32 %v484, %v566
        %v568 = vmul.f32 %v567, %v556
        %v569 = vpack.c.bf16 %v568, %v568
        %v570 = vld [vmem:[%s250] sm:$0xf]
        %v571 = vld [vmem:[%s250 + $0x4] sm:$0xf]
        %v572 = vld [vmem:[%s250 + $0x8] sm:$0xf]
        %v573 = vld [vmem:[%s250 + $0xc] sm:$0xf]
        %v574 = vld [vmem:[%s250 + $0x10] sm:$0xf]
        %v575 = vld [vmem:[%s250 + $0x14] sm:$0xf]
        %v576 = vld [vmem:[%s250 + $0x18] sm:$0xf]
        %v577 = vld [vmem:[%s250 + $0x1c] sm:$0xf]
        %v578 = vld [vmem:[%s250 + $0x20] sm:$0xf]
        %v579 = vld [vmem:[%s250 + $0x24] sm:$0xf]
        %v580 = vld [vmem:[%s250 + $0x28] sm:$0xf]
        %v581 = vld [vmem:[%s250 + $0x2c] sm:$0xf]
        %v582 = vld [vmem:[%s250 + $0x30] sm:$0xf]
        %v583 = vld [vmem:[%s250 + $0x34] sm:$0xf]
        %v584 = vld [vmem:[%s250 + $0x38] sm:$0xf]
        %v585 = vld [vmem:[%s250 + $0x3c] sm:$0xf]
        %v602 = vunpack.c.l.b16 %v570
        %v603 = vunpack.c.l.b16 %v571
        %v604 = vunpack.c.l.b16 %v572
        %v605 = vunpack.c.l.b16 %v573
        %v606 = vunpack.c.l.b16 %v574
        %v607 = vunpack.c.l.b16 %v575
        %v608 = vunpack.c.l.b16 %v576
        %v609 = vunpack.c.l.b16 %v577
        %v610 = vunpack.c.l.b16 %v578
        %v611 = vunpack.c.l.b16 %v579
        %v612 = vunpack.c.l.b16 %v580
        %v613 = vunpack.c.l.b16 %v581
        %v614 = vunpack.c.l.b16 %v582
        %v615 = vunpack.c.l.b16 %v583
        %v616 = vunpack.c.l.b16 %v584
        %v617 = vunpack.c.l.b16 %v585
        %v618 = vpack.c.b16 %v603, %v602
        %v619 = vpack.c.b16 %v605, %v604
        %v620 = vpack.c.b16 %v607, %v606
        %v621 = vpack.c.b16 %v609, %v608
        %v622 = vpack.c.b16 %v611, %v610
        %v623 = vpack.c.b16 %v613, %v612
        %v624 = vpack.c.b16 %v615, %v614
        %v625 = vpack.c.b16 %v617, %v616
        %634 = vmatprep.subr.bf16.mxu0 0
        %635 = vmatpush1.bf16.msra.mxu0 %v618
        %636 = vmatprep.subr.bf16.mxu0 0
        %637 = vmatpush1.bf16.msra.mxu0 %v619
        %638 = vmatprep.subr.bf16.mxu0 0
        %639 = vmatpush1.bf16.msra.mxu0 %v620
        %640 = vmatprep.subr.bf16.mxu0 0
        %641 = vmatpush1.bf16.msra.mxu0 %v621
        %642 = vmatprep.subr.bf16.mxu0 0
        %643 = vmatpush1.bf16.msra.mxu0 %v622
        %644 = vmatprep.subr.bf16.mxu0 0
        %645 = vmatpush1.bf16.msra.mxu0 %v623
        %646 = vmatprep.subr.bf16.mxu0 0
        %647 = vmatpush1.bf16.msra.mxu0 %v624
        %648 = vmatprep.subr.bf16.mxu0 0
        %649 = vmatpush1.bf16.msra.mxu0 %v625
        %650 = vmatprep.subr.bf16.mxu0 0
        %651 = vmatpush1.bf16.msra.mxu0 0
        %652 = vmatprep.subr.bf16.mxu0 0
        %653 = vmatpush1.bf16.msra.mxu0 0
        %654 = vmatprep.subr.bf16.mxu0 0
        %655 = vmatpush1.bf16.msra.mxu0 0
        %656 = vmatprep.subr.bf16.mxu0 0
        %657 = vmatpush1.bf16.msra.mxu0 0
        %658 = vmatprep.subr.bf16.mxu0 0
        %659 = vmatpush1.bf16.msra.mxu0 0
        %660 = vmatprep.subr.bf16.mxu0 0
        %661 = vmatpush1.bf16.msra.mxu0 0
        %662 = vmatprep.subr.bf16.mxu0 0
        %663 = vmatpush1.bf16.msra.mxu0 0
        %664 = vmatprep.subr.bf16.mxu0 0
        %665 = vmatpush1.bf16.msra.mxu0 0
        %666 = vmatprep.mubr.bf16.mxu0 0
        %667 = vmatmul.mubr.bf16.gmra.mrb[0].mxu0 %v569
        %v668 = vpop.f32.mrb[0].mxu0
        %v669 = vadd.f32 0.0, %v668
        %v670 = vpop.f32.mrb[0].mxu0
        %v671 = vpop.f32.mrb[0].mxu0
        %v672 = vpop.f32.mrb[0].mxu0
        %673 = vdwg.mxu0
        %v674 = vld [vmem:[#allocation2] sm:$0xff]
        %v675 = vlaneseq
        %v676 = vand.u32 %v675, 127
        %v677 = vstv %s17
        %vm678 = vcmp.eq.s32.totalorder %v676, %v677
        %v679 = vsel %vm678, %v674, 0.0
        %vm680 = vcmask 31744
        %v681 = vsel %vm680, %v679, 0.0
        %682 = vadd.xlane.f32.xlu0 %v681
        %v683 = vpop.xlane.xlu0 %682
        %v684 = vld [vmem:[#allocation3] sm:$0xff]
        %v685 = vmul.f32 %v683, %v669
        %v686 = vadd.f32 %v684, %v685
        %687 = vst.msk [vmem:[#allocation3] sm:$0xff] %vm445, %v686
        // Predicated region
        $region45: #{_decoder_layer_jit.3} parent=39 // pred_check
          %p688 = pneg %p150
        $region46: #{_decoder_layer_jit.3} parent=39 // pred_check_branch
          %690 = sbr.rel (%p688) target = $region48
        $region47: #{_decoder_layer_jit.3} parent=39 // pred_region
          %s692 = ssub.s32 128, 128
          %693 = vsyncadd [#allocation4], %s692
          %s695 = sshll.u32 [#allocation3], 4
          %s696 = int_to_ptr.vmem [resolvable:$true] %s695
          %698 = dma.vmem_to_hbm [thread:$0]  %s696, 128, %s5, [#allocation4]
        $region48: #{_decoder_layer_jit.3} parent=39 // pred_fallthru
          _
        // Predicated region
        $region49: #{_decoder_layer_jit.3} parent=39 // pred_check
          %p699 = pneg %p150
        $region50: #{_decoder_layer_jit.3} parent=39 // pred_check_branch
          %701 = sbr.rel (%p699) target = $region52
        $region51: #{_decoder_layer_jit.3} parent=39 // pred_region
          %702 = dma.done [#allocation4], 128
        $region52: #{_decoder_layer_jit.3} parent=39 // pred_fallthru
          _
      $region40: #{_decoder_layer_jit.3} parent=5 // pred_fallthru
        _
      %p703 = scmp.le.s32.totalorder 2, %s12
      // Predicated region
      $region53: #{_decoder_layer_jit.3} parent=5 // pred_check
        %p704 = pneg %p703
      $region54: #{_decoder_layer_jit.3} parent=5 // pred_check_branch
        %706 = sbr.rel (%p704) target = $region56
      $region55: #{_decoder_layer_jit.3} parent=5 // pred_region
        %s707 = ssub.s32 %s12, 2
      $region56: #{_decoder_layer_jit.3} parent=5 // pred_fallthru
        _
    $region6: #{_decoder_layer_jit.3} parent=1 // loop_footer
      %s16 = sadd.s32 1, %s12
    $region7: #{_decoder_layer_jit.3} parent=1 // loop_footer_branch
      %11 = sbr.rel target = $region3
    $region8: #{_decoder_layer_jit.3} parent=1 // loop_exit
      _
    %708 = vsyncpa [#allocation4], 1
    %s709 = scalar_lea.sflag [#allocation4], 1
    %710 = vsyncpa %s709, 1

// kernel: _decoder_layer_jit.2
$region0: #{_decoder_layer_jit.2}
  #allocation0 [shape = 'u32[]', space=smem, size = 0x4, offset = 0x4, fixed_abs, tag = 'smem constant byte address 0x4 - core index']
  #allocation1 [shape = 'u32[144,128]{1,0:T(1,128)}', space=vmem, size = 0x12000, scoped, tag = 'internal scratch']
  %s0 = inlined_call_operand.vmem [shape: f32[8,64], index: 0, kind: input, shape index: {}]
  %s1 = inlined_call_operand.vmem [shape: f32[8,64], index: 1, kind: input, shape index: {}]
  %s2 = inlined_call_operand.vmem [shape: f32[1,64], index: 2, kind: input, shape index: {}]
  %s3 = inlined_call_operand.vmem [shape: f32[1,64], index: 3, kind: input, shape index: {}]
  %s4 = inlined_call_operand.vmem [shape: bf16[4,64,16], index: 4, kind: input, shape index: {}]
  %s5 = inlined_call_operand.vmem [shape: bf16[2,64,16], index: 5, kind: input, shape index: {}]
  %s6 = inlined_call_operand.vmem [shape: bf16[2,64,16], index: 6, kind: input, shape index: {}]
  %s7 = inlined_call_operand.vmem [shape: bf16[4,16,64], index: 7, kind: input, shape index: {}]
  %s8 = inlined_call_operand.vmem [shape: f32[8,16], index: 8, kind: input, shape index: {}]
  %s9 = inlined_call_operand.vmem [shape: f32[8,16], index: 9, kind: input, shape index: {}]
  %s10 = inlined_call_operand.vmem [shape: f32[16,16], index: 10, kind: input, shape index: {}]
  %s11 = inlined_call_operand.vmem [shape: f32[8,64], index: 11, kind: output, shape index: {0}]
  %s12 = inlined_call_operand.hbm [shape: f32[8,64], index: 12, kind: output, shape index: {1}]
  %13 = xla_tuple %s11, %s12
  %s14 = sld [smem:[#allocation0]]
  $region62: #{_decoder_layer_jit.2} parent=0
    _
  %s16 = ssub.s32 1, %s14
  %s17 = scalar_select 0, %s16, %s14
  $region1: #{_decoder_layer_jit.2} parent=0
    #allocation2 [shape = 'u8[4096]{0}', space=vmem, size = 0x1000, scoped, tag = 'output window, operand 1, single buffered']
    #allocation3 [shape = 's32[1]{0}', space=sflag, size = 0x4, scoped, tag = 'scoped memory for _decoder_layer_jit.2']
    %18 = vsyncpa [#allocation3], 0
    // Predicated region
    $region2: #{_decoder_layer_jit.2} parent=1 // pred_check
      _
    $region3: #{_decoder_layer_jit.2} parent=1 // pred_check_branch
      %20 = sbr.rel (0) target = $region5
    $region4: #{_decoder_layer_jit.2} parent=1 // pred_region
      _
    $region5: #{_decoder_layer_jit.2} parent=1 // pred_fallthru
      _
    // Predicated region
    $region6: #{_decoder_layer_jit.2} parent=1 // pred_check
      _
    $region7: #{_decoder_layer_jit.2} parent=1 // pred_check_branch
      %22 = sbr.rel (0) target = $region9
    $region8: #{_decoder_layer_jit.2} parent=1 // pred_region
      _
    $region9: #{_decoder_layer_jit.2} parent=1 // pred_fallthru
      _
    // Predicated region
    $region10: #{_decoder_layer_jit.2} parent=1 // pred_check
      _
    $region11: #{_decoder_layer_jit.2} parent=1 // pred_check_branch
      %24 = sbr.rel (0) target = $region13
    $region12: #{_decoder_layer_jit.2} parent=1 // pred_region
      _
    $region13: #{_decoder_layer_jit.2} parent=1 // pred_fallthru
      _
    // Predicated region
    $region14: #{_decoder_layer_jit.2} parent=1 // pred_check
      _
    $region15: #{_decoder_layer_jit.2} parent=1 // pred_check_branch
      %26 = sbr.rel (0) target = $region17
    $region16: #{_decoder_layer_jit.2} parent=1 // pred_region
      _
    $region17: #{_decoder_layer_jit.2} parent=1 // pred_fallthru
      _
    // Predicated region
    $region18: #{_decoder_layer_jit.2} parent=1 // pred_check
      _
    $region19: #{_decoder_layer_jit.2} parent=1 // pred_check_branch
      %28 = sbr.rel (0) target = $region21
    $region20: #{_decoder_layer_jit.2} parent=1 // pred_region
      _
    $region21: #{_decoder_layer_jit.2} parent=1 // pred_fallthru
      _
    // Predicated region
    $region22: #{_decoder_layer_jit.2} parent=1 // pred_check
      _
    $region23: #{_decoder_layer_jit.2} parent=1 // pred_check_branch
      %30 = sbr.rel (0) target = $region25
    $region24: #{_decoder_layer_jit.2} parent=1 // pred_region
      _
    $region25: #{_decoder_layer_jit.2} parent=1 // pred_fallthru
      _
    // Predicated region
    $region26: #{_decoder_layer_jit.2} parent=1 // pred_check
      _
    $region27: #{_decoder_layer_jit.2} parent=1 // pred_check_branch
      %32 = sbr.rel (0) target = $region29
    $region28: #{_decoder_layer_jit.2} parent=1 // pred_region
      _
    $region29: #{_decoder_layer_jit.2} parent=1 // pred_fallthru
      _
    // Predicated region
    $region30: #{_decoder_layer_jit.2} parent=1 // pred_check
      _
    $region31: #{_decoder_layer_jit.2} parent=1 // pred_check_branch
      %34 = sbr.rel (0) target = $region33
    $region32: #{_decoder_layer_jit.2} parent=1 // pred_region
      _
    $region33: #{_decoder_layer_jit.2} parent=1 // pred_fallthru
      _
    // Predicated region
    $region34: #{_decoder_layer_jit.2} parent=1 // pred_check
      _
    $region35: #{_decoder_layer_jit.2} parent=1 // pred_check_branch
      %36 = sbr.rel (0) target = $region37
    $region36: #{_decoder_layer_jit.2} parent=1 // pred_region
      _
    $region37: #{_decoder_layer_jit.2} parent=1 // pred_fallthru
      _
    // Predicated region
    $region38: #{_decoder_layer_jit.2} parent=1 // pred_check
      _
    $region39: #{_decoder_layer_jit.2} parent=1 // pred_check_branch
      %38 = sbr.rel (0) target = $region41
    $region40: #{_decoder_layer_jit.2} parent=1 // pred_region
      _
    $region41: #{_decoder_layer_jit.2} parent=1 // pred_fallthru
      _
    // Predicated region
    $region42: #{_decoder_layer_jit.2} parent=1 // pred_check
      _
    $region43: #{_decoder_layer_jit.2} parent=1 // pred_check_branch
      %40 = sbr.rel (0) target = $region45
    $region44: #{_decoder_layer_jit.2} parent=1 // pred_region
      _
    $region45: #{_decoder_layer_jit.2} parent=1 // pred_fallthru
      _
    %v42 = vld [vmem:[%s0] sm:$0xff]
    %v43 = vld [vmem:[%s1] sm:$0xff]
    %v44 = vadd.f32 %v42, %v43
    %v45 = vmul.f32 %v44, %v44
    %vm46 = vcmask 523264
    %v47 = vsel %vm46, %v45, 0.0
    %48 = vadd.xlane.f32.xlu0 %v47
    %v49 = vpop.xlane.xlu0 %48
    %v50 = vrcp.pop 64.0
    %v51 = vmul.f32 %v49, %v50
    %v52 = vadd.f32 %v51, 1e-06
    %v53 = vrsqrt.pop %v52
    %v54 = vmul.f32 %v44, %v53
    %v55 = vld [vmem:[%s2] sm:$0x1]
    %v57 = vlaneseq
    %v58 = vshrl.u32 %v57, 7
    %v59 = vsub.s32 0, %v58
    %v60 = vrot.slane %v55, %v59
    %v62 = vmul.f32 %v54, %v60
    %v63 = vpack.c.bf16 %v62, %v62
    %v64 = vld [vmem:[%s8] sm:$0xff]
    %v65 = vld [vmem:[%s9] sm:$0xff]
    %v66 = vld [vmem:[%s10] sm:$0xff]
    %v67 = vld [vmem:[%s10 + $0x8] sm:$0xff]
    %v68 = vlaneseq
    %v69 = vshrl.u32 %v68, 7
    %v70 = vlaneseq
    %v71 = vand.u32 %v70, 127
    %vm72 = vcmp.le.s32.totalorder %v71, %v69
    %v73 = vld [vmem:[%s5] sm:$0xf]
    %v74 = vld [vmem:[%s5 + $0x4] sm:$0xf]
    %v75 = vld [vmem:[%s5 + $0x8] sm:$0xf]
    %v76 = vld [vmem:[%s5 + $0xc] sm:$0xf]
    %v77 = vld [vmem:[%s5 + $0x10] sm:$0xf]
    %v78 = vld [vmem:[%s5 + $0x14] sm:$0xf]
    %v79 = vld [vmem:[%s5 + $0x18] sm:$0xf]
    %v80 = vld [vmem:[%s5 + $0x1c] sm:$0xf]
    %v89 = vunpack.c.l.b16 %v73
    %v90 = vunpack.c.l.b16 %v74
    %v91 = vunpack.c.l.b16 %v75
    %v92 = vunpack.c.l.b16 %v76
    %v93 = vunpack.c.l.b16 %v77
    %v94 = vunpack.c.l.b16 %v78
    %v95 = vunpack.c.l.b16 %v79
    %v96 = vunpack.c.l.b16 %v80
    %v97 = vpack.c.b16 %v90, %v89
    %v98 = vpack.c.b16 %v92, %v91
    %v99 = vpack.c.b16 %v94, %v93
    %v100 = vpack.c.b16 %v96, %v95
    %v106 = vsel %vm46, %v63, 0
    %108 = vmatprep.subr.bf16.mxu0 0
    %109 = vmatpush1.bf16.msra.mxu0 %v97
    %110 = vmatprep.subr.bf16.mxu0 0
    %111 = vmatpush1.bf16.msra.mxu0 %v98
    %112 = vmatprep.subr.bf16.mxu0 0
    %113 = vmatpush1.bf16.msra.mxu0 %v99
    %114 = vmatprep.subr.bf16.mxu0 0
    %115 = vmatpush1.bf16.msra.mxu0 %v100
    %116 = vmatprep.subr.bf16.mxu0 0
    %117 = vmatpush1.bf16.msra.mxu0 0
    %118 = vmatprep.subr.bf16.mxu0 0
    %119 = vmatpush1.bf16.msra.mxu0 0
    %120 = vmatprep.subr.bf16.mxu0 0
    %121 = vmatpush1.bf16.msra.mxu0 0
    %122 = vmatprep.subr.bf16.mxu0 0
    %123 = vmatpush1.bf16.msra.mxu0 0
    %124 = vmatprep.subr.bf16.mxu0 0
    %125 = vmatpush1.bf16.msra.mxu0 0
    %126 = vmatprep.subr.bf16.mxu0 0
    %127 = vmatpush1.bf16.msra.mxu0 0
    %128 = vmatprep.subr.bf16.mxu0 0
    %129 = vmatpush1.bf16.msra.mxu0 0
    %130 = vmatprep.subr.bf16.mxu0 0
    %131 = vmatpush1.bf16.msra.mxu0 0
    %132 = vmatprep.subr.bf16.mxu0 0
    %133 = vmatpush1.bf16.msra.mxu0 0
    %134 = vmatprep.subr.bf16.mxu0 0
    %135 = vmatpush1.bf16.msra.mxu0 0
    %136 = vmatprep.subr.bf16.mxu0 0
    %137 = vmatpush1.bf16.msra.mxu0 0
    %138 = vmatprep.subr.bf16.mxu0 0
    %139 = vmatpush1.bf16.msra.mxu0 0
    %140 = vmatprep.mubr.bf16.mxu0 0
    %141 = vmatmul.mubr.bf16.gmra.mrb[0].mxu0 %v106
    %v142 = vpop.f32.mrb[0].mxu0
    %v143 = vadd.f32 0.0, %v142
    %v144 = vpop.f32.mrb[0].mxu0
    %v145 = vpop.f32.mrb[0].mxu0
    %v146 = vpop.f32.mrb[0].mxu0
    %147 = vdwg.mxu0
    %v148 = vld [vmem:[%s6] sm:$0xf]
    %v149 = vld [vmem:[%s6 + $0x4] sm:$0xf]
    %v150 = vld [vmem:[%s6 + $0x8] sm:$0xf]
    %v151 = vld [vmem:[%s6 + $0xc] sm:$0xf]
    %v152 = vld [vmem:[%s6 + $0x10] sm:$0xf]
    %v153 = vld [vmem:[%s6 + $0x14] sm:$0xf]
    %v154 = vld [vmem:[%s6 + $0x18] sm:$0xf]
    %v155 = vld [vmem:[%s6 + $0x1c] sm:$0xf]
    %v164 = vunpack.c.l.b16 %v148
    %v165 = vunpack.c.l.b16 %v149
    %v166 = vunpack.c.l.b16 %v150
    %v167 = vunpack.c.l.b16 %v151
    %v168 = vunpack.c.l.b16 %v152
    %v169 = vunpack.c.l.b16 %v153
    %v170 = vunpack.c.l.b16 %v154
    %v171 = vunpack.c.l.b16 %v155
    %v172 = vpack.c.b16 %v165, %v164
    %v173 = vpack.c.b16 %v167, %v166
    %v174 = vpack.c.b16 %v169, %v168
    %v175 = vpack.c.b16 %v171, %v170
    %180 = vmatprep.subr.bf16.mxu0 0
    %181 = vmatpush1.bf16.msra.mxu0 %v172
    %182 = vmatprep.subr.bf16.mxu0 0
    %183 = vmatpush1.bf16.msra.mxu0 %v173
    %184 = vmatprep.subr.bf16.mxu0 0
    %185 = vmatpush1.bf16.msra.mxu0 %v174
    %186 = vmatprep.subr.bf16.mxu0 0
    %187 = vmatpush1.bf16.msra.mxu0 %v175
    %188 = vmatprep.subr.bf16.mxu0 0
    %189 = vmatpush1.bf16.msra.mxu0 0
    %190 = vmatprep.subr.bf16.mxu0 0
    %191 = vmatpush1.bf16.msra.mxu0 0
    %192 = vmatprep.subr.bf16.mxu0 0
    %193 = vmatpush1.bf16.msra.mxu0 0
    %194 = vmatprep.subr.bf16.mxu0 0
    %195 = vmatpush1.bf16.msra.mxu0 0
    %196 = vmatprep.subr.bf16.mxu0 0
    %197 = vmatpush1.bf16.msra.mxu0 0
    %198 = vmatprep.subr.bf16.mxu0 0
    %199 = vmatpush1.bf16.msra.mxu0 0
    %200 = vmatprep.subr.bf16.mxu0 0
    %201 = vmatpush1.bf16.msra.mxu0 0
    %202 = vmatprep.subr.bf16.mxu0 0
    %203 = vmatpush1.bf16.msra.mxu0 0
    %204 = vmatprep.subr.bf16.mxu0 0
    %205 = vmatpush1.bf16.msra.mxu0 0
    %206 = vmatprep.subr.bf16.mxu0 0
    %207 = vmatpush1.bf16.msra.mxu0 0
    %208 = vmatprep.subr.bf16.mxu0 0
    %209 = vmatpush1.bf16.msra.mxu0 0
    %210 = vmatprep.subr.bf16.mxu0 0
    %211 = vmatpush1.bf16.msra.mxu0 0
    %212 = vmatprep.mubr.bf16.mxu0 0
    %213 = vmatmul.mubr.bf16.gmra.mrb[0].mxu0 %v106
    %v214 = vpop.f32.mrb[0].mxu0
    %v215 = vadd.f32 0.0, %v214
    %v216 = vpop.f32.mrb[0].mxu0
    %v217 = vpop.f32.mrb[0].mxu0
    %v218 = vpop.f32.mrb[0].mxu0
    %219 = vdwg.mxu0
    %v220 = vmul.f32 %v143, %v64
    %vm221 = vcmask 130048
    %v223 = vsel %vm221, %v143, 0
    %225 = vmatprep.subr.mxu0 0.0
    %226 = vmatpush1.msra.mxu0 %v66
    %227 = vmatprep.subr.mxu0 0.0
    %228 = vmatpush1.msra.mxu0 %v67
    %229 = vmatprep.subr.mxu0 0.0
    %230 = vmatpush1.msra.mxu0 0.0
    %231 = vmatprep.subr.mxu0 0.0
    %232 = vmatpush1.msra.mxu0 0.0
    %233 = vmatprep.subr.mxu0 0.0
    %234 = vmatpush1.msra.mxu0 0.0
    %235 = vmatprep.subr.mxu0 0.0
    %236 = vmatpush1.msra.mxu0 0.0
    %237 = vmatprep.subr.mxu0 0.0
    %238 = vmatpush1.msra.mxu0 0.0
    %239 = vmatprep.subr.mxu0 0.0
    %240 = vmatpush1.msra.mxu0 0.0
    %241 = vmatprep.subr.mxu0 0.0
    %242 = vmatpush1.msra.mxu0 0.0
    %243 = vmatprep.subr.mxu0 0.0
    %244 = vmatpush1.msra.mxu0 0.0
    %245 = vmatprep.subr.mxu0 0.0
    %246 = vmatpush1.msra.mxu0 0.0
    %247 = vmatprep.subr.mxu0 0.0
    %248 = vmatpush1.msra.mxu0 0.0
    %249 = vmatprep.subr.mxu0 0.0
    %250 = vmatpush1.msra.mxu0 0.0
    %251 = vmatprep.subr.mxu0 0.0
    %252 = vmatpush1.msra.mxu0 0.0
    %253 = vmatprep.subr.mxu0 0.0
    %254 = vmatpush1.msra.mxu0 0.0
    %255 = vmatprep.subr.mxu0 0.0
    %256 = vmatpush1.msra.mxu0 0.0
    %257 = vmatprep.subr.mxu0 0.0
    %258 = vmatpush1.msra.mxu0 0.0
    %259 = vmatprep.subr.mxu0 0.0
    %260 = vmatpush1.msra.mxu0 0.0
    %261 = vmatprep.subr.mxu0 0.0
    %262 = vmatpush1.msra.mxu0 0.0
    %263 = vmatprep.subr.mxu0 0.0
    %264 = vmatpush1.msra.mxu0 0.0
    %265 = vmatprep.subr.mxu0 0.0
    %266 = vmatpush1.msra.mxu0 0.0
    %267 = vmatprep.subr.mxu0 0.0
    %268 = vmatpush1.msra.mxu0 0.0
    %269 = vmatprep.subr.mxu0 0.0
    %270 = vmatpush1.msra.mxu0 0.0
    %271 = vmatprep.subr.mxu0 0.0
    %272 = vmatpush1.msra.mxu0 0.0
    %273 = vmatprep.subr.mxu0 0.0
    %274 = vmatpush1.msra.mxu0 0.0
    %275 = vmatprep.subr.mxu0 0.0
    %276 = vmatpush1.msra.mxu0 0.0
    %277 = vmatprep.subr.mxu0 0.0
    %278 = vmatpush1.msra.mxu0 0.0
    %279 = vmatprep.subr.mxu0 0.0
    %280 = vmatpush1.msra.mxu0 0.0
    %281 = vmatprep.subr.mxu0 0.0
    %282 = vmatpush1.msra.mxu0 0.0
    %283 = vmatprep.subr.mxu0 0.0
    %284 = vmatpush1.msra.mxu0 0.0
    %285 = vmatprep.subr.mxu0 0.0
    %286 = vmatpush1.msra.mxu0 0.0
    %287 = vmatprep.subr.mxu0 0.0
    %288 = vmatpush1.msra.mxu0 0.0
    %289 = vmatprep.mubr.f32.mxu0 0.0
    %290 = vmatmul.mubr.f32.gmra.mrb[0].mxu0 %v223
    %v291 = vpop.f32.mrb[0].mxu0
    %v292 = vadd.f32 0.0, %v291
    %v293 = vpop.f32.mrb[0].mxu0
    %294 = vdwg.mxu0
    %v295 = vmul.f32 %v292, %v65
    %v296 = vadd.f32 %v220, %v295
    %s297 = scalar_lea.vmem %s5, 32
    %v298 = vld [vmem:[%s297] sm:$0xf]
    %v299 = vld [vmem:[%s297 + $0x4] sm:$0xf]
    %v300 = vld [vmem:[%s297 + $0x8] sm:$0xf]
    %v301 = vld [vmem:[%s297 + $0xc] sm:$0xf]
    %v302 = vld [vmem:[%s297 + $0x10] sm:$0xf]
    %v303 = vld [vmem:[%s297 + $0x14] sm:$0xf]
    %v304 = vld [vmem:[%s297 + $0x18] sm:$0xf]
    %v305 = vld [vmem:[%s297 + $0x1c] sm:$0xf]
    %v314 = vunpack.c.l.b16 %v298
    %v315 = vunpack.c.l.b16 %v299
    %v316 = vunpack.c.l.b16 %v300
    %v317 = vunpack.c.l.b16 %v301
    %v318 = vunpack.c.l.b16 %v302
    %v319 = vunpack.c.l.b16 %v303
    %v320 = vunpack.c.l.b16 %v304
    %v321 = vunpack.c.l.b16 %v305
    %v322 = vpack.c.b16 %v315, %v314
    %v323 = vpack.c.b16 %v317, %v316
    %v324 = vpack.c.b16 %v319, %v318
    %v325 = vpack.c.b16 %v321, %v320
    %330 = vmatprep.subr.bf16.mxu0 0
    %331 = vmatpush1.bf16.msra.mxu0 %v322
    %332 = vmatprep.subr.bf16.mxu0 0
    %333 = vmatpush1.bf16.msra.mxu0 %v323
    %334 = vmatprep.subr.bf16.mxu0 0
    %335 = vmatpush1.bf16.msra.mxu0 %v324
    %336 = vmatprep.subr.bf16.mxu0 0
    %337 = vmatpush1.bf16.msra.mxu0 %v325
    %338 = vmatprep.subr.bf16.mxu0 0
    %339 = vmatpush1.bf16.msra.mxu0 0
    %340 = vmatprep.subr.bf16.mxu0 0
    %341 = vmatpush1.bf16.msra.mxu0 0
    %342 = vmatprep.subr.bf16.mxu0 0
    %343 = vmatpush1.bf16.msra.mxu0 0
    %344 = vmatprep.subr.bf16.mxu0 0
    %345 = vmatpush1.bf16.msra.mxu0 0
    %346 = vmatprep.subr.bf16.mxu0 0
    %347 = vmatpush1.bf16.msra.mxu0 0
    %348 = vmatprep.subr.bf16.mxu0 0
    %349 = vmatpush1.bf16.msra.mxu0 0
    %350 = vmatprep.subr.bf16.mxu0 0
    %351 = vmatpush1.bf16.msra.mxu0 0
    %352 = vmatprep.subr.bf16.mxu0 0
    %353 = vmatpush1.bf16.msra.mxu0 0
    %354 = vmatprep.subr.bf16.mxu0 0
    %355 = vmatpush1.bf16.msra.mxu0 0
    %356 = vmatprep.subr.bf16.mxu0 0
    %357 = vmatpush1.bf16.msra.mxu0 0
    %358 = vmatprep.subr.bf16.mxu0 0
    %359 = vmatpush1.bf16.msra.mxu0 0
    %360 = vmatprep.subr.bf16.mxu0 0
    %361 = vmatpush1.bf16.msra.mxu0 0
    %362 = vmatprep.mubr.bf16.mxu0 0
    %363 = vmatmul.mubr.bf16.gmra.mrb[0].mxu0 %v106
    %v364 = vpop.f32.mrb[0].mxu0
    %v365 = vadd.f32 0.0, %v364
    %v366 = vpop.f32.mrb[0].mxu0
    %v367 = vpop.f32.mrb[0].mxu0
    %v368 = vpop.f32.mrb[0].mxu0
    %369 = vdwg.mxu0
    %s370 = scalar_lea.vmem %s6, 32
    %v371 = vld [vmem:[%s370] sm:$0xf]
    %v372 = vld [vmem:[%s370 + $0x4] sm:$0xf]
    %v373 = vld [vmem:[%s370 + $0x8] sm:$0xf]
    %v374 = vld [vmem:[%s370 + $0xc] sm:$0xf]
    %v375 = vld [vmem:[%s370 + $0x10] sm:$0xf]
    %v376 = vld [vmem:[%s370 + $0x14] sm:$0xf]
    %v377 = vld [vmem:[%s370 + $0x18] sm:$0xf]
    %v378 = vld [vmem:[%s370 + $0x1c] sm:$0xf]
    %v387 = vunpack.c.l.b16 %v371
    %v388 = vunpack.c.l.b16 %v372
    %v389 = vunpack.c.l.b16 %v373
    %v390 = vunpack.c.l.b16 %v374
    %v391 = vunpack.c.l.b16 %v375
    %v392 = vunpack.c.l.b16 %v376
    %v393 = vunpack.c.l.b16 %v377
    %v394 = vunpack.c.l.b16 %v378
    %v395 = vpack.c.b16 %v388, %v387
    %v396 = vpack.c.b16 %v390, %v389
    %v397 = vpack.c.b16 %v392, %v391
    %v398 = vpack.c.b16 %v394, %v393
    %403 = vmatprep.subr.bf16.mxu0 0
    %404 = vmatpush1.bf16.msra.mxu0 %v395
    %405 = vmatprep.subr.bf16.mxu0 0
    %406 = vmatpush1.bf16.msra.mxu0 %v396
    %407 = vmatprep.subr.bf16.mxu0 0
    %408 = vmatpush1.bf16.msra.mxu0 %v397
    %409 = vmatprep.subr.bf16.mxu0 0
    %410 = vmatpush1.bf16.msra.mxu0 %v398
    %411 = vmatprep.subr.bf16.mxu0 0
    %412 = vmatpush1.bf16.msra.mxu0 0
    %413 = vmatprep.subr.bf16.mxu0 0
    %414 = vmatpush1.bf16.msra.mxu0 0
    %415 = vmatprep.subr.bf16.mxu0 0
    %416 = vmatpush1.bf16.msra.mxu0 0
    %417 = vmatprep.subr.bf16.mxu0 0
    %418 = vmatpush1.bf16.msra.mxu0 0
    %419 = vmatprep.subr.bf16.mxu0 0
    %420 = vmatpush1.bf16.msra.mxu0 0
    %421 = vmatprep.subr.bf16.mxu0 0
    %422 = vmatpush1.bf16.msra.mxu0 0
    %423 = vmatprep.subr.bf16.mxu0 0
    %424 = vmatpush1.bf16.msra.mxu0 0
    %425 = vmatprep.subr.bf16.mxu0 0
    %426 = vmatpush1.bf16.msra.mxu0 0
    %427 = vmatprep.subr.bf16.mxu0 0
    %428 = vmatpush1.bf16.msra.mxu0 0
    %429 = vmatprep.subr.bf16.mxu0 0
    %430 = vmatpush1.bf16.msra.mxu0 0
    %431 = vmatprep.subr.bf16.mxu0 0
    %432 = vmatpush1.bf16.msra.mxu0 0
    %433 = vmatprep.subr.bf16.mxu0 0
    %434 = vmatpush1.bf16.msra.mxu0 0
    %435 = vmatprep.mubr.bf16.mxu0 0
    %436 = vmatmul.mubr.bf16.gmra.mrb[0].mxu0 %v106
    %v437 = vpop.f32.mrb[0].mxu0
    %v438 = vadd.f32 0.0, %v437
    %v439 = vpop.f32.mrb[0].mxu0
    %v440 = vpop.f32.mrb[0].mxu0
    %v441 = vpop.f32.mrb[0].mxu0
    %442 = vdwg.mxu0
    %v443 = vmul.f32 %v365, %v64
    %v445 = vsel %vm221, %v365, 0
    %447 = vmatprep.subr.mxu0 0.0
    %448 = vmatpush1.msra.mxu0 %v66
    %449 = vmatprep.subr.mxu0 0.0
    %450 = vmatpush1.msra.mxu0 %v67
    %451 = vmatprep.subr.mxu0 0.0
    %452 = vmatpush1.msra.mxu0 0.0
    %453 = vmatprep.subr.mxu0 0.0
    %454 = vmatpush1.msra.mxu0 0.0
    %455 = vmatprep.subr.mxu0 0.0
    %456 = vmatpush1.msra.mxu0 0.0
    %457 = vmatprep.subr.mxu0 0.0
    %458 = vmatpush1.msra.mxu0 0.0
    %459 = vmatprep.subr.mxu0 0.0
    %460 = vmatpush1.msra.mxu0 0.0
    %461 = vmatprep.subr.mxu0 0.0
    %462 = vmatpush1.msra.mxu0 0.0
    %463 = vmatprep.subr.mxu0 0.0
    %464 = vmatpush1.msra.mxu0 0.0
    %465 = vmatprep.subr.mxu0 0.0
    %466 = vmatpush1.msra.mxu0 0.0
    %467 = vmatprep.subr.mxu0 0.0
    %468 = vmatpush1.msra.mxu0 0.0
    %469 = vmatprep.subr.mxu0 0.0
    %470 = vmatpush1.msra.mxu0 0.0
    %471 = vmatprep.subr.mxu0 0.0
    %472 = vmatpush1.msra.mxu0 0.0
    %473 = vmatprep.subr.mxu0 0.0
    %474 = vmatpush1.msra.mxu0 0.0
    %475 = vmatprep.subr.mxu0 0.0
    %476 = vmatpush1.msra.mxu0 0.0
    %477 = vmatprep.subr.mxu0 0.0
    %478 = vmatpush1.msra.mxu0 0.0
    %479 = vmatprep.subr.mxu0 0.0
    %480 = vmatpush1.msra.mxu0 0.0
    %481 = vmatprep.subr.mxu0 0.0
    %482 = vmatpush1.msra.mxu0 0.0
    %483 = vmatprep.subr.mxu0 0.0
    %484 = vmatpush1.msra.mxu0 0.0
    %485 = vmatprep.subr.mxu0 0.0
    %486 = vmatpush1.msra.mxu0 0.0
    %487 = vmatprep.subr.mxu0 0.0
    %488 = vmatpush1.msra.mxu0 0.0
    %489 = vmatprep.subr.mxu0 0.0
    %490 = vmatpush1.msra.mxu0 0.0
    %491 = vmatprep.subr.mxu0 0.0
    %492 = vmatpush1.msra.mxu0 0.0
    %493 = vmatprep.subr.mxu0 0.0
    %494 = vmatpush1.msra.mxu0 0.0
    %495 = vmatprep.subr.mxu0 0.0
    %496 = vmatpush1.msra.mxu0 0.0
    %497 = vmatprep.subr.mxu0 0.0
    %498 = vmatpush1.msra.mxu0 0.0
    %499 = vmatprep.subr.mxu0 0.0
    %500 = vmatpush1.msra.mxu0 0.0
    %501 = vmatprep.subr.mxu0 0.0
    %502 = vmatpush1.msra.mxu0 0.0
    %503 = vmatprep.subr.mxu0 0.0
    %504 = vmatpush1.msra.mxu0 0.0
    %505 = vmatprep.subr.mxu0 0.0
    %506 = vmatpush1.msra.mxu0 0.0
    %507 = vmatprep.subr.mxu0 0.0
    %508 = vmatpush1.msra.mxu0 0.0
    %509 = vmatprep.subr.mxu0 0.0
    %510 = vmatpush1.msra.mxu0 0.0
    %511 = vmatprep.mubr.f32.mxu0 0.0
    %512 = vmatmul.mubr.f32.gmra.mrb[0].mxu0 %v445
    %v513 = vpop.f32.mrb[0].mxu0
    %v514 = vadd.f32 0.0, %v513
    %v515 = vpop.f32.mrb[0].mxu0
    %516 = vdwg.mxu0
    %v517 = vmul.f32 %v514, %v65
    %v518 = vadd.f32 %v443, %v517
    %v519 = vld [vmem:[%s4] sm:$0xf]
    %v520 = vld [vmem:[%s4 + $0x4] sm:$0xf]
    %v521 = vld [vmem:[%s4 + $0x8] sm:$0xf]
    %v522 = vld [vmem:[%s4 + $0xc] sm:$0xf]
    %v523 = vld [vmem:[%s4 + $0x10] sm:$0xf]
    %v524 = vld [vmem:[%s4 + $0x14] sm:$0xf]
    %v525 = vld [vmem:[%s4 + $0x18] sm:$0xf]
    %v526 = vld [vmem:[%s4 + $0x1c] sm:$0xf]
    %v535 = vunpack.c.l.b16 %v519
    %v536 = vunpack.c.l.b16 %v520
    %v537 = vunpack.c.l.b16 %v521
    %v538 = vunpack.c.l.b16 %v522
    %v539 = vunpack.c.l.b16 %v523
    %v540 = vunpack.c.l.b16 %v524
    %v541 = vunpack.c.l.b16 %v525
    %v542 = vunpack.c.l.b16 %v526
    %v543 = vpack.c.b16 %v536, %v535
    %v544 = vpack.c.b16 %v538, %v537
    %v545 = vpack.c.b16 %v540, %v539
    %v546 = vpack.c.b16 %v542, %v541
    %551 = vmatprep.subr.bf16.mxu0 0
    %552 = vmatpush1.bf16.msra.mxu0 %v543
    %553 = vmatprep.subr.bf16.mxu0 0
    %554 = vmatpush1.bf16.msra.mxu0 %v544
    %555 = vmatprep.subr.bf16.mxu0 0
    %556 = vmatpush1.bf16.msra.mxu0 %v545
    %557 = vmatprep.subr.bf16.mxu0 0
    %558 = vmatpush1.bf16.msra.mxu0 %v546
    %559 = vmatprep.subr.bf16.mxu0 0
    %560 = vmatpush1.bf16.msra.mxu0 0
    %561 = vmatprep.subr.bf16.mxu0 0
    %562 = vmatpush1.bf16.msra.mxu0 0
    %563 = vmatprep.subr.bf16.mxu0 0
    %564 = vmatpush1.bf16.msra.mxu0 0
    %565 = vmatprep.subr.bf16.mxu0 0
    %566 = vmatpush1.bf16.msra.mxu0 0
    %567 = vmatprep.subr.bf16.mxu0 0
    %568 = vmatpush1.bf16.msra.mxu0 0
    %569 = vmatprep.subr.bf16.mxu0 0
    %570 = vmatpush1.bf16.msra.mxu0 0
    %571 = vmatprep.subr.bf16.mxu0 0
    %572 = vmatpush1.bf16.msra.mxu0 0
    %573 = vmatprep.subr.bf16.mxu0 0
    %574 = vmatpush1.bf16.msra.mxu0 0
    %575 = vmatprep.subr.bf16.mxu0 0
    %576 = vmatpush1.bf16.msra.mxu0 0
    %577 = vmatprep.subr.bf16.mxu0 0
    %578 = vmatpush1.bf16.msra.mxu0 0
    %579 = vmatprep.subr.bf16.mxu0 0
    %580 = vmatpush1.bf16.msra.mxu0 0
    %581 = vmatprep.subr.bf16.mxu0 0
    %582 = vmatpush1.bf16.msra.mxu0 0
    %583 = vmatprep.mubr.bf16.mxu0 0
    %584 = vmatmul.mubr.bf16.gmra.mrb[0].mxu0 %v106
    %v585 = vpop.f32.mrb[0].mxu0
    %v586 = vadd.f32 0.0, %v585
    %v587 = vpop.f32.mrb[0].mxu0
    %v588 = vpop.f32.mrb[0].mxu0
    %v589 = vpop.f32.mrb[0].mxu0
    %590 = vdwg.mxu0
    %v591 = vmul.f32 %v586, %v64
    %v593 = vsel %vm221, %v586, 0
    %595 = vmatprep.subr.mxu0 0.0
    %596 = vmatpush1.msra.mxu0 %v66
    %597 = vmatprep.subr.mxu0 0.0
    %598 = vmatpush1.msra.mxu0 %v67
    %599 = vmatprep.subr.mxu0 0.0
    %600 = vmatpush1.msra.mxu0 0.0
    %601 = vmatprep.subr.mxu0 0.0
    %602 = vmatpush1.msra.mxu0 0.0
    %603 = vmatprep.subr.mxu0 0.0
    %604 = vmatpush1.msra.mxu0 0.0
    %605 = vmatprep.subr.mxu0 0.0
    %606 = vmatpush1.msra.mxu0 0.0
    %607 = vmatprep.subr.mxu0 0.0
    %608 = vmatpush1.msra.mxu0 0.0
    %609 = vmatprep.subr.mxu0 0.0
    %610 = vmatpush1.msra.mxu0 0.0
    %611 = vmatprep.subr.mxu0 0.0
    %612 = vmatpush1.msra.mxu0 0.0
    %613 = vmatprep.subr.mxu0 0.0
    %614 = vmatpush1.msra.mxu0 0.0
    %615 = vmatprep.subr.mxu0 0.0
    %616 = vmatpush1.msra.mxu0 0.0
    %617 = vmatprep.subr.mxu0 0.0
    %618 = vmatpush1.msra.mxu0 0.0
    %619 = vmatprep.subr.mxu0 0.0
    %620 = vmatpush1.msra.mxu0 0.0
    %621 = vmatprep.subr.mxu0 0.0
    %622 = vmatpush1.msra.mxu0 0.0
    %623 = vmatprep.subr.mxu0 0.0
    %624 = vmatpush1.msra.mxu0 0.0
    %625 = vmatprep.subr.mxu0 0.0
    %626 = vmatpush1.msra.mxu0 0.0
    %627 = vmatprep.subr.mxu0 0.0
    %628 = vmatpush1.msra.mxu0 0.0
    %629 = vmatprep.subr.mxu0 0.0
    %630 = vmatpush1.msra.mxu0 0.0
    %631 = vmatprep.subr.mxu0 0.0
    %632 = vmatpush1.msra.mxu0 0.0
    %633 = vmatprep.subr.mxu0 0.0
    %634 = vmatpush1.msra.mxu0 0.0
    %635 = vmatprep.subr.mxu0 0.0
    %636 = vmatpush1.msra.mxu0 0.0
    %637 = vmatprep.subr.mxu0 0.0
    %638 = vmatpush1.msra.mxu0 0.0
    %639 = vmatprep.subr.mxu0 0.0
    %640 = vmatpush1.msra.mxu0 0.0
    %641 = vmatprep.subr.mxu0 0.0
    %642 = vmatpush1.msra.mxu0 0.0
    %643 = vmatprep.subr.mxu0 0.0
    %644 = vmatpush1.msra.mxu0 0.0
    %645 = vmatprep.subr.mxu0 0.0
    %646 = vmatpush1.msra.mxu0 0.0
    %647 = vmatprep.subr.mxu0 0.0
    %648 = vmatpush1.msra.mxu0 0.0
    %649 = vmatprep.subr.mxu0 0.0
    %650 = vmatpush1.msra.mxu0 0.0
    %651 = vmatprep.subr.mxu0 0.0
    %652 = vmatpush1.msra.mxu0 0.0
    %653 = vmatprep.subr.mxu0 0.0
    %654 = vmatpush1.msra.mxu0 0.0
    %655 = vmatprep.subr.mxu0 0.0
    %656 = vmatpush1.msra.mxu0 0.0
    %657 = vmatprep.subr.mxu0 0.0
    %658 = vmatpush1.msra.mxu0 0.0
    %659 = vmatprep.mubr.f32.mxu0 0.0
    %660 = vmatmul.mubr.f32.gmra.mrb[0].mxu0 %v593
    %v661 = vpop.f32.mrb[0].mxu0
    %v662 = vadd.f32 0.0, %v661
    %v663 = vpop.f32.mrb[0].mxu0
    %664 = vdwg.mxu0
    %v665 = vmul.f32 %v662, %v65
    %v666 = vadd.f32 %v591, %v665
    %v668 = vsel %vm221, %v666, 0
    %v671 = vsel %vm221, %v296, 0
    %673 = vmatprep.subr.mxu0 0.0
    %674 = vmatpush1.xpose.msra.mxu0 %v671
    %675 = vmatprep.subr.mxu0 0.0
    %676 = vmatpush1.xpose.msra.mxu0 0.0
    %677 = vmatprep.subr.mxu0 0.0
    %678 = vmatpush1.xpose.msra.mxu0 0.0
    %679 = vmatprep.subr.mxu0 0.0
    %680 = vmatpush1.xpose.msra.mxu0 0.0
    %681 = vmatprep.subr.mxu0 0.0
    %682 = vmatpush1.xpose.msra.mxu0 0.0
    %683 = vmatprep.subr.mxu0 0.0
    %684 = vmatpush1.xpose.msra.mxu0 0.0
    %685 = vmatprep.subr.mxu0 0.0
    %686 = vmatpush1.xpose.msra.mxu0 0.0
    %687 = vmatprep.subr.mxu0 0.0
    %688 = vmatpush1.xpose.msra.mxu0 0.0
    %689 = vmatprep.subr.mxu0 0.0
    %690 = vmatpush1.xpose.msra.mxu0 0.0
    %691 = vmatprep.subr.mxu0 0.0
    %692 = vmatpush1.xpose.msra.mxu0 0.0
    %693 = vmatprep.subr.mxu0 0.0
    %694 = vmatpush1.xpose.msra.mxu0 0.0
    %695 = vmatprep.subr.mxu0 0.0
    %696 = vmatpush1.xpose.msra.mxu0 0.0
    %697 = vmatprep.subr.mxu0 0.0
    %698 = vmatpush1.xpose.msra.mxu0 0.0
    %699 = vmatprep.subr.mxu0 0.0
    %700 = vmatpush1.xpose.msra.mxu0 0.0
    %701 = vmatprep.subr.mxu0 0.0
    %702 = vmatpush1.xpose.msra.mxu0 0.0
    %703 = vmatprep.subr.mxu0 0.0
    %704 = vmatpush1.xpose.msra.mxu0 0.0
    %705 = vmatprep.subr.mxu0 0.0
    %706 = vmatpush1.xpose.msra.mxu0 0.0
    %707 = vmatprep.subr.mxu0 0.0
    %708 = vmatpush1.xpose.msra.mxu0 0.0
    %709 = vmatprep.subr.mxu0 0.0
    %710 = vmatpush1.xpose.msra.mxu0 0.0
    %711 = vmatprep.subr.mxu0 0.0
    %712 = vmatpush1.xpose.msra.mxu0 0.0
    %713 = vmatprep.subr.mxu0 0.0
    %714 = vmatpush1.xpose.msra.mxu0 0.0
    %715 = vmatprep.subr.mxu0 0.0
    %716 = vmatpush1.xpose.msra.mxu0 0.0
    %717 = vmatprep.subr.mxu0 0.0
    %718 = vmatpush1.xpose.msra.mxu0 0.0
    %719 = vmatprep.subr.mxu0 0.0
    %720 = vmatpush1.xpose.msra.mxu0 0.0
    %721 = vmatprep.subr.mxu0 0.0
    %722 = vmatpush1.xpose.msra.mxu0 0.0
    %723 = vmatprep.subr.mxu0 0.0
    %724 = vmatpush1.xpose.msra.mxu0 0.0
    %725 = vmatprep.subr.mxu0 0.0
    %726 = vmatpush1.xpose.msra.mxu0 0.0
    %727 = vmatprep.subr.mxu0 0.0
    %728 = vmatpush1.xpose.msra.mxu0 0.0
    %729 = vmatprep.subr.mxu0 0.0
    %730 = vmatpush1.xpose.msra.mxu0 0.0
    %731 = vmatprep.subr.mxu0 0.0
    %732 = vmatpush1.xpose.msra.mxu0 0.0
    %733 = vmatprep.subr.mxu0 0.0
    %734 = vmatpush1.xpose.msra.mxu0 0.0
    %735 = vmatprep.subr.mxu0 0.0
    %736 = vmatpush1.xpose.msra.mxu0 0.0
    %737 = vmatprep.mubr.f32.mxu0 0.0
    %738 = vmatmul.mubr.f32.gmra.mrb[0].mxu0 %v668
    %v739 = vpop.f32.mrb[0].mxu0
    %v740 = vadd.f32 0.0, %v739
    %v741 = vpop.f32.mrb[0].mxu0
    %742 = vdwg.mxu0
    %v743 = vmul.f32 %v740, 0.25
    %v744 = vsel %vm72, %v743, -1e+30
    %vm745 = vcmask 64512
    %v746 = vsel %vm745, %v744, -inf
    %747 = vmax.xlane.f32.xlu0 %v746
    %v748 = vpop.xlane.xlu0 %747
    %v749 = vsub.f32 %v744, %v748
    %v750 = vmul.f32 %v749, 1.442695
    %v751 = vpow.pop %v750
    %v752 = vsel %vm745, %v751, 0.0
    %753 = vadd.xlane.f32.xlu0 %v752
    %v754 = vpop.xlane.xlu0 %753
    %v755 = vrcp.pop %v754
    %v756 = vmul.f32 %v751, %v755
    %v758 = vsel %vm745, %v756, 0
    %760 = vmatprep.subr.mxu0 0.0
    %761 = vmatpush1.msra.mxu0 %v215
    %762 = vmatprep.subr.mxu0 0.0
    %763 = vmatpush1.msra.mxu0 0.0
    %764 = vmatprep.subr.mxu0 0.0
    %765 = vmatpush1.msra.mxu0 0.0
    %766 = vmatprep.subr.mxu0 0.0
    %767 = vmatpush1.msra.mxu0 0.0
    %768 = vmatprep.subr.mxu0 0.0
    %769 = vmatpush1.msra.mxu0 0.0
    %770 = vmatprep.subr.mxu0 0.0
    %771 = vmatpush1.msra.mxu0 0.0
    %772 = vmatprep.subr.mxu0 0.0
    %773 = vmatpush1.msra.mxu0 0.0
    %774 = vmatprep.subr.mxu0 0.0
    %775 = vmatpush1.msra.mxu0 0.0
    %776 = vmatprep.subr.mxu0 0.0
    %777 = vmatpush1.msra.mxu0 0.0
    %778 = vmatprep.subr.mxu0 0.0
    %779 = vmatpush1.msra.mxu0 0.0
    %780 = vmatprep.subr.mxu0 0.0
    %781 = vmatpush1.msra.mxu0 0.0
    %782 = vmatprep.subr.mxu0 0.0
    %783 = vmatpush1.msra.mxu0 0.0
    %784 = vmatprep.subr.mxu0 0.0
    %785 = vmatpush1.msra.mxu0 0.0
    %786 = vmatprep.subr.mxu0 0.0
    %787 = vmatpush1.msra.mxu0 0.0
    %788 = vmatprep.subr.mxu0 0.0
    %789 = vmatpush1.msra.mxu0 0.0
    %790 = vmatprep.subr.mxu0 0.0
    %791 = vmatpush1.msra.mxu0 0.0
    %792 = vmatprep.subr.mxu0 0.0
    %793 = vmatpush1.msra.mxu0 0.0
    %794 = vmatprep.subr.mxu0 0.0
    %795 = vmatpush1.msra.mxu0 0.0
    %796 = vmatprep.subr.mxu0 0.0
    %797 = vmatpush1.msra.mxu0 0.0
    %798 = vmatprep.subr.mxu0 0.0
    %799 = vmatpush1.msra.mxu0 0.0
    %800 = vmatprep.subr.mxu0 0.0
    %801 = vmatpush1.msra.mxu0 0.0
    %802 = vmatprep.subr.mxu0 0.0
    %803 = vmatpush1.msra.mxu0 0.0
    %804 = vmatprep.subr.mxu0 0.0
    %805 = vmatpush1.msra.mxu0 0.0
    %806 = vmatprep.subr.mxu0 0.0
    %807 = vmatpush1.msra.mxu0 0.0
    %808 = vmatprep.subr.mxu0 0.0
    %809 = vmatpush1.msra.mxu0 0.0
    %810 = vmatprep.subr.mxu0 0.0
    %811 = vmatpush1.msra.mxu0 0.0
    %812 = vmatprep.subr.mxu0 0.0
    %813 = vmatpush1.msra.mxu0 0.0
    %814 = vmatprep.subr.mxu0 0.0
    %815 = vmatpush1.msra.mxu0 0.0
    %816 = vmatprep.subr.mxu0 0.0
    %817 = vmatpush1.msra.mxu0 0.0
    %818 = vmatprep.subr.mxu0 0.0
    %819 = vmatpush1.msra.mxu0 0.0
    %820 = vmatprep.subr.mxu0 0.0
    %821 = vmatpush1.msra.mxu0 0.0
    %822 = vmatprep.subr.mxu0 0.0
    %823 = vmatpush1.msra.mxu0 0.0
    %824 = vmatprep.mubr.f32.mxu0 0.0
    %825 = vmatmul.mubr.f32.gmra.mrb[0].mxu0 %v758
    %v826 = vpop.f32.mrb[0].mxu0
    %v827 = vadd.f32 0.0, %v826
    %v828 = vpop.f32.mrb[0].mxu0
    %829 = vdwg.mxu0
    %v830 = vpack.c.bf16 %v827, %v827
    %v831 = vld [vmem:[%s7] sm:$0xf]
    %v832 = vld [vmem:[%s7 + $0x4] sm:$0xf]
    %s833 = scalar_lea.vmem %s4, 32
    %v834 = vld [vmem:[%s833] sm:$0xf]
    %v835 = vld [vmem:[%s833 + $0x4] sm:$0xf]
    %v836 = vld [vmem:[%s833 + $0x8] sm:$0xf]
    %v837 = vld [vmem:[%s833 + $0xc] sm:$0xf]
    %v838 = vld [vmem:[%s833 + $0x10] sm:$0xf]
    %v839 = vld [vmem:[%s833 + $0x14] sm:$0xf]
    %v840 = vld [vmem:[%s833 + $0x18] sm:$0xf]
    %v841 = vld [vmem:[%s833 + $0x1c] sm:$0xf]
    %v850 = vunpack.c.l.b16 %v834
    %v851 = vunpack.c.l.b16 %v835
    %v852 = vunpack.c.l.b16 %v836
    %v853 = vunpack.c.l.b16 %v837
    %v854 = vunpack.c.l.b16 %v838
    %v855 = vunpack.c.l.b16 %v839
    %v856 = vunpack.c.l.b16 %v840
    %v857 = vunpack.c.l.b16 %v841
    %v858 = vpack.c.b16 %v851, %v850
    %v859 = vpack.c.b16 %v853, %v852
    %v860 = vpack.c.b16 %v855, %v854
    %v861 = vpack.c.b16 %v857, %v856
    %866 = vmatprep.subr.bf16.mxu0 0
    %867 = vmatpush1.bf16.msra.mxu0 %v858
    %868 = vmatprep.subr.bf16.mxu0 0
    %869 = vmatpush1.bf16.msra.mxu0 %v859
    %870 = vmatprep.subr.bf16.mxu0 0
    %871 = vmatpush1.bf16.msra.mxu0 %v860
    %872 = vmatprep.subr.bf16.mxu0 0
    %873 = vmatpush1.bf16.msra.mxu0 %v861
    %874 = vmatprep.subr.bf16.mxu0 0
    %875 = vmatpush1.bf16.msra.mxu0 0
    %876 = vmatprep.subr.bf16.mxu0 0
    %877 = vmatpush1.bf16.msra.mxu0 0
    %878 = vmatprep.subr.bf16.mxu0 0
    %879 = vmatpush1.bf16.msra.mxu0 0
    %880 = vmatprep.subr.bf16.mxu0 0
    %881 = vmatpush1.bf16.msra.mxu0 0
    %882 = vmatprep.subr.bf16.mxu0 0
    %883 = vmatpush1.bf16.msra.mxu0 0
    %884 = vmatprep.subr.bf16.mxu0 0
    %885 = vmatpush1.bf16.msra.mxu0 0
    %886 = vmatprep.subr.bf16.mxu0 0
    %887 = vmatpush1.bf16.msra.mxu0 0
    %888 = vmatprep.subr.bf16.mxu0 0
    %889 = vmatpush1.bf16.msra.mxu0 0
    %890 = vmatprep.subr.bf16.mxu0 0
    %891 = vmatpush1.bf16.msra.mxu0 0
    %892 = vmatprep.subr.bf16.mxu0 0
    %893 = vmatpush1.bf16.msra.mxu0 0
    %894 = vmatprep.subr.bf16.mxu0 0
    %895 = vmatpush1.bf16.msra.mxu0 0
    %896 = vmatprep.subr.bf16.mxu0 0
    %897 = vmatpush1.bf16.msra.mxu0 0
    %898 = vmatprep.mubr.bf16.mxu0 0
    %899 = vmatmul.mubr.bf16.gmra.mrb[0].mxu0 %v106
    %v900 = vpop.f32.mrb[0].mxu0
    %v901 = vadd.f32 0.0, %v900
    %v902 = vpop.f32.mrb[0].mxu0
    %v903 = vpop.f32.mrb[0].mxu0
    %v904 = vpop.f32.mrb[0].mxu0
    %905 = vdwg.mxu0
    %v906 = vmul.f32 %v901, %v64
    %v908 = vsel %vm221, %v901, 0
    %910 = vmatprep.subr.mxu0 0.0
    %911 = vmatpush1.msra.mxu0 %v66
    %912 = vmatprep.subr.mxu0 0.0
    %913 = vmatpush1.msra.mxu0 %v67
    %914 = vmatprep.subr.mxu0 0.0
    %915 = vmatpush1.msra.mxu0 0.0
    %916 = vmatprep.subr.mxu0 0.0
    %917 = vmatpush1.msra.mxu0 0.0
    %918 = vmatprep.subr.mxu0 0.0
    %919 = vmatpush1.msra.mxu0 0.0
    %920 = vmatprep.subr.mxu0 0.0
    %921 = vmatpush1.msra.mxu0 0.0
    %922 = vmatprep.subr.mxu0 0.0
    %923 = vmatpush1.msra.mxu0 0.0
    %924 = vmatprep.subr.mxu0 0.0
    %925 = vmatpush1.msra.mxu0 0.0
    %926 = vmatprep.subr.mxu0 0.0
    %927 = vmatpush1.msra.mxu0 0.0
    %928 = vmatprep.subr.mxu0 0.0
    %929 = vmatpush1.msra.mxu0 0.0
    %930 = vmatprep.subr.mxu0 0.0
    %931 = vmatpush1.msra.mxu0 0.0
    %932 = vmatprep.subr.mxu0 0.0
    %933 = vmatpush1.msra.mxu0 0.0
    %934 = vmatprep.subr.mxu0 0.0
    %935 = vmatpush1.msra.mxu0 0.0
    %936 = vmatprep.subr.mxu0 0.0
    %937 = vmatpush1.msra.mxu0 0.0
    %938 = vmatprep.subr.mxu0 0.0
    %939 = vmatpush1.msra.mxu0 0.0
    %940 = vmatprep.subr.mxu0 0.0
    %941 = vmatpush1.msra.mxu0 0.0
    %942 = vmatprep.subr.mxu0 0.0
    %943 = vmatpush1.msra.mxu0 0.0
    %944 = vmatprep.subr.mxu0 0.0
    %945 = vmatpush1.msra.mxu0 0.0
    %946 = vmatprep.subr.mxu0 0.0
    %947 = vmatpush1.msra.mxu0 0.0
    %948 = vmatprep.subr.mxu0 0.0
    %949 = vmatpush1.msra.mxu0 0.0
    %950 = vmatprep.subr.mxu0 0.0
    %951 = vmatpush1.msra.mxu0 0.0
    %952 = vmatprep.subr.mxu0 0.0
    %953 = vmatpush1.msra.mxu0 0.0
    %954 = vmatprep.subr.mxu0 0.0
    %955 = vmatpush1.msra.mxu0 0.0
    %956 = vmatprep.subr.mxu0 0.0
    %957 = vmatpush1.msra.mxu0 0.0
    %958 = vmatprep.subr.mxu0 0.0
    %959 = vmatpush1.msra.mxu0 0.0
    %960 = vmatprep.subr.mxu0 0.0
    %961 = vmatpush1.msra.mxu0 0.0
    %962 = vmatprep.subr.mxu0 0.0
    %963 = vmatpush1.msra.mxu0 0.0
    %964 = vmatprep.subr.mxu0 0.0
    %965 = vmatpush1.msra.mxu0 0.0
    %966 = vmatprep.subr.mxu0 0.0
    %967 = vmatpush1.msra.mxu0 0.0
    %968 = vmatprep.subr.mxu0 0.0
    %969 = vmatpush1.msra.mxu0 0.0
    %970 = vmatprep.subr.mxu0 0.0
    %971 = vmatpush1.msra.mxu0 0.0
    %972 = vmatprep.subr.mxu0 0.0
    %973 = vmatpush1.msra.mxu0 0.0
    %974 = vmatprep.mubr.f32.mxu0 0.0
    %975 = vmatmul.mubr.f32.gmra.mrb[0].mxu0 %v908
    %v976 = vpop.f32.mrb[0].mxu0
    %v977 = vadd.f32 0.0, %v976
    %v978 = vpop.f32.mrb[0].mxu0
    %979 = vdwg.mxu0
    %v980 = vmul.f32 %v977, %v65
    %v981 = vadd.f32 %v906, %v980
    %v983 = vsel %vm221, %v981, 0
    %985 = vmatprep.subr.mxu0 0.0
    %986 = vmatpush1.xpose.msra.mxu0 %v671
    %987 = vmatprep.subr.mxu0 0.0
    %988 = vmatpush1.xpose.msra.mxu0 0.0
    %989 = vmatprep.subr.mxu0 0.0
    %990 = vmatpush1.xpose.msra.mxu0 0.0
    %991 = vmatprep.subr.mxu0 0.0
    %992 = vmatpush1.xpose.msra.mxu0 0.0
    %993 = vmatprep.subr.mxu0 0.0
    %994 = vmatpush1.xpose.msra.mxu0 0.0
    %995 = vmatprep.subr.mxu0 0.0
    %996 = vmatpush1.xpose.msra.mxu0 0.0
    %997 = vmatprep.subr.mxu0 0.0
    %998 = vmatpush1.xpose.msra.mxu0 0.0
    %999 = vmatprep.subr.mxu0 0.0
    %1000 = vmatpush1.xpose.msra.mxu0 0.0
    %1001 = vmatprep.subr.mxu0 0.0
    %1002 = vmatpush1.xpose.msra.mxu0 0.0
    %1003 = vmatprep.subr.mxu0 0.0
    %1004 = vmatpush1.xpose.msra.mxu0 0.0
    %1005 = vmatprep.subr.mxu0 0.0
    %1006 = vmatpush1.xpose.msra.mxu0 0.0
    %1007 = vmatprep.subr.mxu0 0.0
    %1008 = vmatpush1.xpose.msra.mxu0 0.0
    %1009 = vmatprep.subr.mxu0 0.0
    %1010 = vmatpush1.xpose.msra.mxu0 0.0
    %1011 = vmatprep.subr.mxu0 0.0
    %1012 = vmatpush1.xpose.msra.mxu0 0.0
    %1013 = vmatprep.subr.mxu0 0.0
    %1014 = vmatpush1.xpose.msra.mxu0 0.0
    %1015 = vmatprep.subr.mxu0 0.0
    %1016 = vmatpush1.xpose.msra.mxu0 0.0
    %1017 = vmatprep.subr.mxu0 0.0
    %1018 = vmatpush1.xpose.msra.mxu0 0.0
    %1019 = vmatprep.subr.mxu0 0.0
    %1020 = vmatpush1.xpose.msra.mxu0 0.0
    %1021 = vmatprep.subr.mxu0 0.0
    %1022 = vmatpush1.xpose.msra.mxu0 0.0
    %1023 = vmatprep.subr.mxu0 0.0
    %1024 = vmatpush1.xpose.msra.mxu0 0.0
    %1025 = vmatprep.subr.mxu0 0.0
    %1026 = vmatpush1.xpose.msra.mxu0 0.0
    %1027 = vmatprep.subr.mxu0 0.0
    %1028 = vmatpush1.xpose.msra.mxu0 0.0
    %1029 = vmatprep.subr.mxu0 0.0
    %1030 = vmatpush1.xpose.msra.mxu0 0.0
    %1031 = vmatprep.subr.mxu0 0.0
    %1032 = vmatpush1.xpose.msra.mxu0 0.0
    %1033 = vmatprep.subr.mxu0 0.0
    %1034 = vmatpush1.xpose.msra.mxu0 0.0
    %1035 = vmatprep.subr.mxu0 0.0
    %1036 = vmatpush1.xpose.msra.mxu0 0.0
    %1037 = vmatprep.subr.mxu0 0.0
    %1038 = vmatpush1.xpose.msra.mxu0 0.0
    %1039 = vmatprep.subr.mxu0 0.0
    %1040 = vmatpush1.xpose.msra.mxu0 0.0
    %1041 = vmatprep.subr.mxu0 0.0
    %1042 = vmatpush1.xpose.msra.mxu0 0.0
    %1043 = vmatprep.subr.mxu0 0.0
    %1044 = vmatpush1.xpose.msra.mxu0 0.0
    %1045 = vmatprep.subr.mxu0 0.0
    %1046 = vmatpush1.xpose.msra.mxu0 0.0
    %1047 = vmatprep.subr.mxu0 0.0
    %1048 = vmatpush1.xpose.msra.mxu0 0.0
    %1049 = vmatprep.mubr.f32.mxu0 0.0
    %1050 = vmatmul.mubr.f32.gmra.mrb[0].mxu0 %v983
    %v1051 = vpop.f32.mrb[0].mxu0
    %v1052 = vadd.f32 0.0, %v1051
    %v1053 = vpop.f32.mrb[0].mxu0
    %1054 = vdwg.mxu0
    %v1055 = vmul.f32 %v1052, 0.25
    %v1056 = vsel %vm72, %v1055, -1e+30
    %v1057 = vsel %vm745, %v1056, -inf
    %1058 = vmax.xlane.f32.xlu0 %v1057
    %v1059 = vpop.xlane.xlu0 %1058
    %v1060 = vsub.f32 %v1056, %v1059
    %v1061 = vmul.f32 %v1060, 1.442695
    %v1062 = vpow.pop %v1061
    %v1063 = vsel %vm745, %v1062, 0.0
    %1064 = vadd.xlane.f32.xlu0 %v1063
    %v1065 = vpop.xlane.xlu0 %1064
    %v1066 = vrcp.pop %v1065
    %v1067 = vmul.f32 %v1062, %v1066
    %v1069 = vsel %vm745, %v1067, 0
    %1071 = vmatprep.subr.mxu0 0.0
    %1072 = vmatpush1.msra.mxu0 %v215
    %1073 = vmatprep.subr.mxu0 0.0
    %1074 = vmatpush1.msra.mxu0 0.0
    %1075 = vmatprep.subr.mxu0 0.0
    %1076 = vmatpush1.msra.mxu0 0.0
    %1077 = vmatprep.subr.mxu0 0.0
    %1078 = vmatpush1.msra.mxu0 0.0
    %1079 = vmatprep.subr.mxu0 0.0
    %1080 = vmatpush1.msra.mxu0 0.0
    %1081 = vmatprep.subr.mxu0 0.0
    %1082 = vmatpush1.msra.mxu0 0.0
    %1083 = vmatprep.subr.mxu0 0.0
    %1084 = vmatpush1.msra.mxu0 0.0
    %1085 = vmatprep.subr.mxu0 0.0
    %1086 = vmatpush1.msra.mxu0 0.0
    %1087 = vmatprep.subr.mxu0 0.0
    %1088 = vmatpush1.msra.mxu0 0.0
    %1089 = vmatprep.subr.mxu0 0.0
    %1090 = vmatpush1.msra.mxu0 0.0
    %1091 = vmatprep.subr.mxu0 0.0
    %1092 = vmatpush1.msra.mxu0 0.0
    %1093 = vmatprep.subr.mxu0 0.0
    %1094 = vmatpush1.msra.mxu0 0.0
    %1095 = vmatprep.subr.mxu0 0.0
    %1096 = vmatpush1.msra.mxu0 0.0
    %1097 = vmatprep.subr.mxu0 0.0
    %1098 = vmatpush1.msra.mxu0 0.0
    %1099 = vmatprep.subr.mxu0 0.0
    %1100 = vmatpush1.msra.mxu0 0.0
    %1101 = vmatprep.subr.mxu0 0.0
    %1102 = vmatpush1.msra.mxu0 0.0
    %1103 = vmatprep.subr.mxu0 0.0
    %1104 = vmatpush1.msra.mxu0 0.0
    %1105 = vmatprep.subr.mxu0 0.0
    %1106 = vmatpush1.msra.mxu0 0.0
    %1107 = vmatprep.subr.mxu0 0.0
    %1108 = vmatpush1.msra.mxu0 0.0
    %1109 = vmatprep.subr.mxu0 0.0
    %1110 = vmatpush1.msra.mxu0 0.0
    %1111 = vmatprep.subr.mxu0 0.0
    %1112 = vmatpush1.msra.mxu0 0.0
    %1113 = vmatprep.subr.mxu0 0.0
    %1114 = vmatpush1.msra.mxu0 0.0
    %1115 = vmatprep.subr.mxu0 0.0
    %1116 = vmatpush1.msra.mxu0 0.0
    %1117 = vmatprep.subr.mxu0 0.0
    %1118 = vmatpush1.msra.mxu0 0.0
    %1119 = vmatprep.subr.mxu0 0.0
    %1120 = vmatpush1.msra.mxu0 0.0
    %1121 = vmatprep.subr.mxu0 0.0
    %1122 = vmatpush1.msra.mxu0 0.0
    %1123 = vmatprep.subr.mxu0 0.0
    %1124 = vmatpush1.msra.mxu0 0.0
    %1125 = vmatprep.subr.mxu0 0.0
    %1126 = vmatpush1.msra.mxu0 0.0
    %1127 = vmatprep.subr.mxu0 0.0
    %1128 = vmatpush1.msra.mxu0 0.0
    %1129 = vmatprep.subr.mxu0 0.0
    %1130 = vmatpush1.msra.mxu0 0.0
    %1131 = vmatprep.subr.mxu0 0.0
    %1132 = vmatpush1.msra.mxu0 0.0
    %1133 = vmatprep.subr.mxu0 0.0
    %1134 = vmatpush1.msra.mxu0 0.0
    %1135 = vmatprep.mubr.f32.mxu0 0.0
    %1136 = vmatmul.mubr.f32.gmra.mrb[0].mxu0 %v1069
    %v1137 = vpop.f32.mrb[0].mxu0
    %v1138 = vadd.f32 0.0, %v1137
    %v1139 = vpop.f32.mrb[0].mxu0
    %1140 = vdwg.mxu0
    %v1141 = vpack.c.bf16 %v1138, %v1138
    %s1142 = scalar_lea.vmem %s7, 8
    %v1143 = vld [vmem:[%s1142] sm:$0xf]
    %v1144 = vld [vmem:[%s1142 + $0x4] sm:$0xf]
    %v1147 = vunpack.c.l.b16 %v1143
    %v1148 = vunpack.c.l.b16 %v1144
    %v1149 = vpack.c.b16 %v1148, %v1147
    %v1152 = vsel %vm221, %v1141, 0
    %1154 = vmatprep.subr.bf16.mxu0 0
    %1155 = vmatpush1.bf16.msra.mxu0 %v1149
    %1156 = vmatprep.subr.bf16.mxu0 0
    %1157 = vmatpush1.bf16.msra.mxu0 0
    %1158 = vmatprep.subr.bf16.mxu0 0
    %1159 = vmatpush1.bf16.msra.mxu0 0
    %1160 = vmatprep.subr.bf16.mxu0 0
    %1161 = vmatpush1.bf16.msra.mxu0 0
    %1162 = vmatprep.subr.bf16.mxu0 0
    %1163 = vmatpush1.bf16.msra.mxu0 0
    %1164 = vmatprep.subr.bf16.mxu0 0
    %1165 = vmatpush1.bf16.msra.mxu0 0
    %1166 = vmatprep.subr.bf16.mxu0 0
    %1167 = vmatpush1.bf16.msra.mxu0 0
    %1168 = vmatprep.subr.bf16.mxu0 0
    %1169 = vmatpush1.bf16.msra.mxu0 0
    %1170 = vmatprep.subr.bf16.mxu0 0
    %1171 = vmatpush1.bf16.msra.mxu0 0
    %1172 = vmatprep.subr.bf16.mxu0 0
    %1173 = vmatpush1.bf16.msra.mxu0 0
    %1174 = vmatprep.subr.bf16.mxu0 0
    %1175 = vmatpush1.bf16.msra.mxu0 0
    %1176 = vmatprep.subr.bf16.mxu0 0
    %1177 = vmatpush1.bf16.msra.mxu0 0
    %1178 = vmatprep.subr.bf16.mxu0 0
    %1179 = vmatpush1.bf16.msra.mxu0 0
    %1180 = vmatprep.subr.bf16.mxu0 0
    %1181 = vmatpush1.bf16.msra.mxu0 0
    %1182 = vmatprep.subr.bf16.mxu0 0
    %1183 = vmatpush1.bf16.msra.mxu0 0
    %1184 = vmatprep.subr.bf16.mxu0 0
    %1185 = vmatpush1.bf16.msra.mxu0 0
    %1186 = vmatprep.mubr.bf16.mxu0 0
    %1187 = vmatmul.mubr.bf16.gmra.mrb[0].mxu0 %v1152
    %v1188 = vpop.f32.mrb[0].mxu0
    %v1189 = vadd.f32 0.0, %v1188
    %v1190 = vpop.f32.mrb[0].mxu0
    %v1191 = vpop.f32.mrb[0].mxu0
    %v1192 = vpop.f32.mrb[0].mxu0
    %1193 = vdwg.mxu0
    %v1196 = vunpack.c.l.b16 %v831
    %v1197 = vunpack.c.l.b16 %v832
    %v1198 = vpack.c.b16 %v1197, %v1196
    %v1201 = vsel %vm221, %v830, 0
    %1203 = vmatprep.subr.bf16.mxu0 0
    %1204 = vmatpush1.bf16.msra.mxu0 %v1198
    %1205 = vmatprep.subr.bf16.mxu0 0
    %1206 = vmatpush1.bf16.msra.mxu0 0
    %1207 = vmatprep.subr.bf16.mxu0 0
    %1208 = vmatpush1.bf16.msra.mxu0 0
    %1209 = vmatprep.subr.bf16.mxu0 0
    %1210 = vmatpush1.bf16.msra.mxu0 0
    %1211 = vmatprep.subr.bf16.mxu0 0
    %1212 = vmatpush1.bf16.msra.mxu0 0
    %1213 = vmatprep.subr.bf16.mxu0 0
    %1214 = vmatpush1.bf16.msra.mxu0 0
    %1215 = vmatprep.subr.bf16.mxu0 0
    %1216 = vmatpush1.bf16.msra.mxu0 0
    %1217 = vmatprep.subr.bf16.mxu0 0
    %1218 = vmatpush1.bf16.msra.mxu0 0
    %1219 = vmatprep.subr.bf16.mxu0 0
    %1220 = vmatpush1.bf16.msra.mxu0 0
    %1221 = vmatprep.subr.bf16.mxu0 0
    %1222 = vmatpush1.bf16.msra.mxu0 0
    %1223 = vmatprep.subr.bf16.mxu0 0
    %1224 = vmatpush1.bf16.msra.mxu0 0
    %1225 = vmatprep.subr.bf16.mxu0 0
    %1226 = vmatpush1.bf16.msra.mxu0 0
    %1227 = vmatprep.subr.bf16.mxu0 0
    %1228 = vmatpush1.bf16.msra.mxu0 0
    %1229 = vmatprep.subr.bf16.mxu0 0
    %1230 = vmatpush1.bf16.msra.mxu0 0
    %1231 = vmatprep.subr.bf16.mxu0 0
    %1232 = vmatpush1.bf16.msra.mxu0 0
    %1233 = vmatprep.subr.bf16.mxu0 0
    %1234 = vmatpush1.bf16.msra.mxu0 0
    %1235 = vmatprep.mubr.bf16.mxu0 0
    %1236 = vmatmul.mubr.bf16.gmra.mrb[0].mxu0 %v1201
    %v1237 = vpop.f32.mrb[0].mxu0
    %v1238 = vadd.f32 %v1189, %v1237
    %v1239 = vpop.f32.mrb[0].mxu0
    %v1240 = vpop.f32.mrb[0].mxu0
    %v1241 = vpop.f32.mrb[0].mxu0
    %1242 = vdwg.mxu0
    %s1243 = scalar_lea.vmem %s4, 64
    %v1244 = vld [vmem:[%s1243] sm:$0xf]
    %v1245 = vld [vmem:[%s1243 + $0x4] sm:$0xf]
    %v1246 = vld [vmem:[%s1243 + $0x8] sm:$0xf]
    %v1247 = vld [vmem:[%s1243 + $0xc] sm:$0xf]
    %v1248 = vld [vmem:[%s1243 + $0x10] sm:$0xf]
    %v1249 = vld [vmem:[%s1243 + $0x14] sm:$0xf]
    %v1250 = vld [vmem:[%s1243 + $0x18] sm:$0xf]
    %v1251 = vld [vmem:[%s1243 + $0x1c] sm:$0xf]
    %v1260 = vunpack.c.l.b16 %v1244
    %v1261 = vunpack.c.l.b16 %v1245
    %v1262 = vunpack.c.l.b16 %v1246
    %v1263 = vunpack.c.l.b16 %v1247
    %v1264 = vunpack.c.l.b16 %v1248
    %v1265 = vunpack.c.l.b16 %v1249
    %v1266 = vunpack.c.l.b16 %v1250
    %v1267 = vunpack.c.l.b16 %v1251
    %v1268 = vpack.c.b16 %v1261, %v1260
    %v1269 = vpack.c.b16 %v1263, %v1262
    %v1270 = vpack.c.b16 %v1265, %v1264
    %v1271 = vpack.c.b16 %v1267, %v1266
    %1276 = vmatprep.subr.bf16.mxu0 0
    %1277 = vmatpush1.bf16.msra.mxu0 %v1268
    %1278 = vmatprep.subr.bf16.mxu0 0
    %1279 = vmatpush1.bf16.msra.mxu0 %v1269
    %1280 = vmatprep.subr.bf16.mxu0 0
    %1281 = vmatpush1.bf16.msra.mxu0 %v1270
    %1282 = vmatprep.subr.bf16.mxu0 0
    %1283 = vmatpush1.bf16.msra.mxu0 %v1271
    %1284 = vmatprep.subr.bf16.mxu0 0
    %1285 = vmatpush1.bf16.msra.mxu0 0
    %1286 = vmatprep.subr.bf16.mxu0 0
    %1287 = vmatpush1.bf16.msra.mxu0 0
    %1288 = vmatprep.subr.bf16.mxu0 0
    %1289 = vmatpush1.bf16.msra.mxu0 0
    %1290 = vmatprep.subr.bf16.mxu0 0
    %1291 = vmatpush1.bf16.msra.mxu0 0
    %1292 = vmatprep.subr.bf16.mxu0 0
    %1293 = vmatpush1.bf16.msra.mxu0 0
    %1294 = vmatprep.subr.bf16.mxu0 0
    %1295 = vmatpush1.bf16.msra.mxu0 0
    %1296 = vmatprep.subr.bf16.mxu0 0
    %1297 = vmatpush1.bf16.msra.mxu0 0
    %1298 = vmatprep.subr.bf16.mxu0 0
    %1299 = vmatpush1.bf16.msra.mxu0 0
    %1300 = vmatprep.subr.bf16.mxu0 0
    %1301 = vmatpush1.bf16.msra.mxu0 0
    %1302 = vmatprep.subr.bf16.mxu0 0
    %1303 = vmatpush1.bf16.msra.mxu0 0
    %1304 = vmatprep.subr.bf16.mxu0 0
    %1305 = vmatpush1.bf16.msra.mxu0 0
    %1306 = vmatprep.subr.bf16.mxu0 0
    %1307 = vmatpush1.bf16.msra.mxu0 0
    %1308 = vmatprep.mubr.bf16.mxu0 0
    %1309 = vmatmul.mubr.bf16.gmra.mrb[0].mxu0 %v106
    %v1310 = vpop.f32.mrb[0].mxu0
    %v1311 = vadd.f32 0.0, %v1310
    %v1312 = vpop.f32.mrb[0].mxu0
    %v1313 = vpop.f32.mrb[0].mxu0
    %v1314 = vpop.f32.mrb[0].mxu0
    %1315 = vdwg.mxu0
    %v1316 = vmul.f32 %v1311, %v64
    %v1318 = vsel %vm221, %v1311, 0
    %1320 = vmatprep.subr.mxu0 0.0
    %1321 = vmatpush1.msra.mxu0 %v66
    %1322 = vmatprep.subr.mxu0 0.0
    %1323 = vmatpush1.msra.mxu0 %v67
    %1324 = vmatprep.subr.mxu0 0.0
    %1325 = vmatpush1.msra.mxu0 0.0
    %1326 = vmatprep.subr.mxu0 0.0
    %1327 = vmatpush1.msra.mxu0 0.0
    %1328 = vmatprep.subr.mxu0 0.0
    %1329 = vmatpush1.msra.mxu0 0.0
    %1330 = vmatprep.subr.mxu0 0.0
    %1331 = vmatpush1.msra.mxu0 0.0
    %1332 = vmatprep.subr.mxu0 0.0
    %1333 = vmatpush1.msra.mxu0 0.0
    %1334 = vmatprep.subr.mxu0 0.0
    %1335 = vmatpush1.msra.mxu0 0.0
    %1336 = vmatprep.subr.mxu0 0.0
    %1337 = vmatpush1.msra.mxu0 0.0
    %1338 = vmatprep.subr.mxu0 0.0
    %1339 = vmatpush1.msra.mxu0 0.0
    %1340 = vmatprep.subr.mxu0 0.0
    %1341 = vmatpush1.msra.mxu0 0.0
    %1342 = vmatprep.subr.mxu0 0.0
    %1343 = vmatpush1.msra.mxu0 0.0
    %1344 = vmatprep.subr.mxu0 0.0
    %1345 = vmatpush1.msra.mxu0 0.0
    %1346 = vmatprep.subr.mxu0 0.0
    %1347 = vmatpush1.msra.mxu0 0.0
    %1348 = vmatprep.subr.mxu0 0.0
    %1349 = vmatpush1.msra.mxu0 0.0
    %1350 = vmatprep.subr.mxu0 0.0
    %1351 = vmatpush1.msra.mxu0 0.0
    %1352 = vmatprep.subr.mxu0 0.0
    %1353 = vmatpush1.msra.mxu0 0.0
    %1354 = vmatprep.subr.mxu0 0.0
    %1355 = vmatpush1.msra.mxu0 0.0
    %1356 = vmatprep.subr.mxu0 0.0
    %1357 = vmatpush1.msra.mxu0 0.0
    %1358 = vmatprep.subr.mxu0 0.0
    %1359 = vmatpush1.msra.mxu0 0.0
    %1360 = vmatprep.subr.mxu0 0.0
    %1361 = vmatpush1.msra.mxu0 0.0
    %1362 = vmatprep.subr.mxu0 0.0
    %1363 = vmatpush1.msra.mxu0 0.0
    %1364 = vmatprep.subr.mxu0 0.0
    %1365 = vmatpush1.msra.mxu0 0.0
    %1366 = vmatprep.subr.mxu0 0.0
    %1367 = vmatpush1.msra.mxu0 0.0
    %1368 = vmatprep.subr.mxu0 0.0
    %1369 = vmatpush1.msra.mxu0 0.0
    %1370 = vmatprep.subr.mxu0 0.0
    %1371 = vmatpush1.msra.mxu0 0.0
    %1372 = vmatprep.subr.mxu0 0.0
    %1373 = vmatpush1.msra.mxu0 0.0
    %1374 = vmatprep.subr.mxu0 0.0
    %1375 = vmatpush1.msra.mxu0 0.0
    %1376 = vmatprep.subr.mxu0 0.0
    %1377 = vmatpush1.msra.mxu0 0.0
    %1378 = vmatprep.subr.mxu0 0.0
    %1379 = vmatpush1.msra.mxu0 0.0
    %1380 = vmatprep.subr.mxu0 0.0
    %1381 = vmatpush1.msra.mxu0 0.0
    %1382 = vmatprep.subr.mxu0 0.0
    %1383 = vmatpush1.msra.mxu0 0.0
    %1384 = vmatprep.mubr.f32.mxu0 0.0
    %1385 = vmatmul.mubr.f32.gmra.mrb[0].mxu0 %v1318
    %v1386 = vpop.f32.mrb[0].mxu0
    %v1387 = vadd.f32 0.0, %v1386
    %v1388 = vpop.f32.mrb[0].mxu0
    %1389 = vdwg.mxu0
    %v1390 = vmul.f32 %v1387, %v65
    %v1391 = vadd.f32 %v1316, %v1390
    %v1393 = vsel %vm221, %v1391, 0
    %v1396 = vsel %vm221, %v518, 0
    %1398 = vmatprep.subr.mxu0 0.0
    %1399 = vmatpush1.xpose.msra.mxu0 %v1396
    %1400 = vmatprep.subr.mxu0 0.0
    %1401 = vmatpush1.xpose.msra.mxu0 0.0
    %1402 = vmatprep.subr.mxu0 0.0
    %1403 = vmatpush1.xpose.msra.mxu0 0.0
    %1404 = vmatprep.subr.mxu0 0.0
    %1405 = vmatpush1.xpose.msra.mxu0 0.0
    %1406 = vmatprep.subr.mxu0 0.0
    %1407 = vmatpush1.xpose.msra.mxu0 0.0
    %1408 = vmatprep.subr.mxu0 0.0
    %1409 = vmatpush1.xpose.msra.mxu0 0.0
    %1410 = vmatprep.subr.mxu0 0.0
    %1411 = vmatpush1.xpose.msra.mxu0 0.0
    %1412 = vmatprep.subr.mxu0 0.0
    %1413 = vmatpush1.xpose.msra.mxu0 0.0
    %1414 = vmatprep.subr.mxu0 0.0
    %1415 = vmatpush1.xpose.msra.mxu0 0.0
    %1416 = vmatprep.subr.mxu0 0.0
    %1417 = vmatpush1.xpose.msra.mxu0 0.0
    %1418 = vmatprep.subr.mxu0 0.0
    %1419 = vmatpush1.xpose.msra.mxu0 0.0
    %1420 = vmatprep.subr.mxu0 0.0
    %1421 = vmatpush1.xpose.msra.mxu0 0.0
    %1422 = vmatprep.subr.mxu0 0.0
    %1423 = vmatpush1.xpose.msra.mxu0 0.0
    %1424 = vmatprep.subr.mxu0 0.0
    %1425 = vmatpush1.xpose.msra.mxu0 0.0
    %1426 = vmatprep.subr.mxu0 0.0
    %1427 = vmatpush1.xpose.msra.mxu0 0.0
    %1428 = vmatprep.subr.mxu0 0.0
    %1429 = vmatpush1.xpose.msra.mxu0 0.0
    %1430 = vmatprep.subr.mxu0 0.0
    %1431 = vmatpush1.xpose.msra.mxu0 0.0
    %1432 = vmatprep.subr.mxu0 0.0
    %1433 = vmatpush1.xpose.msra.mxu0 0.0
    %1434 = vmatprep.subr.mxu0 0.0
    %1435 = vmatpush1.xpose.msra.mxu0 0.0
    %1436 = vmatprep.subr.mxu0 0.0
    %1437 = vmatpush1.xpose.msra.mxu0 0.0
    %1438 = vmatprep.subr.mxu0 0.0
    %1439 = vmatpush1.xpose.msra.mxu0 0.0
    %1440 = vmatprep.subr.mxu0 0.0
    %1441 = vmatpush1.xpose.msra.mxu0 0.0
    %1442 = vmatprep.subr.mxu0 0.0
    %1443 = vmatpush1.xpose.msra.mxu0 0.0
    %1444 = vmatprep.subr.mxu0 0.0
    %1445 = vmatpush1.xpose.msra.mxu0 0.0
    %1446 = vmatprep.subr.mxu0 0.0
    %1447 = vmatpush1.xpose.msra.mxu0 0.0
    %1448 = vmatprep.subr.mxu0 0.0
    %1449 = vmatpush1.xpose.msra.mxu0 0.0
    %1450 = vmatprep.subr.mxu0 0.0
    %1451 = vmatpush1.xpose.msra.mxu0 0.0
    %1452 = vmatprep.subr.mxu0 0.0
    %1453 = vmatpush1.xpose.msra.mxu0 0.0
    %1454 = vmatprep.subr.mxu0 0.0
    %1455 = vmatpush1.xpose.msra.mxu0 0.0
    %1456 = vmatprep.subr.mxu0 0.0
    %1457 = vmatpush1.xpose.msra.mxu0 0.0
    %1458 = vmatprep.subr.mxu0 0.0
    %1459 = vmatpush1.xpose.msra.mxu0 0.0
    %1460 = vmatprep.subr.mxu0 0.0
    %1461 = vmatpush1.xpose.msra.mxu0 0.0
    %1462 = vmatprep.mubr.f32.mxu0 0.0
    %1463 = vmatmul.mubr.f32.gmra.mrb[0].mxu0 %v1393
    %v1464 = vpop.f32.mrb[0].mxu0
    %v1465 = vadd.f32 0.0, %v1464
    %v1466 = vpop.f32.mrb[0].mxu0
    %1467 = vdwg.mxu0
    %v1468 = vmul.f32 %v1465, 0.25
    %v1469 = vsel %vm72, %v1468, -1e+30
    %v1470 = vsel %vm745, %v1469, -inf
    %1471 = vmax.xlane.f32.xlu0 %v1470
    %v1472 = vpop.xlane.xlu0 %1471
    %v1473 = vsub.f32 %v1469, %v1472
    %v1474 = vmul.f32 %v1473, 1.442695
    %v1475 = vpow.pop %v1474
    %v1476 = vsel %vm745, %v1475, 0.0
    %1477 = vadd.xlane.f32.xlu0 %v1476
    %v1478 = vpop.xlane.xlu0 %1477
    %v1479 = vrcp.pop %v1478
    %v1480 = vmul.f32 %v1475, %v1479
    %v1482 = vsel %vm745, %v1480, 0
    %1484 = vmatprep.subr.mxu0 0.0
    %1485 = vmatpush1.msra.mxu0 %v438
    %1486 = vmatprep.subr.mxu0 0.0
    %1487 = vmatpush1.msra.mxu0 0.0
    %1488 = vmatprep.subr.mxu0 0.0
    %1489 = vmatpush1.msra.mxu0 0.0
    %1490 = vmatprep.subr.mxu0 0.0
    %1491 = vmatpush1.msra.mxu0 0.0
    %1492 = vmatprep.subr.mxu0 0.0
    %1493 = vmatpush1.msra.mxu0 0.0
    %1494 = vmatprep.subr.mxu0 0.0
    %1495 = vmatpush1.msra.mxu0 0.0
    %1496 = vmatprep.subr.mxu0 0.0
    %1497 = vmatpush1.msra.mxu0 0.0
    %1498 = vmatprep.subr.mxu0 0.0
    %1499 = vmatpush1.msra.mxu0 0.0
    %1500 = vmatprep.subr.mxu0 0.0
    %1501 = vmatpush1.msra.mxu0 0.0
    %1502 = vmatprep.subr.mxu0 0.0
    %1503 = vmatpush1.msra.mxu0 0.0
    %1504 = vmatprep.subr.mxu0 0.0
    %1505 = vmatpush1.msra.mxu0 0.0
    %1506 = vmatprep.subr.mxu0 0.0
    %1507 = vmatpush1.msra.mxu0 0.0
    %1508 = vmatprep.subr.mxu0 0.0
    %1509 = vmatpush1.msra.mxu0 0.0
    %1510 = vmatprep.subr.mxu0 0.0
    %1511 = vmatpush1.msra.mxu0 0.0
    %1512 = vmatprep.subr.mxu0 0.0
    %1513 = vmatpush1.msra.mxu0 0.0
    %1514 = vmatprep.subr.mxu0 0.0
    %1515 = vmatpush1.msra.mxu0 0.0
    %1516 = vmatprep.subr.mxu0 0.0
    %1517 = vmatpush1.msra.mxu0 0.0
    %1518 = vmatprep.subr.mxu0 0.0
    %1519 = vmatpush1.msra.mxu0 0.0
    %1520 = vmatprep.subr.mxu0 0.0
    %1521 = vmatpush1.msra.mxu0 0.0
    %1522 = vmatprep.subr.mxu0 0.0
    %1523 = vmatpush1.msra.mxu0 0.0
    %1524 = vmatprep.subr.mxu0 0.0
    %1525 = vmatpush1.msra.mxu0 0.0
    %1526 = vmatprep.subr.mxu0 0.0
    %1527 = vmatpush1.msra.mxu0 0.0
    %1528 = vmatprep.subr.mxu0 0.0
    %1529 = vmatpush1.msra.mxu0 0.0
    %1530 = vmatprep.subr.mxu0 0.0
    %1531 = vmatpush1.msra.mxu0 0.0
    %1532 = vmatprep.subr.mxu0 0.0
    %1533 = vmatpush1.msra.mxu0 0.0
    %1534 = vmatprep.subr.mxu0 0.0
    %1535 = vmatpush1.msra.mxu0 0.0
    %1536 = vmatprep.subr.mxu0 0.0
    %1537 = vmatpush1.msra.mxu0 0.0
    %1538 = vmatprep.subr.mxu0 0.0
    %1539 = vmatpush1.msra.mxu0 0.0
    %1540 = vmatprep.subr.mxu0 0.0
    %1541 = vmatpush1.msra.mxu0 0.0
    %1542 = vmatprep.subr.mxu0 0.0
    %1543 = vmatpush1.msra.mxu0 0.0
    %1544 = vmatprep.subr.mxu0 0.0
    %1545 = vmatpush1.msra.mxu0 0.0
    %1546 = vmatprep.subr.mxu0 0.0
    %1547 = vmatpush1.msra.mxu0 0.0
    %1548 = vmatprep.mubr.f32.mxu0 0.0
    %1549 = vmatmul.mubr.f32.gmra.mrb[0].mxu0 %v1482
    %v1550 = vpop.f32.mrb[0].mxu0
    %v1551 = vadd.f32 0.0, %v1550
    %v1552 = vpop.f32.mrb[0].mxu0
    %1553 = vdwg.mxu0
    %v1554 = vpack.c.bf16 %v1551, %v1551
    %s1555 = scalar_lea.vmem %s7, 16
    %v1556 = vld [vmem:[%s1555] sm:$0xf]
    %v1557 = vld [vmem:[%s1555 + $0x4] sm:$0xf]
    %v1560 = vunpack.c.l.b16 %v1556
    %v1561 = vunpack.c.l.b16 %v1557
    %v1562 = vpack.c.b16 %v1561, %v1560
    %v1565 = vsel %vm221, %v1554, 0
    %1567 = vmatprep.subr.bf16.mxu0 0
    %1568 = vmatpush1.bf16.msra.mxu0 %v1562
    %1569 = vmatprep.subr.bf16.mxu0 0
    %1570 = vmatpush1.bf16.msra.mxu0 0
    %1571 = vmatprep.subr.bf16.mxu0 0
    %1572 = vmatpush1.bf16.msra.mxu0 0
    %1573 = vmatprep.subr.bf16.mxu0 0
    %1574 = vmatpush1.bf16.msra.mxu0 0
    %1575 = vmatprep.subr.bf16.mxu0 0
    %1576 = vmatpush1.bf16.msra.mxu0 0
    %1577 = vmatprep.subr.bf16.mxu0 0
    %1578 = vmatpush1.bf16.msra.mxu0 0
    %1579 = vmatprep.subr.bf16.mxu0 0
    %1580 = vmatpush1.bf16.msra.mxu0 0
    %1581 = vmatprep.subr.bf16.mxu0 0
    %1582 = vmatpush1.bf16.msra.mxu0 0
    %1583 = vmatprep.subr.bf16.mxu0 0
    %1584 = vmatpush1.bf16.msra.mxu0 0
    %1585 = vmatprep.subr.bf16.mxu0 0
    %1586 = vmatpush1.bf16.msra.mxu0 0
    %1587 = vmatprep.subr.bf16.mxu0 0
    %1588 = vmatpush1.bf16.msra.mxu0 0
    %1589 = vmatprep.subr.bf16.mxu0 0
    %1590 = vmatpush1.bf16.msra.mxu0 0
    %1591 = vmatprep.subr.bf16.mxu0 0
    %1592 = vmatpush1.bf16.msra.mxu0 0
    %1593 = vmatprep.subr.bf16.mxu0 0
    %1594 = vmatpush1.bf16.msra.mxu0 0
    %1595 = vmatprep.subr.bf16.mxu0 0
    %1596 = vmatpush1.bf16.msra.mxu0 0
    %1597 = vmatprep.subr.bf16.mxu0 0
    %1598 = vmatpush1.bf16.msra.mxu0 0
    %1599 = vmatprep.mubr.bf16.mxu0 0
    %1600 = vmatmul.mubr.bf16.gmra.mrb[0].mxu0 %v1565
    %v1601 = vpop.f32.mrb[0].mxu0
    %v1602 = vadd.f32 0.0, %v1601
    %v1603 = vpop.f32.mrb[0].mxu0
    %v1604 = vpop.f32.mrb[0].mxu0
    %v1605 = vpop.f32.mrb[0].mxu0
    %1606 = vdwg.mxu0
    %v1607 = vadd.f32 %v1238, %v1602
    %s1608 = scalar_lea.vmem %s4, 96
    %v1609 = vld [vmem:[%s1608] sm:$0xf]
    %v1610 = vld [vmem:[%s1608 + $0x4] sm:$0xf]
    %v1611 = vld [vmem:[%s1608 + $0x8] sm:$0xf]
    %v1612 = vld [vmem:[%s1608 + $0xc] sm:$0xf]
    %v1613 = vld [vmem:[%s1608 + $0x10] sm:$0xf]
    %v1614 = vld [vmem:[%s1608 + $0x14] sm:$0xf]
    %v1615 = vld [vmem:[%s1608 + $0x18] sm:$0xf]
    %v1616 = vld [vmem:[%s1608 + $0x1c] sm:$0xf]
    %v1625 = vunpack.c.l.b16 %v1609
    %v1626 = vunpack.c.l.b16 %v1610
    %v1627 = vunpack.c.l.b16 %v1611
    %v1628 = vunpack.c.l.b16 %v1612
    %v1629 = vunpack.c.l.b16 %v1613
    %v1630 = vunpack.c.l.b16 %v1614
    %v1631 = vunpack.c.l.b16 %v1615
    %v1632 = vunpack.c.l.b16 %v1616
    %v1633 = vpack.c.b16 %v1626, %v1625
    %v1634 = vpack.c.b16 %v1628, %v1627
    %v1635 = vpack.c.b16 %v1630, %v1629
    %v1636 = vpack.c.b16 %v1632, %v1631
    %1641 = vmatprep.subr.bf16.mxu0 0
    %1642 = vmatpush1.bf16.msra.mxu0 %v1633
    %1643 = vmatprep.subr.bf16.mxu0 0
    %1644 = vmatpush1.bf16.msra.mxu0 %v1634
    %1645 = vmatprep.subr.bf16.mxu0 0
    %1646 = vmatpush1.bf16.msra.mxu0 %v1635
    %1647 = vmatprep.subr.bf16.mxu0 0
    %1648 = vmatpush1.bf16.msra.mxu0 %v1636
    %1649 = vmatprep.subr.bf16.mxu0 0
    %1650 = vmatpush1.bf16.msra.mxu0 0
    %1651 = vmatprep.subr.bf16.mxu0 0
    %1652 = vmatpush1.bf16.msra.mxu0 0
    %1653 = vmatprep.subr.bf16.mxu0 0
    %1654 = vmatpush1.bf16.msra.mxu0 0
    %1655 = vmatprep.subr.bf16.mxu0 0
    %1656 = vmatpush1.bf16.msra.mxu0 0
    %1657 = vmatprep.subr.bf16.mxu0 0
    %1658 = vmatpush1.bf16.msra.mxu0 0
    %1659 = vmatprep.subr.bf16.mxu0 0
    %1660 = vmatpush1.bf16.msra.mxu0 0
    %1661 = vmatprep.subr.bf16.mxu0 0
    %1662 = vmatpush1.bf16.msra.mxu0 0
    %1663 = vmatprep.subr.bf16.mxu0 0
    %1664 = vmatpush1.bf16.msra.mxu0 0
    %1665 = vmatprep.subr.bf16.mxu0 0
    %1666 = vmatpush1.bf16.msra.mxu0 0
    %1667 = vmatprep.subr.bf16.mxu0 0
    %1668 = vmatpush1.bf16.msra.mxu0 0
    %1669 = vmatprep.subr.bf16.mxu0 0
    %1670 = vmatpush1.bf16.msra.mxu0 0
    %1671 = vmatprep.subr.bf16.mxu0 0
    %1672 = vmatpush1.bf16.msra.mxu0 0
    %1673 = vmatprep.mubr.bf16.mxu0 0
    %1674 = vmatmul.mubr.bf16.gmra.mrb[0].mxu0 %v106
    %v1675 = vpop.f32.mrb[0].mxu0
    %v1676 = vadd.f32 0.0, %v1675
    %v1677 = vpop.f32.mrb[0].mxu0
    %v1678 = vpop.f32.mrb[0].mxu0
    %v1679 = vpop.f32.mrb[0].mxu0
    %1680 = vdwg.mxu0
    %v1681 = vmul.f32 %v1676, %v64
    %v1683 = vsel %vm221, %v1676, 0
    %1685 = vmatprep.subr.mxu0 0.0
    %1686 = vmatpush1.msra.mxu0 %v66
    %1687 = vmatprep.subr.mxu0 0.0
    %1688 = vmatpush1.msra.mxu0 %v67
    %1689 = vmatprep.subr.mxu0 0.0
    %1690 = vmatpush1.msra.mxu0 0.0
    %1691 = vmatprep.subr.mxu0 0.0
    %1692 = vmatpush1.msra.mxu0 0.0
    %1693 = vmatprep.subr.mxu0 0.0
    %1694 = vmatpush1.msra.mxu0 0.0
    %1695 = vmatprep.subr.mxu0 0.0
    %1696 = vmatpush1.msra.mxu0 0.0
    %1697 = vmatprep.subr.mxu0 0.0
    %1698 = vmatpush1.msra.mxu0 0.0
    %1699 = vmatprep.subr.mxu0 0.0
    %1700 = vmatpush1.msra.mxu0 0.0
    %1701 = vmatprep.subr.mxu0 0.0
    %1702 = vmatpush1.msra.mxu0 0.0
    %1703 = vmatprep.subr.mxu0 0.0
    %1704 = vmatpush1.msra.mxu0 0.0
    %1705 = vmatprep.subr.mxu0 0.0
    %1706 = vmatpush1.msra.mxu0 0.0
    %1707 = vmatprep.subr.mxu0 0.0
    %1708 = vmatpush1.msra.mxu0 0.0
    %1709 = vmatprep.subr.mxu0 0.0
    %1710 = vmatpush1.msra.mxu0 0.0
    %1711 = vmatprep.subr.mxu0 0.0
    %1712 = vmatpush1.msra.mxu0 0.0
    %1713 = vmatprep.subr.mxu0 0.0
    %1714 = vmatpush1.msra.mxu0 0.0
    %1715 = vmatprep.subr.mxu0 0.0
    %1716 = vmatpush1.msra.mxu0 0.0
    %1717 = vmatprep.subr.mxu0 0.0
    %1718 = vmatpush1.msra.mxu0 0.0
    %1719 = vmatprep.subr.mxu0 0.0
    %1720 = vmatpush1.msra.mxu0 0.0
    %1721 = vmatprep.subr.mxu0 0.0
    %1722 = vmatpush1.msra.mxu0 0.0
    %1723 = vmatprep.subr.mxu0 0.0
    %1724 = vmatpush1.msra.mxu0 0.0
    %1725 = vmatprep.subr.mxu0 0.0
    %1726 = vmatpush1.msra.mxu0 0.0
    %1727 = vmatprep.subr.mxu0 0.0
    %1728 = vmatpush1.msra.mxu0 0.0
    %1729 = vmatprep.subr.mxu0 0.0
    %1730 = vmatpush1.msra.mxu0 0.0
    %1731 = vmatprep.subr.mxu0 0.0
    %1732 = vmatpush1.msra.mxu0 0.0
    %1733 = vmatprep.subr.mxu0 0.0
    %1734 = vmatpush1.msra.mxu0 0.0
    %1735 = vmatprep.subr.mxu0 0.0
    %1736 = vmatpush1.msra.mxu0 0.0
    %1737 = vmatprep.subr.mxu0 0.0
    %1738 = vmatpush1.msra.mxu0 0.0
    %1739 = vmatprep.subr.mxu0 0.0
    %1740 = vmatpush1.msra.mxu0 0.0
    %1741 = vmatprep.subr.mxu0 0.0
    %1742 = vmatpush1.msra.mxu0 0.0
    %1743 = vmatprep.subr.mxu0 0.0
    %1744 = vmatpush1.msra.mxu0 0.0
    %1745 = vmatprep.subr.mxu0 0.0
    %1746 = vmatpush1.msra.mxu0 0.0
    %1747 = vmatprep.subr.mxu0 0.0
    %1748 = vmatpush1.msra.mxu0 0.0
    %1749 = vmatprep.mubr.f32.mxu0 0.0
    %1750 = vmatmul.mubr.f32.gmra.mrb[0].mxu0 %v1683
    %v1751 = vpop.f32.mrb[0].mxu0
    %v1752 = vadd.f32 0.0, %v1751
    %v1753 = vpop.f32.mrb[0].mxu0
    %1754 = vdwg.mxu0
    %v1755 = vmul.f32 %v1752, %v65
    %v1756 = vadd.f32 %v1681, %v1755
    %v1758 = vsel %vm221, %v1756, 0
    %1760 = vmatprep.subr.mxu0 0.0
    %1761 = vmatpush1.xpose.msra.mxu0 %v1396
    %1762 = vmatprep.subr.mxu0 0.0
    %1763 = vmatpush1.xpose.msra.mxu0 0.0
    %1764 = vmatprep.subr.mxu0 0.0
    %1765 = vmatpush1.xpose.msra.mxu0 0.0
    %1766 = vmatprep.subr.mxu0 0.0
    %1767 = vmatpush1.xpose.msra.mxu0 0.0
    %1768 = vmatprep.subr.mxu0 0.0
    %1769 = vmatpush1.xpose.msra.mxu0 0.0
    %1770 = vmatprep.subr.mxu0 0.0
    %1771 = vmatpush1.xpose.msra.mxu0 0.0
    %1772 = vmatprep.subr.mxu0 0.0
    %1773 = vmatpush1.xpose.msra.mxu0 0.0
    %1774 = vmatprep.subr.mxu0 0.0
    %1775 = vmatpush1.xpose.msra.mxu0 0.0
    %1776 = vmatprep.subr.mxu0 0.0
    %1777 = vmatpush1.xpose.msra.mxu0 0.0
    %1778 = vmatprep.subr.mxu0 0.0
    %1779 = vmatpush1.xpose.msra.mxu0 0.0
    %1780 = vmatprep.subr.mxu0 0.0
    %1781 = vmatpush1.xpose.msra.mxu0 0.0
    %1782 = vmatprep.subr.mxu0 0.0
    %1783 = vmatpush1.xpose.msra.mxu0 0.0
    %1784 = vmatprep.subr.mxu0 0.0
    %1785 = vmatpush1.xpose.msra.mxu0 0.0
    %1786 = vmatprep.subr.mxu0 0.0
    %1787 = vmatpush1.xpose.msra.mxu0 0.0
    %1788 = vmatprep.subr.mxu0 0.0
    %1789 = vmatpush1.xpose.msra.mxu0 0.0
    %1790 = vmatprep.subr.mxu0 0.0
    %1791 = vmatpush1.xpose.msra.mxu0 0.0
    %1792 = vmatprep.subr.mxu0 0.0
    %1793 = vmatpush1.xpose.msra.mxu0 0.0
    %1794 = vmatprep.subr.mxu0 0.0
    %1795 = vmatpush1.xpose.msra.mxu0 0.0
    %1796 = vmatprep.subr.mxu0 0.0
    %1797 = vmatpush1.xpose.msra.mxu0 0.0
    %1798 = vmatprep.subr.mxu0 0.0
    %1799 = vmatpush1.xpose.msra.mxu0 0.0
    %1800 = vmatprep.subr.mxu0 0.0
    %1801 = vmatpush1.xpose.msra.mxu0 0.0
    %1802 = vmatprep.subr.mxu0 0.0
    %1803 = vmatpush1.xpose.msra.mxu0 0.0
    %1804 = vmatprep.subr.mxu0 0.0
    %1805 = vmatpush1.xpose.msra.mxu0 0.0
    %1806 = vmatprep.subr.mxu0 0.0
    %1807 = vmatpush1.xpose.msra.mxu0 0.0
    %1808 = vmatprep.subr.mxu0 0.0
    %1809 = vmatpush1.xpose.msra.mxu0 0.0
    %1810 = vmatprep.subr.mxu0 0.0
    %1811 = vmatpush1.xpose.msra.mxu0 0.0
    %1812 = vmatprep.subr.mxu0 0.0
    %1813 = vmatpush1.xpose.msra.mxu0 0.0
    %1814 = vmatprep.subr.mxu0 0.0
    %1815 = vmatpush1.xpose.msra.mxu0 0.0
    %1816 = vmatprep.subr.mxu0 0.0
    %1817 = vmatpush1.xpose.msra.mxu0 0.0
    %1818 = vmatprep.subr.mxu0 0.0
    %1819 = vmatpush1.xpose.msra.mxu0 0.0
    %1820 = vmatprep.subr.mxu0 0.0
    %1821 = vmatpush1.xpose.msra.mxu0 0.0
    %1822 = vmatprep.subr.mxu0 0.0
    %1823 = vmatpush1.xpose.msra.mxu0 0.0
    %1824 = vmatprep.mubr.f32.mxu0 0.0
    %1825 = vmatmul.mubr.f32.gmra.mrb[0].mxu0 %v1758
    %v1826 = vpop.f32.mrb[0].mxu0
    %v1827 = vadd.f32 0.0, %v1826
    %v1828 = vpop.f32.mrb[0].mxu0
    %1829 = vdwg.mxu0
    %v1830 = vmul.f32 %v1827, 0.25
    %v1831 = vsel %vm72, %v1830, -1e+30
    %v1832 = vsel %vm745, %v1831, -inf
    %1833 = vmax.xlane.f32.xlu0 %v1832
    %v1834 = vpop.xlane.xlu0 %1833
    %v1835 = vsub.f32 %v1831, %v1834
    %v1836 = vmul.f32 %v1835, 1.442695
    %v1837 = vpow.pop %v1836
    %v1838 = vsel %vm745, %v1837, 0.0
    %1839 = vadd.xlane.f32.xlu0 %v1838
    %v1840 = vpop.xlane.xlu0 %1839
    %v1841 = vrcp.pop %v1840
    %v1842 = vmul.f32 %v1837, %v1841
    %v1844 = vsel %vm745, %v1842, 0
    %1846 = vmatprep.subr.mxu0 0.0
    %1847 = vmatpush1.msra.mxu0 %v438
    %1848 = vmatprep.subr.mxu0 0.0
    %1849 = vmatpush1.msra.mxu0 0.0
    %1850 = vmatprep.subr.mxu0 0.0
    %1851 = vmatpush1.msra.mxu0 0.0
    %1852 = vmatprep.subr.mxu0 0.0
    %1853 = vmatpush1.msra.mxu0 0.0
    %1854 = vmatprep.subr.mxu0 0.0
    %1855 = vmatpush1.msra.mxu0 0.0
    %1856 = vmatprep.subr.mxu0 0.0
    %1857 = vmatpush1.msra.mxu0 0.0
    %1858 = vmatprep.subr.mxu0 0.0
    %1859 = vmatpush1.msra.mxu0 0.0
    %1860 = vmatprep.subr.mxu0 0.0
    %1861 = vmatpush1.msra.mxu0 0.0
    %1862 = vmatprep.subr.mxu0 0.0
    %1863 = vmatpush1.msra.mxu0 0.0
    %1864 = vmatprep.subr.mxu0 0.0
    %1865 = vmatpush1.msra.mxu0 0.0
    %1866 = vmatprep.subr.mxu0 0.0
    %1867 = vmatpush1.msra.mxu0 0.0
    %1868 = vmatprep.subr.mxu0 0.0
    %1869 = vmatpush1.msra.mxu0 0.0
    %1870 = vmatprep.subr.mxu0 0.0
    %1871 = vmatpush1.msra.mxu0 0.0
    %1872 = vmatprep.subr.mxu0 0.0
    %1873 = vmatpush1.msra.mxu0 0.0
    %1874 = vmatprep.subr.mxu0 0.0
    %1875 = vmatpush1.msra.mxu0 0.0
    %1876 = vmatprep.subr.mxu0 0.0
    %1877 = vmatpush1.msra.mxu0 0.0
    %1878 = vmatprep.subr.mxu0 0.0
    %1879 = vmatpush1.msra.mxu0 0.0
    %1880 = vmatprep.subr.mxu0 0.0
    %1881 = vmatpush1.msra.mxu0 0.0
    %1882 = vmatprep.subr.mxu0 0.0
    %1883 = vmatpush1.msra.mxu0 0.0
    %1884 = vmatprep.subr.mxu0 0.0
    %1885 = vmatpush1.msra.mxu0 0.0
    %1886 = vmatprep.subr.mxu0 0.0
    %1887 = vmatpush1.msra.mxu0 0.0
    %1888 = vmatprep.subr.mxu0 0.0
    %1889 = vmatpush1.msra.mxu0 0.0
    %1890 = vmatprep.subr.mxu0 0.0
    %1891 = vmatpush1.msra.mxu0 0.0
    %1892 = vmatprep.subr.mxu0 0.0
    %1893 = vmatpush1.msra.mxu0 0.0
    %1894 = vmatprep.subr.mxu0 0.0
    %1895 = vmatpush1.msra.mxu0 0.0
    %1896 = vmatprep.subr.mxu0 0.0
    %1897 = vmatpush1.msra.mxu0 0.0
    %1898 = vmatprep.subr.mxu0 0.0
    %1899 = vmatpush1.msra.mxu0 0.0
    %1900 = vmatprep.subr.mxu0 0.0
    %1901 = vmatpush1.msra.mxu0 0.0
    %1902 = vmatprep.subr.mxu0 0.0
    %1903 = vmatpush1.msra.mxu0 0.0
    %1904 = vmatprep.subr.mxu0 0.0
    %1905 = vmatpush1.msra.mxu0 0.0
    %1906 = vmatprep.subr.mxu0 0.0
    %1907 = vmatpush1.msra.mxu0 0.0
    %1908 = vmatprep.subr.mxu0 0.0
    %1909 = vmatpush1.msra.mxu0 0.0
    %1910 = vmatprep.mubr.f32.mxu0 0.0
    %1911 = vmatmul.mubr.f32.gmra.mrb[0].mxu0 %v1844
    %v1912 = vpop.f32.mrb[0].mxu0
    %v1913 = vadd.f32 0.0, %v1912
    %v1914 = vpop.f32.mrb[0].mxu0
    %1915 = vdwg.mxu0
    %v1916 = vpack.c.bf16 %v1913, %v1913
    %s1917 = scalar_lea.vmem %s7, 24
    %v1918 = vld [vmem:[%s1917] sm:$0xf]
    %v1919 = vld [vmem:[%s1917 + $0x4] sm:$0xf]
    %v1922 = vunpack.c.l.b16 %v1918
    %v1923 = vunpack.c.l.b16 %v1919
    %v1924 = vpack.c.b16 %v1923, %v1922
    %v1927 = vsel %vm221, %v1916, 0
    %1929 = vmatprep.subr.bf16.mxu0 0
    %1930 = vmatpush1.bf16.msra.mxu0 %v1924
    %1931 = vmatprep.subr.bf16.mxu0 0
    %1932 = vmatpush1.bf16.msra.mxu0 0
    %1933 = vmatprep.subr.bf16.mxu0 0
    %1934 = vmatpush1.bf16.msra.mxu0 0
    %1935 = vmatprep.subr.bf16.mxu0 0
    %1936 = vmatpush1.bf16.msra.mxu0 0
    %1937 = vmatprep.subr.bf16.mxu0 0
    %1938 = vmatpush1.bf16.msra.mxu0 0
    %1939 = vmatprep.subr.bf16.mxu0 0
    %1940 = vmatpush1.bf16.msra.mxu0 0
    %1941 = vmatprep.subr.bf16.mxu0 0
    %1942 = vmatpush1.bf16.msra.mxu0 0
    %1943 = vmatprep.subr.bf16.mxu0 0
    %1944 = vmatpush1.bf16.msra.mxu0 0
    %1945 = vmatprep.subr.bf16.mxu0 0
    %1946 = vmatpush1.bf16.msra.mxu0 0
    %1947 = vmatprep.subr.bf16.mxu0 0
    %1948 = vmatpush1.bf16.msra.mxu0 0
    %1949 = vmatprep.subr.bf16.mxu0 0
    %1950 = vmatpush1.bf16.msra.mxu0 0
    %1951 = vmatprep.subr.bf16.mxu0 0
    %1952 = vmatpush1.bf16.msra.mxu0 0
    %1953 = vmatprep.subr.bf16.mxu0 0
    %1954 = vmatpush1.bf16.msra.mxu0 0
    %1955 = vmatprep.subr.bf16.mxu0 0
    %1956 = vmatpush1.bf16.msra.mxu0 0
    %1957 = vmatprep.subr.bf16.mxu0 0
    %1958 = vmatpush1.bf16.msra.mxu0 0
    %1959 = vmatprep.subr.bf16.mxu0 0
    %1960 = vmatpush1.bf16.msra.mxu0 0
    %1961 = vmatprep.mubr.bf16.mxu0 0
    %1962 = vmatmul.mubr.bf16.gmra.mrb[0].mxu0 %v1927
    %v1963 = vpop.f32.mrb[0].mxu0
    %v1964 = vadd.f32 0.0, %v1963
    %v1965 = vpop.f32.mrb[0].mxu0
    %v1966 = vpop.f32.mrb[0].mxu0
    %v1967 = vpop.f32.mrb[0].mxu0
    %1968 = vdwg.mxu0
    %v1969 = vadd.f32 %v1607, %v1964
    %v1970 = vadd.f32 %v1969, %v44
    %1971 = vst.msk [vmem:[#allocation2] sm:$0xff] %vm46, %v1970
    %v1972 = vmul.f32 %v1970, %v1970
    %v1973 = vsel %vm46, %v1972, 0.0
    %1974 = vadd.xlane.f32.xlu0 %v1973
    %v1975 = vpop.xlane.xlu0 %1974
    %v1976 = vmul.f32 %v1975, %v50
    %v1977 = vadd.f32 %v1976, 1e-06
    %v1978 = vrsqrt.pop %v1977
    %v1979 = vmul.f32 %v1970, %v1978
    %v1980 = vld [vmem:[%s3] sm:$0x1]
    %v1982 = vlaneseq
    %v1983 = vshrl.u32 %v1982, 7
    %v1984 = vsub.s32 0, %v1983
    %v1985 = vrot.slane %v1980, %v1984
    %v1987 = vmul.f32 %v1979, %v1985
    %1988 = vst.msk [vmem:[%s11] sm:$0xff] %vm46, %v1987
    // Predicated region
    $region46: #{_decoder_layer_jit.2} parent=1 // pred_check
      _
    $region47: #{_decoder_layer_jit.2} parent=1 // pred_check_branch
      %1990 = sbr.rel (0) target = $region49
    $region48: #{_decoder_layer_jit.2} parent=1 // pred_region
      _
    $region49: #{_decoder_layer_jit.2} parent=1 // pred_fallthru
      _
    // Predicated region
    $region50: #{_decoder_layer_jit.2} parent=1 // pred_check
      _
    $region51: #{_decoder_layer_jit.2} parent=1 // pred_check_branch
      %1992 = sbr.rel (0) target = $region53
    $region52: #{_decoder_layer_jit.2} parent=1 // pred_region
      %s1994 = ssub.s32 128, 128
      %1995 = vsyncadd [#allocation3], %s1994
      %s1997 = sshll.u32 [#allocation2], 4
      %s1998 = int_to_ptr.vmem [resolvable:$true] %s1997
      %2000 = dma.vmem_to_hbm [thread:$0]  %s1998, 128, %s12, [#allocation3]
    $region53: #{_decoder_layer_jit.2} parent=1 // pred_fallthru
      _
    // Predicated region
    $region54: #{_decoder_layer_jit.2} parent=1 // pred_check
      _
    $region55: #{_decoder_layer_jit.2} parent=1 // pred_check_branch
      %2002 = sbr.rel (0) target = $region57
    $region56: #{_decoder_layer_jit.2} parent=1 // pred_region
      _
    $region57: #{_decoder_layer_jit.2} parent=1 // pred_fallthru
      _
    // Predicated region
    $region58: #{_decoder_layer_jit.2} parent=1 // pred_check
      _
    $region59: #{_decoder_layer_jit.2} parent=1 // pred_check_branch
      %2004 = sbr.rel (0) target = $region61
    $region60: #{_decoder_layer_jit.2} parent=1 // pred_region
      %2005 = dma.done [#allocation3], 128
    $region61: #{_decoder_layer_jit.2} parent=1 // pred_fallthru
      _
    %2006 = vsyncpa [#allocation3], 1

</llo_original>
